<compile_context>
chip_gen: v5e
topology: v5e:2x2
jax: 0.10.0
libtpu: 0.0.40
codegen_flags: <defaults>
</compile_context>

<pallas_src>
import functools

import jax
import jax.numpy as jnp
import numpy as np
from jax.experimental import pallas as pl
from jax.experimental.pallas import tpu as pltpu


# (name, c_out, c_in, kernel_size, stride) — scaled-down SEANet encoder.
_LAYERS = (
    ("conv0", 8, 1, 7, 1),
    ("res1a", 4, 8, 3, 1),
    ("res1b", 8, 4, 1, 1),
    ("down1", 16, 8, 4, 2),
    ("res2a", 8, 16, 3, 1),
    ("res2b", 16, 8, 1, 1),
    ("down2", 32, 16, 8, 4),
    ("final", 16, 32, 3, 1),
)

_N_Q, _N_CODES, _LATENT = 4, 32, 16


def _elu(x):
    # ELU(alpha=1), applied ONCE per element (not per conv tap).
    return jnp.where(x > 0.0, x, jnp.exp(jnp.minimum(x, 0.0)) - 1.0)


def _causal_conv(h, w_ref, b_ref, c_out, c_in, k, stride):
    """Causal Conv1d on a [c_in, T] activation (time on lanes).

    Left zero-pad (k - stride), tap shift and stride are folded into per-tap
    0/1 selection matmuls; weight matmuls are bf16 on the MXU, f32 accumulate.
    """
    t_in = h.shape[1]
    pad = k - stride
    t_out = t_in if stride == 1 else t_in // stride

    base = None
    acc = None
    for j in range(k):
        off = j - pad  # tap j reads input position stride*t + off (zero if <0)
        if stride == 1 and off == 0:
            tap = h                                           # exact, no matmul
        else:
            if base is None:
                rows = jax.lax.broadcasted_iota(jnp.int32, (t_in, t_out), 0)
                cols = jax.lax.broadcasted_iota(jnp.int32, (t_in, t_out), 1)
                base = rows - stride * cols
            sel = (base == off).astype(jnp.float32)           # [t_in, t_out]
            tap = jnp.dot(h, sel, preferred_element_type=jnp.float32)

        wj = w_ref[j]                                         # [c_out, c_in] bf16
        if c_in == 1:
            contrib = wj.astype(jnp.float32) * tap            # [c_out,1]*[1,t]
        else:
            contrib = jnp.dot(wj, tap.astype(jnp.bfloat16),
                              preferred_element_type=jnp.float32)
        acc = contrib if acc is None else acc + contrib

    return acc + b_ref[...]                                   # bias [c_out, 1]


def _encodec_rvq_kernel(*refs, cfgs, n_q):
    n_layers = len(cfgs)
    x_ref = refs[0]
    wrefs = refs[1:1 + 2 * n_layers]
    cb_ref = refs[1 + 2 * n_layers]      # [n_q, K, D]
    cbt_ref = refs[2 + 2 * n_layers]     # [n_q, D, K] (pre-transposed)
    codes_ref = refs[3 + 2 * n_layers]   # [1, n_q, Tf] int32
    scales_ref = refs[4 + 2 * n_layers]  # [1, n_q, Tf] int32

    def conv(idx, hin):
        c_out, c_in, k, s = cfgs[idx]
        return _causal_conv(hin, wrefs[2 * idx], wrefs[2 * idx + 1],
                            c_out, c_in, k, s)

    # ---- SEANet-style causal encoder, fully VMEM-resident ----
    h = x_ref[0]                       # [1, T]  mono channel, time on lanes
    h = conv(0, h)                     # conv0
    r = conv(1, _elu(h))               # residual block 1
    r = conv(2, _elu(r))
    h = h + r
    h = conv(3, _elu(h))               # downsample x2
    r = conv(4, _elu(h))               # residual block 2
    r = conv(5, _elu(r))
    h = h + r
    h = conv(6, _elu(h))               # downsample x4
    # TODO(synk): SEANet 2-layer LSTM before the final conv is omitted
    # (sequential recurrence; not the Pallas hot path of this synthetic model).
    emb = conv(7, _elu(h))             # final projection -> [D, Tf]

    # ---- residual vector quantizer: time on lanes, argmin over codebooks ----
    d, t_f = emb.shape
    n_codes = cb_ref.shape[1]
    iota_i = jax.lax.broadcasted_iota(jnp.int32, (n_codes, t_f), 0)
    iota_f = iota_i.astype(jnp.float32)

    residual = emb
    rows = []
    for q in range(n_q):
        cb = cb_ref[q]                                            # [K, D]
        cbt = cbt_ref[q]                                          # [D, K]
        c2 = jnp.sum(cb * cb, axis=1, keepdims=True)              # [K, 1]
        cross = jnp.dot(cb, residual,
                        preferred_element_type=jnp.float32)       # [K, Tf]
        dist = c2 - 2.0 * cross          # ||r||^2 dropped: argmin-invariant
        dmin = jnp.min(dist, axis=0, keepdims=True)               # [1, Tf]
        idx_f = jnp.min(jnp.where(dist <= dmin, iota_f, float(n_codes)),
                        axis=0, keepdims=True)                    # first argmin
        rows.append(idx_f)
        onehot = (iota_f == idx_f).astype(jnp.float32)            # [K, Tf]
        quant = jnp.dot(cbt, onehot,
                        preferred_element_type=jnp.float32)       # [D, Tf]
        residual = residual - quant

    codes = jnp.concatenate(rows, axis=0).astype(jnp.int32)       # [n_q, Tf]
    codes_ref[...] = codes[None]
    scales_ref[...] = jnp.ones((1, n_q, t_f), jnp.int32)          # ones_like(codes)


# ----------------------------------------------------------------------------
# Parameters (scaled-down random-init stand-in for encodec_model_24khz)
# ----------------------------------------------------------------------------
def make_params(key):
    def conv_p(k, c_out, c_in, ksz):
        kw, kb = jax.random.split(k)
        w = jax.random.normal(kw, (c_out, c_in, ksz), jnp.float32) / np.sqrt(c_in * ksz)
        b = 0.01 * jax.random.normal(kb, (c_out,), jnp.float32)
        return w, b

    keys = jax.random.split(key, len(_LAYERS) + 1)
    p = {}
    for kk, (name, c_out, c_in, ksz, _s) in zip(keys[:-1], _LAYERS):
        p[name] = conv_p(kk, c_out, c_in, ksz)
    p["codebooks"] = jax.random.normal(keys[-1], (_N_Q, _N_CODES, _LATENT), jnp.float32)
    return p


# ----------------------------------------------------------------------------
# Wrapper: one fused pallas_call over grid=(batch,)
# ----------------------------------------------------------------------------
def encodec_encode(params, x):
    B, c0, T = x.shape
    assert c0 == 1 and T % 8 == 0, "mono audio, T divisible by total stride (8)"
    cfgs = tuple((c_out, c_in, k, s) for (_n, c_out, c_in, k, s) in _LAYERS)

    inputs = [x]
    in_specs = [pl.BlockSpec((1, 1, T), lambda b: (b, 0, 0))]
    t_f = T
    for (name, c_out, c_in, k, s) in _LAYERS:
        w, bvec = params[name]
        # [C_out, C_in, K] -> [K, C_out, C_in]; bf16 for the MXU (f32 accumulate).
        w3 = jnp.transpose(w, (2, 0, 1)).astype(jnp.bfloat16)
        b2 = bvec.reshape(c_out, 1).astype(jnp.float32)
        inputs += [w3, b2]
        in_specs += [
            pl.BlockSpec((k, c_out, c_in), lambda b: (0, 0, 0)),
            pl.BlockSpec((c_out, 1), lambda b: (0, 0)),
        ]
        if s != 1:
            t_f = t_f // s

    cb = params["codebooks"]
    n_q, n_codes, d = cb.shape
    cbt = jnp.transpose(cb, (0, 2, 1))          # [n_q, D, K] for the quant matmul
    inputs += [cb, cbt]
    in_specs += [
        pl.BlockSpec((n_q, n_codes, d), lambda b: (0, 0, 0)),
        pl.BlockSpec((n_q, d, n_codes), lambda b: (0, 0, 0)),
    ]

    out_shape = (
        jax.ShapeDtypeStruct((B, n_q, t_f), jnp.int32),   # codes
        jax.ShapeDtypeStruct((B, n_q, t_f), jnp.int32),   # scales = ones_like(codes)
    )
    out_specs = (
        pl.BlockSpec((1, n_q, t_f), lambda b: (b, 0, 0)),
        pl.BlockSpec((1, n_q, t_f), lambda b: (b, 0, 0)),
    )

    codes, scales = pl.pallas_call(
        functools.partial(_encodec_rvq_kernel, cfgs=cfgs, n_q=n_q),
        grid=(B,),
        in_specs=in_specs,
        out_specs=out_specs,
        out_shape=out_shape,
        compiler_params=pltpu.CompilerParams(
            dimension_semantics=("parallel",),   # batch split across v7x's 2 TCs
        ),
    )(*inputs)
    return codes, scales


@jax.jit
def encodec_wrapper_forward(params, x):
    codes, scales = encodec_encode(params, x)
    # 24kHz EnCodec has normalize=False -> per-frame scale is None
    encoded = (codes, None)
    return encoded, scales


if __name__ == "__main__":
    key = jax.random.PRNGKey(0)
    k_x, k_p = jax.random.split(key)
    B, C, T = 2, 1, 160                                    # mono audio, small length
    x = jax.random.normal(k_x, (B, C, T), jnp.float32)
    params = make_params(k_p)

    (codes, scale), scales = encodec_wrapper_forward(params, x)
    jax.block_until_ready(codes)
    jax.block_until_ready(scales)

    assert codes.shape == (2, 4, 20) and codes.dtype == jnp.int32
    assert scale is None
    assert scales.shape == codes.shape and bool(jnp.all(scales == 1))
    assert bool(jnp.all(codes >= 0)) and bool(jnp.all(codes < _N_CODES))
    print("KERNEL_OK")
</pallas_src>

<mosaic_0001>
module attributes {stable_mosaic.version = 11 : i64} {
  func.func @_encodec_rvq_kernel(%arg0: i32, %arg1: memref<1x1x160xf32, #tpu.memory_space<vmem>>, %arg2: memref<7x8x1xbf16, #tpu.memory_space<vmem>>, %arg3: memref<8x1xf32, #tpu.memory_space<vmem>>, %arg4: memref<3x4x8xbf16, #tpu.memory_space<vmem>>, %arg5: memref<4x1xf32, #tpu.memory_space<vmem>>, %arg6: memref<1x8x4xbf16, #tpu.memory_space<vmem>>, %arg7: memref<8x1xf32, #tpu.memory_space<vmem>>, %arg8: memref<4x16x8xbf16, #tpu.memory_space<vmem>>, %arg9: memref<16x1xf32, #tpu.memory_space<vmem>>, %arg10: memref<3x8x16xbf16, #tpu.memory_space<vmem>>, %arg11: memref<8x1xf32, #tpu.memory_space<vmem>>, %arg12: memref<1x16x8xbf16, #tpu.memory_space<vmem>>, %arg13: memref<16x1xf32, #tpu.memory_space<vmem>>, %arg14: memref<8x32x16xbf16, #tpu.memory_space<vmem>>, %arg15: memref<32x1xf32, #tpu.memory_space<vmem>>, %arg16: memref<3x16x32xbf16, #tpu.memory_space<vmem>>, %arg17: memref<16x1xf32, #tpu.memory_space<vmem>>, %arg18: memref<4x32x16xf32, #tpu.memory_space<vmem>>, %arg19: memref<4x16x32xf32, #tpu.memory_space<vmem>>, %arg20: memref<1x4x20xi32, #tpu.memory_space<vmem>>, %arg21: memref<1x4x20xi32, #tpu.memory_space<vmem>>) attributes {dimension_semantics = [#tpu.dimension_semantics<parallel>], iteration_bounds = array<i64: 2>, scalar_prefetch = 0 : i64, scratch_operands = 0 : i64, tpu.core_type = #tpu.core_type<tc>, window_params = [{transform_indices = @transform_0, window_bounds = array<i64: 1, 1, 160>}, {pipeline_mode = #tpu.pipeline_mode<synchronous>, transform_indices = @transform_1, window_bounds = array<i64: 7, 8, 1>}, {pipeline_mode = #tpu.pipeline_mode<synchronous>, transform_indices = @transform_2, window_bounds = array<i64: 8, 1>}, {pipeline_mode = #tpu.pipeline_mode<synchronous>, transform_indices = @transform_3, window_bounds = array<i64: 3, 4, 8>}, {pipeline_mode = #tpu.pipeline_mode<synchronous>, transform_indices = @transform_4, window_bounds = array<i64: 4, 1>}, {pipeline_mode = #tpu.pipeline_mode<synchronous>, transform_indices = @transform_5, window_bounds = array<i64: 1, 8, 4>}, {pipeline_mode = #tpu.pipeline_mode<synchronous>, transform_indices = @transform_6, window_bounds = array<i64: 8, 1>}, {pipeline_mode = #tpu.pipeline_mode<synchronous>, transform_indices = @transform_7, window_bounds = array<i64: 4, 16, 8>}, {pipeline_mode = #tpu.pipeline_mode<synchronous>, transform_indices = @transform_8, window_bounds = array<i64: 16, 1>}, {pipeline_mode = #tpu.pipeline_mode<synchronous>, transform_indices = @transform_9, window_bounds = array<i64: 3, 8, 16>}, {pipeline_mode = #tpu.pipeline_mode<synchronous>, transform_indices = @transform_10, window_bounds = array<i64: 8, 1>}, {pipeline_mode = #tpu.pipeline_mode<synchronous>, transform_indices = @transform_11, window_bounds = array<i64: 1, 16, 8>}, {pipeline_mode = #tpu.pipeline_mode<synchronous>, transform_indices = @transform_12, window_bounds = array<i64: 16, 1>}, {pipeline_mode = #tpu.pipeline_mode<synchronous>, transform_indices = @transform_13, window_bounds = array<i64: 8, 32, 16>}, {pipeline_mode = #tpu.pipeline_mode<synchronous>, transform_indices = @transform_14, window_bounds = array<i64: 32, 1>}, {pipeline_mode = #tpu.pipeline_mode<synchronous>, transform_indices = @transform_15, window_bounds = array<i64: 3, 16, 32>}, {pipeline_mode = #tpu.pipeline_mode<synchronous>, transform_indices = @transform_16, window_bounds = array<i64: 16, 1>}, {pipeline_mode = #tpu.pipeline_mode<synchronous>, transform_indices = @transform_17, window_bounds = array<i64: 4, 32, 16>}, {pipeline_mode = #tpu.pipeline_mode<synchronous>, transform_indices = @transform_18, window_bounds = array<i64: 4, 16, 32>}, {transform_indices = @transform_19, window_bounds = array<i64: 1, 4, 20>}, {transform_indices = @transform_20, window_bounds = array<i64: 1, 4, 20>}]} {
    %c0 = arith.constant 0 : index
    %c0_0 = arith.constant 0 : index
    %c0_1 = arith.constant 0 : index
    %0 = vector.load %arg1[%c0, %c0_0, %c0_1] : memref<1x1x160xf32, #tpu.memory_space<vmem>>, vector<1x1x160xf32>
    %1 = vector.shape_cast %0 : vector<1x1x160xf32> to vector<1x160xf32>
    %2 = tpu.iota {dimensions = array<i32: 0>} : vector<160x160xi32>
    %3 = tpu.iota {dimensions = array<i32: 1>} : vector<160x160xi32>
    %c1_i32 = arith.constant 1 : i32
    %4 = vector.broadcast %c1_i32 : i32 to vector<160x160xi32>
    %5 = arith.muli %4, %3 : vector<160x160xi32>
    %6 = arith.subi %2, %5 : vector<160x160xi32>
    %c-6_i32 = arith.constant -6 : i32
    %7 = vector.broadcast %c-6_i32 : i32 to vector<160x160xi32>
    %8 = arith.cmpi eq, %6, %7 : vector<160x160xi32>
    %9 = arith.extui %8 : vector<160x160xi1> to vector<160x160xi32>
    %10 = arith.sitofp %9 : vector<160x160xi32> to vector<160x160xf32>
    %cst = arith.constant dense<0.000000e+00> : vector<1x160xf32>
    %11 = tpu.matmul %1, %10, %cst {dimension_numbers = #tpu.dot_dimension_numbers<[1], [0], [0], [1], [0, 0, 1, 1], [], []>} : vector<1x160xf32>, vector<160x160xf32>, vector<1x160xf32> -> vector<1x160xf32>
    %c0_2 = arith.constant 0 : index
    %c0_3 = arith.constant 0 : index
    %c0_4 = arith.constant 0 : index
    %12 = vector.load %arg2[%c0_2, %c0_3, %c0_4] : memref<7x8x1xbf16, #tpu.memory_space<vmem>>, vector<1x8x1xbf16>
    %13 = vector.shape_cast %12 : vector<1x8x1xbf16> to vector<8x1xbf16>
    %14 = arith.extf %13 : vector<8x1xbf16> to vector<8x1xf32>
    %15 = vector.broadcast %14 : vector<8x1xf32> to vector<8x160xf32>
    %16 = vector.broadcast %11 : vector<1x160xf32> to vector<8x160xf32>
    %17 = arith.mulf %15, %16 : vector<8x160xf32>
    %c-5_i32 = arith.constant -5 : i32
    %18 = vector.broadcast %c-5_i32 : i32 to vector<160x160xi32>
    %19 = arith.cmpi eq, %6, %18 : vector<160x160xi32>
    %20 = arith.extui %19 : vector<160x160xi1> to vector<160x160xi32>
    %21 = arith.sitofp %20 : vector<160x160xi32> to vector<160x160xf32>
    %cst_5 = arith.constant dense<0.000000e+00> : vector<1x160xf32>
    %22 = tpu.matmul %1, %21, %cst_5 {dimension_numbers = #tpu.dot_dimension_numbers<[1], [0], [0], [1], [0, 0, 1, 1], [], []>} : vector<1x160xf32>, vector<160x160xf32>, vector<1x160xf32> -> vector<1x160xf32>
    %c1 = arith.constant 1 : index
    %c0_6 = arith.constant 0 : index
    %c0_7 = arith.constant 0 : index
    %23 = vector.load %arg2[%c1, %c0_6, %c0_7] : memref<7x8x1xbf16, #tpu.memory_space<vmem>>, vector<1x8x1xbf16>
    %24 = vector.shape_cast %23 : vector<1x8x1xbf16> to vector<8x1xbf16>
    %25 = arith.extf %24 : vector<8x1xbf16> to vector<8x1xf32>
    %26 = vector.broadcast %25 : vector<8x1xf32> to vector<8x160xf32>
    %27 = vector.broadcast %22 : vector<1x160xf32> to vector<8x160xf32>
    %28 = arith.mulf %26, %27 : vector<8x160xf32>
    %29 = arith.addf %17, %28 : vector<8x160xf32>
    %c-4_i32 = arith.constant -4 : i32
    %30 = vector.broadcast %c-4_i32 : i32 to vector<160x160xi32>
    %31 = arith.cmpi eq, %6, %30 : vector<160x160xi32>
    %32 = arith.extui %31 : vector<160x160xi1> to vector<160x160xi32>
    %33 = arith.sitofp %32 : vector<160x160xi32> to vector<160x160xf32>
    %cst_8 = arith.constant dense<0.000000e+00> : vector<1x160xf32>
    %34 = tpu.matmul %1, %33, %cst_8 {dimension_numbers = #tpu.dot_dimension_numbers<[1], [0], [0], [1], [0, 0, 1, 1], [], []>} : vector<1x160xf32>, vector<160x160xf32>, vector<1x160xf32> -> vector<1x160xf32>
    %c2 = arith.constant 2 : index
    %c0_9 = arith.constant 0 : index
    %c0_10 = arith.constant 0 : index
    %35 = vector.load %arg2[%c2, %c0_9, %c0_10] : memref<7x8x1xbf16, #tpu.memory_space<vmem>>, vector<1x8x1xbf16>
    %36 = vector.shape_cast %35 : vector<1x8x1xbf16> to vector<8x1xbf16>
    %37 = arith.extf %36 : vector<8x1xbf16> to vector<8x1xf32>
    %38 = vector.broadcast %37 : vector<8x1xf32> to vector<8x160xf32>
    %39 = vector.broadcast %34 : vector<1x160xf32> to vector<8x160xf32>
    %40 = arith.mulf %38, %39 : vector<8x160xf32>
    %41 = arith.addf %29, %40 : vector<8x160xf32>
    %c-3_i32 = arith.constant -3 : i32
    %42 = vector.broadcast %c-3_i32 : i32 to vector<160x160xi32>
    %43 = arith.cmpi eq, %6, %42 : vector<160x160xi32>
    %44 = arith.extui %43 : vector<160x160xi1> to vector<160x160xi32>
    %45 = arith.sitofp %44 : vector<160x160xi32> to vector<160x160xf32>
    %cst_11 = arith.constant dense<0.000000e+00> : vector<1x160xf32>
    %46 = tpu.matmul %1, %45, %cst_11 {dimension_numbers = #tpu.dot_dimension_numbers<[1], [0], [0], [1], [0, 0, 1, 1], [], []>} : vector<1x160xf32>, vector<160x160xf32>, vector<1x160xf32> -> vector<1x160xf32>
    %c3 = arith.constant 3 : index
    %c0_12 = arith.constant 0 : index
    %c0_13 = arith.constant 0 : index
    %47 = vector.load %arg2[%c3, %c0_12, %c0_13] : memref<7x8x1xbf16, #tpu.memory_space<vmem>>, vector<1x8x1xbf16>
    %48 = vector.shape_cast %47 : vector<1x8x1xbf16> to vector<8x1xbf16>
    %49 = arith.extf %48 : vector<8x1xbf16> to vector<8x1xf32>
    %50 = vector.broadcast %49 : vector<8x1xf32> to vector<8x160xf32>
    %51 = vector.broadcast %46 : vector<1x160xf32> to vector<8x160xf32>
    %52 = arith.mulf %50, %51 : vector<8x160xf32>
    %53 = arith.addf %41, %52 : vector<8x160xf32>
    %c-2_i32 = arith.constant -2 : i32
    %54 = vector.broadcast %c-2_i32 : i32 to vector<160x160xi32>
    %55 = arith.cmpi eq, %6, %54 : vector<160x160xi32>
    %56 = arith.extui %55 : vector<160x160xi1> to vector<160x160xi32>
    %57 = arith.sitofp %56 : vector<160x160xi32> to vector<160x160xf32>
    %cst_14 = arith.constant dense<0.000000e+00> : vector<1x160xf32>
    %58 = tpu.matmul %1, %57, %cst_14 {dimension_numbers = #tpu.dot_dimension_numbers<[1], [0], [0], [1], [0, 0, 1, 1], [], []>} : vector<1x160xf32>, vector<160x160xf32>, vector<1x160xf32> -> vector<1x160xf32>
    %c4 = arith.constant 4 : index
    %c0_15 = arith.constant 0 : index
    %c0_16 = arith.constant 0 : index
    %59 = vector.load %arg2[%c4, %c0_15, %c0_16] : memref<7x8x1xbf16, #tpu.memory_space<vmem>>, vector<1x8x1xbf16>
    %60 = vector.shape_cast %59 : vector<1x8x1xbf16> to vector<8x1xbf16>
    %61 = arith.extf %60 : vector<8x1xbf16> to vector<8x1xf32>
    %62 = vector.broadcast %61 : vector<8x1xf32> to vector<8x160xf32>
    %63 = vector.broadcast %58 : vector<1x160xf32> to vector<8x160xf32>
    %64 = arith.mulf %62, %63 : vector<8x160xf32>
    %65 = arith.addf %53, %64 : vector<8x160xf32>
    %c-1_i32 = arith.constant -1 : i32
    %66 = vector.broadcast %c-1_i32 : i32 to vector<160x160xi32>
    %67 = arith.cmpi eq, %6, %66 : vector<160x160xi32>
    %68 = arith.extui %67 : vector<160x160xi1> to vector<160x160xi32>
    %69 = arith.sitofp %68 : vector<160x160xi32> to vector<160x160xf32>
    %cst_17 = arith.constant dense<0.000000e+00> : vector<1x160xf32>
    %70 = tpu.matmul %1, %69, %cst_17 {dimension_numbers = #tpu.dot_dimension_numbers<[1], [0], [0], [1], [0, 0, 1, 1], [], []>} : vector<1x160xf32>, vector<160x160xf32>, vector<1x160xf32> -> vector<1x160xf32>
    %c5 = arith.constant 5 : index
    %c0_18 = arith.constant 0 : index
    %c0_19 = arith.constant 0 : index
    %71 = vector.load %arg2[%c5, %c0_18, %c0_19] : memref<7x8x1xbf16, #tpu.memory_space<vmem>>, vector<1x8x1xbf16>
    %72 = vector.shape_cast %71 : vector<1x8x1xbf16> to vector<8x1xbf16>
    %73 = arith.extf %72 : vector<8x1xbf16> to vector<8x1xf32>
    %74 = vector.broadcast %73 : vector<8x1xf32> to vector<8x160xf32>
    %75 = vector.broadcast %70 : vector<1x160xf32> to vector<8x160xf32>
    %76 = arith.mulf %74, %75 : vector<8x160xf32>
    %77 = arith.addf %65, %76 : vector<8x160xf32>
    %c6 = arith.constant 6 : index
    %c0_20 = arith.constant 0 : index
    %c0_21 = arith.constant 0 : index
    %78 = vector.load %arg2[%c6, %c0_20, %c0_21] : memref<7x8x1xbf16, #tpu.memory_space<vmem>>, vector<1x8x1xbf16>
    %79 = vector.shape_cast %78 : vector<1x8x1xbf16> to vector<8x1xbf16>
    %80 = arith.extf %79 : vector<8x1xbf16> to vector<8x1xf32>
    %81 = vector.broadcast %80 : vector<8x1xf32> to vector<8x160xf32>
    %82 = vector.broadcast %1 : vector<1x160xf32> to vector<8x160xf32>
    %83 = arith.mulf %81, %82 : vector<8x160xf32>
    %84 = arith.addf %77, %83 : vector<8x160xf32>
    %c0_22 = arith.constant 0 : index
    %c0_23 = arith.constant 0 : index
    %85 = vector.load %arg3[%c0_22, %c0_23] : memref<8x1xf32, #tpu.memory_space<vmem>>, vector<8x1xf32>
    %86 = vector.broadcast %85 : vector<8x1xf32> to vector<8x160xf32>
    %87 = arith.addf %84, %86 : vector<8x160xf32>
    %cst_24 = arith.constant 0.000000e+00 : f32
    %88 = vector.broadcast %cst_24 : f32 to vector<8x160xf32>
    %89 = arith.cmpf ogt, %87, %88 : vector<8x160xf32>
    %cst_25 = arith.constant 0.000000e+00 : f32
    %90 = vector.broadcast %cst_25 : f32 to vector<8x160xf32>
    %91 = arith.minimumf %87, %90 : vector<8x160xf32>
    %92 = math.exp %91 : vector<8x160xf32>
    %cst_26 = arith.constant 1.000000e+00 : f32
    %93 = vector.broadcast %cst_26 : f32 to vector<8x160xf32>
    %94 = arith.subf %92, %93 : vector<8x160xf32>
    %95 = arith.select %89, %87, %94 : vector<8x160xi1>, vector<8x160xf32>
    %96 = tpu.iota {dimensions = array<i32: 0>} : vector<160x160xi32>
    %97 = tpu.iota {dimensions = array<i32: 1>} : vector<160x160xi32>
    %c1_i32_27 = arith.constant 1 : i32
    %98 = vector.broadcast %c1_i32_27 : i32 to vector<160x160xi32>
    %99 = arith.muli %98, %97 : vector<160x160xi32>
    %100 = arith.subi %96, %99 : vector<160x160xi32>
    %c-2_i32_28 = arith.constant -2 : i32
    %101 = vector.broadcast %c-2_i32_28 : i32 to vector<160x160xi32>
    %102 = arith.cmpi eq, %100, %101 : vector<160x160xi32>
    %103 = arith.extui %102 : vector<160x160xi1> to vector<160x160xi32>
    %104 = arith.sitofp %103 : vector<160x160xi32> to vector<160x160xf32>
    %cst_29 = arith.constant dense<0.000000e+00> : vector<8x160xf32>
    %105 = tpu.matmul %95, %104, %cst_29 {dimension_numbers = #tpu.dot_dimension_numbers<[1], [0], [0], [1], [0, 0, 1, 1], [], []>} : vector<8x160xf32>, vector<160x160xf32>, vector<8x160xf32> -> vector<8x160xf32>
    %c0_30 = arith.constant 0 : index
    %c0_31 = arith.constant 0 : index
    %c0_32 = arith.constant 0 : index
    %106 = vector.load %arg4[%c0_30, %c0_31, %c0_32] : memref<3x4x8xbf16, #tpu.memory_space<vmem>>, vector<1x4x8xbf16>
    %107 = vector.shape_cast %106 : vector<1x4x8xbf16> to vector<4x8xbf16>
    %108 = arith.truncf %105 : vector<8x160xf32> to vector<8x160xbf16>
    %cst_33 = arith.constant dense<0.000000e+00> : vector<4x160xf32>
    %109 = tpu.matmul %107, %108, %cst_33 {dimension_numbers = #tpu.dot_dimension_numbers<[1], [0], [0], [1], [0, 0, 1, 1], [], []>} : vector<4x8xbf16>, vector<8x160xbf16>, vector<4x160xf32> -> vector<4x160xf32>
    %c-1_i32_34 = arith.constant -1 : i32
    %110 = vector.broadcast %c-1_i32_34 : i32 to vector<160x160xi32>
    %111 = arith.cmpi eq, %100, %110 : vector<160x160xi32>
    %112 = arith.extui %111 : vector<160x160xi1> to vector<160x160xi32>
    %113 = arith.sitofp %112 : vector<160x160xi32> to vector<160x160xf32>
    %cst_35 = arith.constant dense<0.000000e+00> : vector<8x160xf32>
    %114 = tpu.matmul %95, %113, %cst_35 {dimension_numbers = #tpu.dot_dimension_numbers<[1], [0], [0], [1], [0, 0, 1, 1], [], []>} : vector<8x160xf32>, vector<160x160xf32>, vector<8x160xf32> -> vector<8x160xf32>
    %c1_36 = arith.constant 1 : index
    %c0_37 = arith.constant 0 : index
    %c0_38 = arith.constant 0 : index
    %115 = vector.load %arg4[%c1_36, %c0_37, %c0_38] : memref<3x4x8xbf16, #tpu.memory_space<vmem>>, vector<1x4x8xbf16>
    %116 = vector.shape_cast %115 : vector<1x4x8xbf16> to vector<4x8xbf16>
    %117 = arith.truncf %114 : vector<8x160xf32> to vector<8x160xbf16>
    %cst_39 = arith.constant dense<0.000000e+00> : vector<4x160xf32>
    %118 = tpu.matmul %116, %117, %cst_39 {dimension_numbers = #tpu.dot_dimension_numbers<[1], [0], [0], [1], [0, 0, 1, 1], [], []>} : vector<4x8xbf16>, vector<8x160xbf16>, vector<4x160xf32> -> vector<4x160xf32>
    %119 = arith.addf %109, %118 : vector<4x160xf32>
    %c2_40 = arith.constant 2 : index
    %c0_41 = arith.constant 0 : index
    %c0_42 = arith.constant 0 : index
    %120 = vector.load %arg4[%c2_40, %c0_41, %c0_42] : memref<3x4x8xbf16, #tpu.memory_space<vmem>>, vector<1x4x8xbf16>
    %121 = vector.shape_cast %120 : vector<1x4x8xbf16> to vector<4x8xbf16>
    %122 = arith.truncf %95 : vector<8x160xf32> to vector<8x160xbf16>
    %cst_43 = arith.constant dense<0.000000e+00> : vector<4x160xf32>
    %123 = tpu.matmul %121, %122, %cst_43 {dimension_numbers = #tpu.dot_dimension_numbers<[1], [0], [0], [1], [0, 0, 1, 1], [], []>} : vector<4x8xbf16>, vector<8x160xbf16>, vector<4x160xf32> -> vector<4x160xf32>
    %124 = arith.addf %119, %123 : vector<4x160xf32>
    %c0_44 = arith.constant 0 : index
    %c0_45 = arith.constant 0 : index
    %125 = vector.load %arg5[%c0_44, %c0_45] : memref<4x1xf32, #tpu.memory_space<vmem>>, vector<4x1xf32>
    %126 = vector.broadcast %125 : vector<4x1xf32> to vector<4x160xf32>
    %127 = arith.addf %124, %126 : vector<4x160xf32>
    %cst_46 = arith.constant 0.000000e+00 : f32
    %128 = vector.broadcast %cst_46 : f32 to vector<4x160xf32>
    %129 = arith.cmpf ogt, %127, %128 : vector<4x160xf32>
    %cst_47 = arith.constant 0.000000e+00 : f32
    %130 = vector.broadcast %cst_47 : f32 to vector<4x160xf32>
    %131 = arith.minimumf %127, %130 : vector<4x160xf32>
    %132 = math.exp %131 : vector<4x160xf32>
    %cst_48 = arith.constant 1.000000e+00 : f32
    %133 = vector.broadcast %cst_48 : f32 to vector<4x160xf32>
    %134 = arith.subf %132, %133 : vector<4x160xf32>
    %135 = arith.select %129, %127, %134 : vector<4x160xi1>, vector<4x160xf32>
    %c0_49 = arith.constant 0 : index
    %c0_50 = arith.constant 0 : index
    %c0_51 = arith.constant 0 : index
    %136 = vector.load %arg6[%c0_49, %c0_50, %c0_51] : memref<1x8x4xbf16, #tpu.memory_space<vmem>>, vector<1x8x4xbf16>
    %137 = vector.shape_cast %136 : vector<1x8x4xbf16> to vector<8x4xbf16>
    %138 = arith.truncf %135 : vector<4x160xf32> to vector<4x160xbf16>
    %cst_52 = arith.constant dense<0.000000e+00> : vector<8x160xf32>
    %139 = tpu.matmul %137, %138, %cst_52 {dimension_numbers = #tpu.dot_dimension_numbers<[1], [0], [0], [1], [0, 0, 1, 1], [], []>} : vector<8x4xbf16>, vector<4x160xbf16>, vector<8x160xf32> -> vector<8x160xf32>
    %c0_53 = arith.constant 0 : index
    %c0_54 = arith.constant 0 : index
    %140 = vector.load %arg7[%c0_53, %c0_54] : memref<8x1xf32, #tpu.memory_space<vmem>>, vector<8x1xf32>
    %141 = vector.broadcast %140 : vector<8x1xf32> to vector<8x160xf32>
    %142 = arith.addf %139, %141 : vector<8x160xf32>
    %143 = arith.addf %87, %142 : vector<8x160xf32>
    %cst_55 = arith.constant 0.000000e+00 : f32
    %144 = vector.broadcast %cst_55 : f32 to vector<8x160xf32>
    %145 = arith.cmpf ogt, %143, %144 : vector<8x160xf32>
    %cst_56 = arith.constant 0.000000e+00 : f32
    %146 = vector.broadcast %cst_56 : f32 to vector<8x160xf32>
    %147 = arith.minimumf %143, %146 : vector<8x160xf32>
    %148 = math.exp %147 : vector<8x160xf32>
    %cst_57 = arith.constant 1.000000e+00 : f32
    %149 = vector.broadcast %cst_57 : f32 to vector<8x160xf32>
    %150 = arith.subf %148, %149 : vector<8x160xf32>
    %151 = arith.select %145, %143, %150 : vector<8x160xi1>, vector<8x160xf32>
    %152 = tpu.iota {dimensions = array<i32: 0>} : vector<160x80xi32>
    %153 = tpu.iota {dimensions = array<i32: 1>} : vector<160x80xi32>
    %c2_i32 = arith.constant 2 : i32
    %154 = vector.broadcast %c2_i32 : i32 to vector<160x80xi32>
    %155 = arith.muli %154, %153 : vector<160x80xi32>
    %156 = arith.subi %152, %155 : vector<160x80xi32>
    %c-2_i32_58 = arith.constant -2 : i32
    %157 = vector.broadcast %c-2_i32_58 : i32 to vector<160x80xi32>
    %158 = arith.cmpi eq, %156, %157 : vector<160x80xi32>
    %159 = arith.extui %158 : vector<160x80xi1> to vector<160x80xi32>
    %160 = arith.sitofp %159 : vector<160x80xi32> to vector<160x80xf32>
    %cst_59 = arith.constant dense<0.000000e+00> : vector<8x80xf32>
    %161 = tpu.matmul %151, %160, %cst_59 {dimension_numbers = #tpu.dot_dimension_numbers<[1], [0], [0], [1], [0, 0, 1, 1], [], []>} : vector<8x160xf32>, vector<160x80xf32>, vector<8x80xf32> -> vector<8x80xf32>
    %c0_60 = arith.constant 0 : index
    %c0_61 = arith.constant 0 : index
    %c0_62 = arith.constant 0 : index
    %162 = vector.load %arg8[%c0_60, %c0_61, %c0_62] : memref<4x16x8xbf16, #tpu.memory_space<vmem>>, vector<1x16x8xbf16>
    %163 = vector.shape_cast %162 : vector<1x16x8xbf16> to vector<16x8xbf16>
    %164 = arith.truncf %161 : vector<8x80xf32> to vector<8x80xbf16>
    %cst_63 = arith.constant dense<0.000000e+00> : vector<16x80xf32>
    %165 = tpu.matmul %163, %164, %cst_63 {dimension_numbers = #tpu.dot_dimension_numbers<[1], [0], [0], [1], [0, 0, 1, 1], [], []>} : vector<16x8xbf16>, vector<8x80xbf16>, vector<16x80xf32> -> vector<16x80xf32>
    %c-1_i32_64 = arith.constant -1 : i32
    %166 = vector.broadcast %c-1_i32_64 : i32 to vector<160x80xi32>
    %167 = arith.cmpi eq, %156, %166 : vector<160x80xi32>
    %168 = arith.extui %167 : vector<160x80xi1> to vector<160x80xi32>
    %169 = arith.sitofp %168 : vector<160x80xi32> to vector<160x80xf32>
    %cst_65 = arith.constant dense<0.000000e+00> : vector<8x80xf32>
    %170 = tpu.matmul %151, %169, %cst_65 {dimension_numbers = #tpu.dot_dimension_numbers<[1], [0], [0], [1], [0, 0, 1, 1], [], []>} : vector<8x160xf32>, vector<160x80xf32>, vector<8x80xf32> -> vector<8x80xf32>
    %c1_66 = arith.constant 1 : index
    %c0_67 = arith.constant 0 : index
    %c0_68 = arith.constant 0 : index
    %171 = vector.load %arg8[%c1_66, %c0_67, %c0_68] : memref<4x16x8xbf16, #tpu.memory_space<vmem>>, vector<1x16x8xbf16>
    %172 = vector.shape_cast %171 : vector<1x16x8xbf16> to vector<16x8xbf16>
    %173 = arith.truncf %170 : vector<8x80xf32> to vector<8x80xbf16>
    %cst_69 = arith.constant dense<0.000000e+00> : vector<16x80xf32>
    %174 = tpu.matmul %172, %173, %cst_69 {dimension_numbers = #tpu.dot_dimension_numbers<[1], [0], [0], [1], [0, 0, 1, 1], [], []>} : vector<16x8xbf16>, vector<8x80xbf16>, vector<16x80xf32> -> vector<16x80xf32>
    %175 = arith.addf %165, %174 : vector<16x80xf32>
    %c0_i32 = arith.constant 0 : i32
    %176 = vector.broadcast %c0_i32 : i32 to vector<160x80xi32>
    %177 = arith.cmpi eq, %156, %176 : vector<160x80xi32>
    %178 = arith.extui %177 : vector<160x80xi1> to vector<160x80xi32>
    %179 = arith.sitofp %178 : vector<160x80xi32> to vector<160x80xf32>
    %cst_70 = arith.constant dense<0.000000e+00> : vector<8x80xf32>
    %180 = tpu.matmul %151, %179, %cst_70 {dimension_numbers = #tpu.dot_dimension_numbers<[1], [0], [0], [1], [0, 0, 1, 1], [], []>} : vector<8x160xf32>, vector<160x80xf32>, vector<8x80xf32> -> vector<8x80xf32>
    %c2_71 = arith.constant 2 : index
    %c0_72 = arith.constant 0 : index
    %c0_73 = arith.constant 0 : index
    %181 = vector.load %arg8[%c2_71, %c0_72, %c0_73] : memref<4x16x8xbf16, #tpu.memory_space<vmem>>, vector<1x16x8xbf16>
    %182 = vector.shape_cast %181 : vector<1x16x8xbf16> to vector<16x8xbf16>
    %183 = arith.truncf %180 : vector<8x80xf32> to vector<8x80xbf16>
    %cst_74 = arith.constant dense<0.000000e+00> : vector<16x80xf32>
    %184 = tpu.matmul %182, %183, %cst_74 {dimension_numbers = #tpu.dot_dimension_numbers<[1], [0], [0], [1], [0, 0, 1, 1], [], []>} : vector<16x8xbf16>, vector<8x80xbf16>, vector<16x80xf32> -> vector<16x80xf32>
    %185 = arith.addf %175, %184 : vector<16x80xf32>
    %c1_i32_75 = arith.constant 1 : i32
    %186 = vector.broadcast %c1_i32_75 : i32 to vector<160x80xi32>
    %187 = arith.cmpi eq, %156, %186 : vector<160x80xi32>
    %188 = arith.extui %187 : vector<160x80xi1> to vector<160x80xi32>
    %189 = arith.sitofp %188 : vector<160x80xi32> to vector<160x80xf32>
    %cst_76 = arith.constant dense<0.000000e+00> : vector<8x80xf32>
    %190 = tpu.matmul %151, %189, %cst_76 {dimension_numbers = #tpu.dot_dimension_numbers<[1], [0], [0], [1], [0, 0, 1, 1], [], []>} : vector<8x160xf32>, vector<160x80xf32>, vector<8x80xf32> -> vector<8x80xf32>
    %c3_77 = arith.constant 3 : index
    %c0_78 = arith.constant 0 : index
    %c0_79 = arith.constant 0 : index
    %191 = vector.load %arg8[%c3_77, %c0_78, %c0_79] : memref<4x16x8xbf16, #tpu.memory_space<vmem>>, vector<1x16x8xbf16>
    %192 = vector.shape_cast %191 : vector<1x16x8xbf16> to vector<16x8xbf16>
    %193 = arith.truncf %190 : vector<8x80xf32> to vector<8x80xbf16>
    %cst_80 = arith.constant dense<0.000000e+00> : vector<16x80xf32>
    %194 = tpu.matmul %192, %193, %cst_80 {dimension_numbers = #tpu.dot_dimension_numbers<[1], [0], [0], [1], [0, 0, 1, 1], [], []>} : vector<16x8xbf16>, vector<8x80xbf16>, vector<16x80xf32> -> vector<16x80xf32>
    %195 = arith.addf %185, %194 : vector<16x80xf32>
    %c0_81 = arith.constant 0 : index
    %c0_82 = arith.constant 0 : index
    %196 = vector.load %arg9[%c0_81, %c0_82] : memref<16x1xf32, #tpu.memory_space<vmem>>, vector<16x1xf32>
    %197 = vector.broadcast %196 : vector<16x1xf32> to vector<16x80xf32>
    %198 = arith.addf %195, %197 : vector<16x80xf32>
    %cst_83 = arith.constant 0.000000e+00 : f32
    %199 = vector.broadcast %cst_83 : f32 to vector<16x80xf32>
    %200 = arith.cmpf ogt, %198, %199 : vector<16x80xf32>
    %cst_84 = arith.constant 0.000000e+00 : f32
    %201 = vector.broadcast %cst_84 : f32 to vector<16x80xf32>
    %202 = arith.minimumf %198, %201 : vector<16x80xf32>
    %203 = math.exp %202 : vector<16x80xf32>
    %cst_85 = arith.constant 1.000000e+00 : f32
    %204 = vector.broadcast %cst_85 : f32 to vector<16x80xf32>
    %205 = arith.subf %203, %204 : vector<16x80xf32>
    %206 = arith.select %200, %198, %205 : vector<16x80xi1>, vector<16x80xf32>
    %207 = tpu.iota {dimensions = array<i32: 0>} : vector<80x80xi32>
    %208 = tpu.iota {dimensions = array<i32: 1>} : vector<80x80xi32>
    %c1_i32_86 = arith.constant 1 : i32
    %209 = vector.broadcast %c1_i32_86 : i32 to vector<80x80xi32>
    %210 = arith.muli %209, %208 : vector<80x80xi32>
    %211 = arith.subi %207, %210 : vector<80x80xi32>
    %c-2_i32_87 = arith.constant -2 : i32
    %212 = vector.broadcast %c-2_i32_87 : i32 to vector<80x80xi32>
    %213 = arith.cmpi eq, %211, %212 : vector<80x80xi32>
    %214 = arith.extui %213 : vector<80x80xi1> to vector<80x80xi32>
    %215 = arith.sitofp %214 : vector<80x80xi32> to vector<80x80xf32>
    %cst_88 = arith.constant dense<0.000000e+00> : vector<16x80xf32>
    %216 = tpu.matmul %206, %215, %cst_88 {dimension_numbers = #tpu.dot_dimension_numbers<[1], [0], [0], [1], [0, 0, 1, 1], [], []>} : vector<16x80xf32>, vector<80x80xf32>, vector<16x80xf32> -> vector<16x80xf32>
    %c0_89 = arith.constant 0 : index
    %c0_90 = arith.constant 0 : index
    %c0_91 = arith.constant 0 : index
    %217 = vector.load %arg10[%c0_89, %c0_90, %c0_91] : memref<3x8x16xbf16, #tpu.memory_space<vmem>>, vector<1x8x16xbf16>
    %218 = vector.shape_cast %217 : vector<1x8x16xbf16> to vector<8x16xbf16>
    %219 = arith.truncf %216 : vector<16x80xf32> to vector<16x80xbf16>
    %cst_92 = arith.constant dense<0.000000e+00> : vector<8x80xf32>
    %220 = tpu.matmul %218, %219, %cst_92 {dimension_numbers = #tpu.dot_dimension_numbers<[1], [0], [0], [1], [0, 0, 1, 1], [], []>} : vector<8x16xbf16>, vector<16x80xbf16>, vector<8x80xf32> -> vector<8x80xf32>
    %c-1_i32_93 = arith.constant -1 : i32
    %221 = vector.broadcast %c-1_i32_93 : i32 to vector<80x80xi32>
    %222 = arith.cmpi eq, %211, %221 : vector<80x80xi32>
    %223 = arith.extui %222 : vector<80x80xi1> to vector<80x80xi32>
    %224 = arith.sitofp %223 : vector<80x80xi32> to vector<80x80xf32>
    %cst_94 = arith.constant dense<0.000000e+00> : vector<16x80xf32>
    %225 = tpu.matmul %206, %224, %cst_94 {dimension_numbers = #tpu.dot_dimension_numbers<[1], [0], [0], [1], [0, 0, 1, 1], [], []>} : vector<16x80xf32>, vector<80x80xf32>, vector<16x80xf32> -> vector<16x80xf32>
    %c1_95 = arith.constant 1 : index
    %c0_96 = arith.constant 0 : index
    %c0_97 = arith.constant 0 : index
    %226 = vector.load %arg10[%c1_95, %c0_96, %c0_97] : memref<3x8x16xbf16, #tpu.memory_space<vmem>>, vector<1x8x16xbf16>
    %227 = vector.shape_cast %226 : vector<1x8x16xbf16> to vector<8x16xbf16>
    %228 = arith.truncf %225 : vector<16x80xf32> to vector<16x80xbf16>
    %cst_98 = arith.constant dense<0.000000e+00> : vector<8x80xf32>
    %229 = tpu.matmul %227, %228, %cst_98 {dimension_numbers = #tpu.dot_dimension_numbers<[1], [0], [0], [1], [0, 0, 1, 1], [], []>} : vector<8x16xbf16>, vector<16x80xbf16>, vector<8x80xf32> -> vector<8x80xf32>
    %230 = arith.addf %220, %229 : vector<8x80xf32>
    %c2_99 = arith.constant 2 : index
    %c0_100 = arith.constant 0 : index
    %c0_101 = arith.constant 0 : index
    %231 = vector.load %arg10[%c2_99, %c0_100, %c0_101] : memref<3x8x16xbf16, #tpu.memory_space<vmem>>, vector<1x8x16xbf16>
    %232 = vector.shape_cast %231 : vector<1x8x16xbf16> to vector<8x16xbf16>
    %233 = arith.truncf %206 : vector<16x80xf32> to vector<16x80xbf16>
    %cst_102 = arith.constant dense<0.000000e+00> : vector<8x80xf32>
    %234 = tpu.matmul %232, %233, %cst_102 {dimension_numbers = #tpu.dot_dimension_numbers<[1], [0], [0], [1], [0, 0, 1, 1], [], []>} : vector<8x16xbf16>, vector<16x80xbf16>, vector<8x80xf32> -> vector<8x80xf32>
    %235 = arith.addf %230, %234 : vector<8x80xf32>
    %c0_103 = arith.constant 0 : index
    %c0_104 = arith.constant 0 : index
    %236 = vector.load %arg11[%c0_103, %c0_104] : memref<8x1xf32, #tpu.memory_space<vmem>>, vector<8x1xf32>
    %237 = vector.broadcast %236 : vector<8x1xf32> to vector<8x80xf32>
    %238 = arith.addf %235, %237 : vector<8x80xf32>
    %cst_105 = arith.constant 0.000000e+00 : f32
    %239 = vector.broadcast %cst_105 : f32 to vector<8x80xf32>
    %240 = arith.cmpf ogt, %238, %239 : vector<8x80xf32>
    %cst_106 = arith.constant 0.000000e+00 : f32
    %241 = vector.broadcast %cst_106 : f32 to vector<8x80xf32>
    %242 = arith.minimumf %238, %241 : vector<8x80xf32>
    %243 = math.exp %242 : vector<8x80xf32>
    %cst_107 = arith.constant 1.000000e+00 : f32
    %244 = vector.broadcast %cst_107 : f32 to vector<8x80xf32>
    %245 = arith.subf %243, %244 : vector<8x80xf32>
    %246 = arith.select %240, %238, %245 : vector<8x80xi1>, vector<8x80xf32>
    %c0_108 = arith.constant 0 : index
    %c0_109 = arith.constant 0 : index
    %c0_110 = arith.constant 0 : index
    %247 = vector.load %arg12[%c0_108, %c0_109, %c0_110] : memref<1x16x8xbf16, #tpu.memory_space<vmem>>, vector<1x16x8xbf16>
    %248 = vector.shape_cast %247 : vector<1x16x8xbf16> to vector<16x8xbf16>
    %249 = arith.truncf %246 : vector<8x80xf32> to vector<8x80xbf16>
    %cst_111 = arith.constant dense<0.000000e+00> : vector<16x80xf32>
    %250 = tpu.matmul %248, %249, %cst_111 {dimension_numbers = #tpu.dot_dimension_numbers<[1], [0], [0], [1], [0, 0, 1, 1], [], []>} : vector<16x8xbf16>, vector<8x80xbf16>, vector<16x80xf32> -> vector<16x80xf32>
    %c0_112 = arith.constant 0 : index
    %c0_113 = arith.constant 0 : index
    %251 = vector.load %arg13[%c0_112, %c0_113] : memref<16x1xf32, #tpu.memory_space<vmem>>, vector<16x1xf32>
    %252 = vector.broadcast %251 : vector<16x1xf32> to vector<16x80xf32>
    %253 = arith.addf %250, %252 : vector<16x80xf32>
    %254 = arith.addf %198, %253 : vector<16x80xf32>
    %cst_114 = arith.constant 0.000000e+00 : f32
    %255 = vector.broadcast %cst_114 : f32 to vector<16x80xf32>
    %256 = arith.cmpf ogt, %254, %255 : vector<16x80xf32>
    %cst_115 = arith.constant 0.000000e+00 : f32
    %257 = vector.broadcast %cst_115 : f32 to vector<16x80xf32>
    %258 = arith.minimumf %254, %257 : vector<16x80xf32>
    %259 = math.exp %258 : vector<16x80xf32>
    %cst_116 = arith.constant 1.000000e+00 : f32
    %260 = vector.broadcast %cst_116 : f32 to vector<16x80xf32>
    %261 = arith.subf %259, %260 : vector<16x80xf32>
    %262 = arith.select %256, %254, %261 : vector<16x80xi1>, vector<16x80xf32>
    %263 = tpu.iota {dimensions = array<i32: 0>} : vector<80x20xi32>
    %264 = tpu.iota {dimensions = array<i32: 1>} : vector<80x20xi32>
    %c4_i32 = arith.constant 4 : i32
    %265 = vector.broadcast %c4_i32 : i32 to vector<80x20xi32>
    %266 = arith.muli %265, %264 : vector<80x20xi32>
    %267 = arith.subi %263, %266 : vector<80x20xi32>
    %c-4_i32_117 = arith.constant -4 : i32
    %268 = vector.broadcast %c-4_i32_117 : i32 to vector<80x20xi32>
    %269 = arith.cmpi eq, %267, %268 : vector<80x20xi32>
    %270 = arith.extui %269 : vector<80x20xi1> to vector<80x20xi32>
    %271 = arith.sitofp %270 : vector<80x20xi32> to vector<80x20xf32>
    %cst_118 = arith.constant dense<0.000000e+00> : vector<16x20xf32>
    %272 = tpu.matmul %262, %271, %cst_118 {dimension_numbers = #tpu.dot_dimension_numbers<[1], [0], [0], [1], [0, 0, 1, 1], [], []>} : vector<16x80xf32>, vector<80x20xf32>, vector<16x20xf32> -> vector<16x20xf32>
    %c0_119 = arith.constant 0 : index
    %c0_120 = arith.constant 0 : index
    %c0_121 = arith.constant 0 : index
    %273 = vector.load %arg14[%c0_119, %c0_120, %c0_121] : memref<8x32x16xbf16, #tpu.memory_space<vmem>>, vector<1x32x16xbf16>
    %274 = vector.shape_cast %273 : vector<1x32x16xbf16> to vector<32x16xbf16>
    %275 = arith.truncf %272 : vector<16x20xf32> to vector<16x20xbf16>
    %cst_122 = arith.constant dense<0.000000e+00> : vector<32x20xf32>
    %276 = tpu.matmul %274, %275, %cst_122 {dimension_numbers = #tpu.dot_dimension_numbers<[1], [0], [0], [1], [0, 0, 1, 1], [], []>} : vector<32x16xbf16>, vector<16x20xbf16>, vector<32x20xf32> -> vector<32x20xf32>
    %c-3_i32_123 = arith.constant -3 : i32
    %277 = vector.broadcast %c-3_i32_123 : i32 to vector<80x20xi32>
    %278 = arith.cmpi eq, %267, %277 : vector<80x20xi32>
    %279 = arith.extui %278 : vector<80x20xi1> to vector<80x20xi32>
    %280 = arith.sitofp %279 : vector<80x20xi32> to vector<80x20xf32>
    %cst_124 = arith.constant dense<0.000000e+00> : vector<16x20xf32>
    %281 = tpu.matmul %262, %280, %cst_124 {dimension_numbers = #tpu.dot_dimension_numbers<[1], [0], [0], [1], [0, 0, 1, 1], [], []>} : vector<16x80xf32>, vector<80x20xf32>, vector<16x20xf32> -> vector<16x20xf32>
    %c1_125 = arith.constant 1 : index
    %c0_126 = arith.constant 0 : index
    %c0_127 = arith.constant 0 : index
    %282 = vector.load %arg14[%c1_125, %c0_126, %c0_127] : memref<8x32x16xbf16, #tpu.memory_space<vmem>>, vector<1x32x16xbf16>
    %283 = vector.shape_cast %282 : vector<1x32x16xbf16> to vector<32x16xbf16>
    %284 = arith.truncf %281 : vector<16x20xf32> to vector<16x20xbf16>
    %cst_128 = arith.constant dense<0.000000e+00> : vector<32x20xf32>
    %285 = tpu.matmul %283, %284, %cst_128 {dimension_numbers = #tpu.dot_dimension_numbers<[1], [0], [0], [1], [0, 0, 1, 1], [], []>} : vector<32x16xbf16>, vector<16x20xbf16>, vector<32x20xf32> -> vector<32x20xf32>
    %286 = arith.addf %276, %285 : vector<32x20xf32>
    %c-2_i32_129 = arith.constant -2 : i32
    %287 = vector.broadcast %c-2_i32_129 : i32 to vector<80x20xi32>
    %288 = arith.cmpi eq, %267, %287 : vector<80x20xi32>
    %289 = arith.extui %288 : vector<80x20xi1> to vector<80x20xi32>
    %290 = arith.sitofp %289 : vector<80x20xi32> to vector<80x20xf32>
    %cst_130 = arith.constant dense<0.000000e+00> : vector<16x20xf32>
    %291 = tpu.matmul %262, %290, %cst_130 {dimension_numbers = #tpu.dot_dimension_numbers<[1], [0], [0], [1], [0, 0, 1, 1], [], []>} : vector<16x80xf32>, vector<80x20xf32>, vector<16x20xf32> -> vector<16x20xf32>
    %c2_131 = arith.constant 2 : index
    %c0_132 = arith.constant 0 : index
    %c0_133 = arith.constant 0 : index
    %292 = vector.load %arg14[%c2_131, %c0_132, %c0_133] : memref<8x32x16xbf16, #tpu.memory_space<vmem>>, vector<1x32x16xbf16>
    %293 = vector.shape_cast %292 : vector<1x32x16xbf16> to vector<32x16xbf16>
    %294 = arith.truncf %291 : vector<16x20xf32> to vector<16x20xbf16>
    %cst_134 = arith.constant dense<0.000000e+00> : vector<32x20xf32>
    %295 = tpu.matmul %293, %294, %cst_134 {dimension_numbers = #tpu.dot_dimension_numbers<[1], [0], [0], [1], [0, 0, 1, 1], [], []>} : vector<32x16xbf16>, vector<16x20xbf16>, vector<32x20xf32> -> vector<32x20xf32>
    %296 = arith.addf %286, %295 : vector<32x20xf32>
    %c-1_i32_135 = arith.constant -1 : i32
    %297 = vector.broadcast %c-1_i32_135 : i32 to vector<80x20xi32>
    %298 = arith.cmpi eq, %267, %297 : vector<80x20xi32>
    %299 = arith.extui %298 : vector<80x20xi1> to vector<80x20xi32>
    %300 = arith.sitofp %299 : vector<80x20xi32> to vector<80x20xf32>
    %cst_136 = arith.constant dense<0.000000e+00> : vector<16x20xf32>
    %301 = tpu.matmul %262, %300, %cst_136 {dimension_numbers = #tpu.dot_dimension_numbers<[1], [0], [0], [1], [0, 0, 1, 1], [], []>} : vector<16x80xf32>, vector<80x20xf32>, vector<16x20xf32> -> vector<16x20xf32>
    %c3_137 = arith.constant 3 : index
    %c0_138 = arith.constant 0 : index
    %c0_139 = arith.constant 0 : index
    %302 = vector.load %arg14[%c3_137, %c0_138, %c0_139] : memref<8x32x16xbf16, #tpu.memory_space<vmem>>, vector<1x32x16xbf16>
    %303 = vector.shape_cast %302 : vector<1x32x16xbf16> to vector<32x16xbf16>
    %304 = arith.truncf %301 : vector<16x20xf32> to vector<16x20xbf16>
    %cst_140 = arith.constant dense<0.000000e+00> : vector<32x20xf32>
    %305 = tpu.matmul %303, %304, %cst_140 {dimension_numbers = #tpu.dot_dimension_numbers<[1], [0], [0], [1], [0, 0, 1, 1], [], []>} : vector<32x16xbf16>, vector<16x20xbf16>, vector<32x20xf32> -> vector<32x20xf32>
    %306 = arith.addf %296, %305 : vector<32x20xf32>
    %c0_i32_141 = arith.constant 0 : i32
    %307 = vector.broadcast %c0_i32_141 : i32 to vector<80x20xi32>
    %308 = arith.cmpi eq, %267, %307 : vector<80x20xi32>
    %309 = arith.extui %308 : vector<80x20xi1> to vector<80x20xi32>
    %310 = arith.sitofp %309 : vector<80x20xi32> to vector<80x20xf32>
    %cst_142 = arith.constant dense<0.000000e+00> : vector<16x20xf32>
    %311 = tpu.matmul %262, %310, %cst_142 {dimension_numbers = #tpu.dot_dimension_numbers<[1], [0], [0], [1], [0, 0, 1, 1], [], []>} : vector<16x80xf32>, vector<80x20xf32>, vector<16x20xf32> -> vector<16x20xf32>
    %c4_143 = arith.constant 4 : index
    %c0_144 = arith.constant 0 : index
    %c0_145 = arith.constant 0 : index
    %312 = vector.load %arg14[%c4_143, %c0_144, %c0_145] : memref<8x32x16xbf16, #tpu.memory_space<vmem>>, vector<1x32x16xbf16>
    %313 = vector.shape_cast %312 : vector<1x32x16xbf16> to vector<32x16xbf16>
    %314 = arith.truncf %311 : vector<16x20xf32> to vector<16x20xbf16>
    %cst_146 = arith.constant dense<0.000000e+00> : vector<32x20xf32>
    %315 = tpu.matmul %313, %314, %cst_146 {dimension_numbers = #tpu.dot_dimension_numbers<[1], [0], [0], [1], [0, 0, 1, 1], [], []>} : vector<32x16xbf16>, vector<16x20xbf16>, vector<32x20xf32> -> vector<32x20xf32>
    %316 = arith.addf %306, %315 : vector<32x20xf32>
    %c1_i32_147 = arith.constant 1 : i32
    %317 = vector.broadcast %c1_i32_147 : i32 to vector<80x20xi32>
    %318 = arith.cmpi eq, %267, %317 : vector<80x20xi32>
    %319 = arith.extui %318 : vector<80x20xi1> to vector<80x20xi32>
    %320 = arith.sitofp %319 : vector<80x20xi32> to vector<80x20xf32>
    %cst_148 = arith.constant dense<0.000000e+00> : vector<16x20xf32>
    %321 = tpu.matmul %262, %320, %cst_148 {dimension_numbers = #tpu.dot_dimension_numbers<[1], [0], [0], [1], [0, 0, 1, 1], [], []>} : vector<16x80xf32>, vector<80x20xf32>, vector<16x20xf32> -> vector<16x20xf32>
    %c5_149 = arith.constant 5 : index
    %c0_150 = arith.constant 0 : index
    %c0_151 = arith.constant 0 : index
    %322 = vector.load %arg14[%c5_149, %c0_150, %c0_151] : memref<8x32x16xbf16, #tpu.memory_space<vmem>>, vector<1x32x16xbf16>
    %323 = vector.shape_cast %322 : vector<1x32x16xbf16> to vector<32x16xbf16>
    %324 = arith.truncf %321 : vector<16x20xf32> to vector<16x20xbf16>
    %cst_152 = arith.constant dense<0.000000e+00> : vector<32x20xf32>
    %325 = tpu.matmul %323, %324, %cst_152 {dimension_numbers = #tpu.dot_dimension_numbers<[1], [0], [0], [1], [0, 0, 1, 1], [], []>} : vector<32x16xbf16>, vector<16x20xbf16>, vector<32x20xf32> -> vector<32x20xf32>
    %326 = arith.addf %316, %325 : vector<32x20xf32>
    %c2_i32_153 = arith.constant 2 : i32
    %327 = vector.broadcast %c2_i32_153 : i32 to vector<80x20xi32>
    %328 = arith.cmpi eq, %267, %327 : vector<80x20xi32>
    %329 = arith.extui %328 : vector<80x20xi1> to vector<80x20xi32>
    %330 = arith.sitofp %329 : vector<80x20xi32> to vector<80x20xf32>
    %cst_154 = arith.constant dense<0.000000e+00> : vector<16x20xf32>
    %331 = tpu.matmul %262, %330, %cst_154 {dimension_numbers = #tpu.dot_dimension_numbers<[1], [0], [0], [1], [0, 0, 1, 1], [], []>} : vector<16x80xf32>, vector<80x20xf32>, vector<16x20xf32> -> vector<16x20xf32>
    %c6_155 = arith.constant 6 : index
    %c0_156 = arith.constant 0 : index
    %c0_157 = arith.constant 0 : index
    %332 = vector.load %arg14[%c6_155, %c0_156, %c0_157] : memref<8x32x16xbf16, #tpu.memory_space<vmem>>, vector<1x32x16xbf16>
    %333 = vector.shape_cast %332 : vector<1x32x16xbf16> to vector<32x16xbf16>
    %334 = arith.truncf %331 : vector<16x20xf32> to vector<16x20xbf16>
    %cst_158 = arith.constant dense<0.000000e+00> : vector<32x20xf32>
    %335 = tpu.matmul %333, %334, %cst_158 {dimension_numbers = #tpu.dot_dimension_numbers<[1], [0], [0], [1], [0, 0, 1, 1], [], []>} : vector<32x16xbf16>, vector<16x20xbf16>, vector<32x20xf32> -> vector<32x20xf32>
    %336 = arith.addf %326, %335 : vector<32x20xf32>
    %c3_i32 = arith.constant 3 : i32
    %337 = vector.broadcast %c3_i32 : i32 to vector<80x20xi32>
    %338 = arith.cmpi eq, %267, %337 : vector<80x20xi32>
    %339 = arith.extui %338 : vector<80x20xi1> to vector<80x20xi32>
    %340 = arith.sitofp %339 : vector<80x20xi32> to vector<80x20xf32>
    %cst_159 = arith.constant dense<0.000000e+00> : vector<16x20xf32>
    %341 = tpu.matmul %262, %340, %cst_159 {dimension_numbers = #tpu.dot_dimension_numbers<[1], [0], [0], [1], [0, 0, 1, 1], [], []>} : vector<16x80xf32>, vector<80x20xf32>, vector<16x20xf32> -> vector<16x20xf32>
    %c7 = arith.constant 7 : index
    %c0_160 = arith.constant 0 : index
    %c0_161 = arith.constant 0 : index
    %342 = vector.load %arg14[%c7, %c0_160, %c0_161] : memref<8x32x16xbf16, #tpu.memory_space<vmem>>, vector<1x32x16xbf16>
    %343 = vector.shape_cast %342 : vector<1x32x16xbf16> to vector<32x16xbf16>
    %344 = arith.truncf %341 : vector<16x20xf32> to vector<16x20xbf16>
    %cst_162 = arith.constant dense<0.000000e+00> : vector<32x20xf32>
    %345 = tpu.matmul %343, %344, %cst_162 {dimension_numbers = #tpu.dot_dimension_numbers<[1], [0], [0], [1], [0, 0, 1, 1], [], []>} : vector<32x16xbf16>, vector<16x20xbf16>, vector<32x20xf32> -> vector<32x20xf32>
    %346 = arith.addf %336, %345 : vector<32x20xf32>
    %c0_163 = arith.constant 0 : index
    %c0_164 = arith.constant 0 : index
    %347 = vector.load %arg15[%c0_163, %c0_164] : memref<32x1xf32, #tpu.memory_space<vmem>>, vector<32x1xf32>
    %348 = vector.broadcast %347 : vector<32x1xf32> to vector<32x20xf32>
    %349 = arith.addf %346, %348 : vector<32x20xf32>
    %cst_165 = arith.constant 0.000000e+00 : f32
    %350 = vector.broadcast %cst_165 : f32 to vector<32x20xf32>
    %351 = arith.cmpf ogt, %349, %350 : vector<32x20xf32>
    %cst_166 = arith.constant 0.000000e+00 : f32
    %352 = vector.broadcast %cst_166 : f32 to vector<32x20xf32>
    %353 = arith.minimumf %349, %352 : vector<32x20xf32>
    %354 = math.exp %353 : vector<32x20xf32>
    %cst_167 = arith.constant 1.000000e+00 : f32
    %355 = vector.broadcast %cst_167 : f32 to vector<32x20xf32>
    %356 = arith.subf %354, %355 : vector<32x20xf32>
    %357 = arith.select %351, %349, %356 : vector<32x20xi1>, vector<32x20xf32>
    %358 = tpu.iota {dimensions = array<i32: 0>} : vector<20x20xi32>
    %359 = tpu.iota {dimensions = array<i32: 1>} : vector<20x20xi32>
    %c1_i32_168 = arith.constant 1 : i32
    %360 = vector.broadcast %c1_i32_168 : i32 to vector<20x20xi32>
    %361 = arith.muli %360, %359 : vector<20x20xi32>
    %362 = arith.subi %358, %361 : vector<20x20xi32>
    %c-2_i32_169 = arith.constant -2 : i32
    %363 = vector.broadcast %c-2_i32_169 : i32 to vector<20x20xi32>
    %364 = arith.cmpi eq, %362, %363 : vector<20x20xi32>
    %365 = arith.extui %364 : vector<20x20xi1> to vector<20x20xi32>
    %366 = arith.sitofp %365 : vector<20x20xi32> to vector<20x20xf32>
    %cst_170 = arith.constant dense<0.000000e+00> : vector<32x20xf32>
    %367 = tpu.matmul %357, %366, %cst_170 {dimension_numbers = #tpu.dot_dimension_numbers<[1], [0], [0], [1], [0, 0, 1, 1], [], []>} : vector<32x20xf32>, vector<20x20xf32>, vector<32x20xf32> -> vector<32x20xf32>
    %c0_171 = arith.constant 0 : index
    %c0_172 = arith.constant 0 : index
    %c0_173 = arith.constant 0 : index
    %368 = vector.load %arg16[%c0_171, %c0_172, %c0_173] : memref<3x16x32xbf16, #tpu.memory_space<vmem>>, vector<1x16x32xbf16>
    %369 = vector.shape_cast %368 : vector<1x16x32xbf16> to vector<16x32xbf16>
    %370 = arith.truncf %367 : vector<32x20xf32> to vector<32x20xbf16>
    %cst_174 = arith.constant dense<0.000000e+00> : vector<16x20xf32>
    %371 = tpu.matmul %369, %370, %cst_174 {dimension_numbers = #tpu.dot_dimension_numbers<[1], [0], [0], [1], [0, 0, 1, 1], [], []>} : vector<16x32xbf16>, vector<32x20xbf16>, vector<16x20xf32> -> vector<16x20xf32>
    %c-1_i32_175 = arith.constant -1 : i32
    %372 = vector.broadcast %c-1_i32_175 : i32 to vector<20x20xi32>
    %373 = arith.cmpi eq, %362, %372 : vector<20x20xi32>
    %374 = arith.extui %373 : vector<20x20xi1> to vector<20x20xi32>
    %375 = arith.sitofp %374 : vector<20x20xi32> to vector<20x20xf32>
    %cst_176 = arith.constant dense<0.000000e+00> : vector<32x20xf32>
    %376 = tpu.matmul %357, %375, %cst_176 {dimension_numbers = #tpu.dot_dimension_numbers<[1], [0], [0], [1], [0, 0, 1, 1], [], []>} : vector<32x20xf32>, vector<20x20xf32>, vector<32x20xf32> -> vector<32x20xf32>
    %c1_177 = arith.constant 1 : index
    %c0_178 = arith.constant 0 : index
    %c0_179 = arith.constant 0 : index
    %377 = vector.load %arg16[%c1_177, %c0_178, %c0_179] : memref<3x16x32xbf16, #tpu.memory_space<vmem>>, vector<1x16x32xbf16>
    %378 = vector.shape_cast %377 : vector<1x16x32xbf16> to vector<16x32xbf16>
    %379 = arith.truncf %376 : vector<32x20xf32> to vector<32x20xbf16>
    %cst_180 = arith.constant dense<0.000000e+00> : vector<16x20xf32>
    %380 = tpu.matmul %378, %379, %cst_180 {dimension_numbers = #tpu.dot_dimension_numbers<[1], [0], [0], [1], [0, 0, 1, 1], [], []>} : vector<16x32xbf16>, vector<32x20xbf16>, vector<16x20xf32> -> vector<16x20xf32>
    %381 = arith.addf %371, %380 : vector<16x20xf32>
    %c2_181 = arith.constant 2 : index
    %c0_182 = arith.constant 0 : index
    %c0_183 = arith.constant 0 : index
    %382 = vector.load %arg16[%c2_181, %c0_182, %c0_183] : memref<3x16x32xbf16, #tpu.memory_space<vmem>>, vector<1x16x32xbf16>
    %383 = vector.shape_cast %382 : vector<1x16x32xbf16> to vector<16x32xbf16>
    %384 = arith.truncf %357 : vector<32x20xf32> to vector<32x20xbf16>
    %cst_184 = arith.constant dense<0.000000e+00> : vector<16x20xf32>
    %385 = tpu.matmul %383, %384, %cst_184 {dimension_numbers = #tpu.dot_dimension_numbers<[1], [0], [0], [1], [0, 0, 1, 1], [], []>} : vector<16x32xbf16>, vector<32x20xbf16>, vector<16x20xf32> -> vector<16x20xf32>
    %386 = arith.addf %381, %385 : vector<16x20xf32>
    %c0_185 = arith.constant 0 : index
    %c0_186 = arith.constant 0 : index
    %387 = vector.load %arg17[%c0_185, %c0_186] : memref<16x1xf32, #tpu.memory_space<vmem>>, vector<16x1xf32>
    %388 = vector.broadcast %387 : vector<16x1xf32> to vector<16x20xf32>
    %389 = arith.addf %386, %388 : vector<16x20xf32>
    %390 = tpu.iota {dimensions = array<i32: 0>} : vector<32x20xi32>
    %391 = arith.sitofp %390 : vector<32x20xi32> to vector<32x20xf32>
    %c0_187 = arith.constant 0 : index
    %c0_188 = arith.constant 0 : index
    %c0_189 = arith.constant 0 : index
    %392 = vector.load %arg18[%c0_187, %c0_188, %c0_189] : memref<4x32x16xf32, #tpu.memory_space<vmem>>, vector<1x32x16xf32>
    %393 = vector.shape_cast %392 : vector<1x32x16xf32> to vector<32x16xf32>
    %c0_190 = arith.constant 0 : index
    %c0_191 = arith.constant 0 : index
    %c0_192 = arith.constant 0 : index
    %394 = vector.load %arg19[%c0_190, %c0_191, %c0_192] : memref<4x16x32xf32, #tpu.memory_space<vmem>>, vector<1x16x32xf32>
    %395 = vector.shape_cast %394 : vector<1x16x32xf32> to vector<16x32xf32>
    %396 = arith.mulf %393, %393 : vector<32x16xf32>
    %cst_193 = arith.constant dense<0.000000e+00> : vector<32xf32>
    %397 = vector.multi_reduction <add>, %396, %cst_193 [1] : vector<32x16xf32> to vector<32xf32>
    %398 = vector.shape_cast %397 : vector<32xf32> to vector<32x1xf32>
    %cst_194 = arith.constant dense<0.000000e+00> : vector<32x20xf32>
    %399 = tpu.matmul %393, %389, %cst_194 {dimension_numbers = #tpu.dot_dimension_numbers<[1], [0], [0], [1], [0, 0, 1, 1], [], []>} : vector<32x16xf32>, vector<16x20xf32>, vector<32x20xf32> -> vector<32x20xf32>
    %cst_195 = arith.constant 2.000000e+00 : f32
    %400 = vector.broadcast %cst_195 : f32 to vector<32x20xf32>
    %401 = arith.mulf %400, %399 : vector<32x20xf32>
    %402 = vector.broadcast %398 : vector<32x1xf32> to vector<32x20xf32>
    %403 = arith.subf %402, %401 : vector<32x20xf32>
    %cst_196 = arith.constant dense<0x7F800000> : vector<20xf32>
    %404 = vector.multi_reduction <minimumf>, %403, %cst_196 [0] : vector<32x20xf32> to vector<20xf32>
    %405 = vector.shape_cast %404 : vector<20xf32> to vector<1x20xf32>
    %406 = vector.broadcast %405 : vector<1x20xf32> to vector<32x20xf32>
    %407 = arith.cmpf ole, %403, %406 : vector<32x20xf32>
    %cst_197 = arith.constant 3.200000e+01 : f32
    %408 = vector.broadcast %cst_197 : f32 to vector<32x20xf32>
    %409 = arith.select %407, %391, %408 : vector<32x20xi1>, vector<32x20xf32>
    %cst_198 = arith.constant dense<0x7F800000> : vector<20xf32>
    %410 = vector.multi_reduction <minimumf>, %409, %cst_198 [0] : vector<32x20xf32> to vector<20xf32>
    %411 = vector.shape_cast %410 : vector<20xf32> to vector<1x20xf32>
    %412 = vector.broadcast %411 : vector<1x20xf32> to vector<32x20xf32>
    %413 = arith.cmpf oeq, %391, %412 : vector<32x20xf32>
    %414 = arith.extui %413 : vector<32x20xi1> to vector<32x20xi32>
    %415 = arith.sitofp %414 : vector<32x20xi32> to vector<32x20xf32>
    %cst_199 = arith.constant dense<0.000000e+00> : vector<16x20xf32>
    %416 = tpu.matmul %395, %415, %cst_199 {dimension_numbers = #tpu.dot_dimension_numbers<[1], [0], [0], [1], [0, 0, 1, 1], [], []>} : vector<16x32xf32>, vector<32x20xf32>, vector<16x20xf32> -> vector<16x20xf32>
    %417 = arith.subf %389, %416 : vector<16x20xf32>
    %c1_200 = arith.constant 1 : index
    %c0_201 = arith.constant 0 : index
    %c0_202 = arith.constant 0 : index
    %418 = vector.load %arg18[%c1_200, %c0_201, %c0_202] : memref<4x32x16xf32, #tpu.memory_space<vmem>>, vector<1x32x16xf32>
    %419 = vector.shape_cast %418 : vector<1x32x16xf32> to vector<32x16xf32>
    %c1_203 = arith.constant 1 : index
    %c0_204 = arith.constant 0 : index
    %c0_205 = arith.constant 0 : index
    %420 = vector.load %arg19[%c1_203, %c0_204, %c0_205] : memref<4x16x32xf32, #tpu.memory_space<vmem>>, vector<1x16x32xf32>
    %421 = vector.shape_cast %420 : vector<1x16x32xf32> to vector<16x32xf32>
    %422 = arith.mulf %419, %419 : vector<32x16xf32>
    %cst_206 = arith.constant dense<0.000000e+00> : vector<32xf32>
    %423 = vector.multi_reduction <add>, %422, %cst_206 [1] : vector<32x16xf32> to vector<32xf32>
    %424 = vector.shape_cast %423 : vector<32xf32> to vector<32x1xf32>
    %cst_207 = arith.constant dense<0.000000e+00> : vector<32x20xf32>
    %425 = tpu.matmul %419, %417, %cst_207 {dimension_numbers = #tpu.dot_dimension_numbers<[1], [0], [0], [1], [0, 0, 1, 1], [], []>} : vector<32x16xf32>, vector<16x20xf32>, vector<32x20xf32> -> vector<32x20xf32>
    %cst_208 = arith.constant 2.000000e+00 : f32
    %426 = vector.broadcast %cst_208 : f32 to vector<32x20xf32>
    %427 = arith.mulf %426, %425 : vector<32x20xf32>
    %428 = vector.broadcast %424 : vector<32x1xf32> to vector<32x20xf32>
    %429 = arith.subf %428, %427 : vector<32x20xf32>
    %cst_209 = arith.constant dense<0x7F800000> : vector<20xf32>
    %430 = vector.multi_reduction <minimumf>, %429, %cst_209 [0] : vector<32x20xf32> to vector<20xf32>
    %431 = vector.shape_cast %430 : vector<20xf32> to vector<1x20xf32>
    %432 = vector.broadcast %431 : vector<1x20xf32> to vector<32x20xf32>
    %433 = arith.cmpf ole, %429, %432 : vector<32x20xf32>
    %cst_210 = arith.constant 3.200000e+01 : f32
    %434 = vector.broadcast %cst_210 : f32 to vector<32x20xf32>
    %435 = arith.select %433, %391, %434 : vector<32x20xi1>, vector<32x20xf32>
    %cst_211 = arith.constant dense<0x7F800000> : vector<20xf32>
    %436 = vector.multi_reduction <minimumf>, %435, %cst_211 [0] : vector<32x20xf32> to vector<20xf32>
    %437 = vector.shape_cast %436 : vector<20xf32> to vector<1x20xf32>
    %438 = vector.broadcast %437 : vector<1x20xf32> to vector<32x20xf32>
    %439 = arith.cmpf oeq, %391, %438 : vector<32x20xf32>
    %440 = arith.extui %439 : vector<32x20xi1> to vector<32x20xi32>
    %441 = arith.sitofp %440 : vector<32x20xi32> to vector<32x20xf32>
    %cst_212 = arith.constant dense<0.000000e+00> : vector<16x20xf32>
    %442 = tpu.matmul %421, %441, %cst_212 {dimension_numbers = #tpu.dot_dimension_numbers<[1], [0], [0], [1], [0, 0, 1, 1], [], []>} : vector<16x32xf32>, vector<32x20xf32>, vector<16x20xf32> -> vector<16x20xf32>
    %443 = arith.subf %417, %442 : vector<16x20xf32>
    %c2_213 = arith.constant 2 : index
    %c0_214 = arith.constant 0 : index
    %c0_215 = arith.constant 0 : index
    %444 = vector.load %arg18[%c2_213, %c0_214, %c0_215] : memref<4x32x16xf32, #tpu.memory_space<vmem>>, vector<1x32x16xf32>
    %445 = vector.shape_cast %444 : vector<1x32x16xf32> to vector<32x16xf32>
    %c2_216 = arith.constant 2 : index
    %c0_217 = arith.constant 0 : index
    %c0_218 = arith.constant 0 : index
    %446 = vector.load %arg19[%c2_216, %c0_217, %c0_218] : memref<4x16x32xf32, #tpu.memory_space<vmem>>, vector<1x16x32xf32>
    %447 = vector.shape_cast %446 : vector<1x16x32xf32> to vector<16x32xf32>
    %448 = arith.mulf %445, %445 : vector<32x16xf32>
    %cst_219 = arith.constant dense<0.000000e+00> : vector<32xf32>
    %449 = vector.multi_reduction <add>, %448, %cst_219 [1] : vector<32x16xf32> to vector<32xf32>
    %450 = vector.shape_cast %449 : vector<32xf32> to vector<32x1xf32>
    %cst_220 = arith.constant dense<0.000000e+00> : vector<32x20xf32>
    %451 = tpu.matmul %445, %443, %cst_220 {dimension_numbers = #tpu.dot_dimension_numbers<[1], [0], [0], [1], [0, 0, 1, 1], [], []>} : vector<32x16xf32>, vector<16x20xf32>, vector<32x20xf32> -> vector<32x20xf32>
    %cst_221 = arith.constant 2.000000e+00 : f32
    %452 = vector.broadcast %cst_221 : f32 to vector<32x20xf32>
    %453 = arith.mulf %452, %451 : vector<32x20xf32>
    %454 = vector.broadcast %450 : vector<32x1xf32> to vector<32x20xf32>
    %455 = arith.subf %454, %453 : vector<32x20xf32>
    %cst_222 = arith.constant dense<0x7F800000> : vector<20xf32>
    %456 = vector.multi_reduction <minimumf>, %455, %cst_222 [0] : vector<32x20xf32> to vector<20xf32>
    %457 = vector.shape_cast %456 : vector<20xf32> to vector<1x20xf32>
    %458 = vector.broadcast %457 : vector<1x20xf32> to vector<32x20xf32>
    %459 = arith.cmpf ole, %455, %458 : vector<32x20xf32>
    %cst_223 = arith.constant 3.200000e+01 : f32
    %460 = vector.broadcast %cst_223 : f32 to vector<32x20xf32>
    %461 = arith.select %459, %391, %460 : vector<32x20xi1>, vector<32x20xf32>
    %cst_224 = arith.constant dense<0x7F800000> : vector<20xf32>
    %462 = vector.multi_reduction <minimumf>, %461, %cst_224 [0] : vector<32x20xf32> to vector<20xf32>
    %463 = vector.shape_cast %462 : vector<20xf32> to vector<1x20xf32>
    %464 = vector.broadcast %463 : vector<1x20xf32> to vector<32x20xf32>
    %465 = arith.cmpf oeq, %391, %464 : vector<32x20xf32>
    %466 = arith.extui %465 : vector<32x20xi1> to vector<32x20xi32>
    %467 = arith.sitofp %466 : vector<32x20xi32> to vector<32x20xf32>
    %cst_225 = arith.constant dense<0.000000e+00> : vector<16x20xf32>
    %468 = tpu.matmul %447, %467, %cst_225 {dimension_numbers = #tpu.dot_dimension_numbers<[1], [0], [0], [1], [0, 0, 1, 1], [], []>} : vector<16x32xf32>, vector<32x20xf32>, vector<16x20xf32> -> vector<16x20xf32>
    %469 = arith.subf %443, %468 : vector<16x20xf32>
    %c3_226 = arith.constant 3 : index
    %c0_227 = arith.constant 0 : index
    %c0_228 = arith.constant 0 : index
    %470 = vector.load %arg18[%c3_226, %c0_227, %c0_228] : memref<4x32x16xf32, #tpu.memory_space<vmem>>, vector<1x32x16xf32>
    %471 = vector.shape_cast %470 : vector<1x32x16xf32> to vector<32x16xf32>
    %472 = arith.mulf %471, %471 : vector<32x16xf32>
    %cst_229 = arith.constant dense<0.000000e+00> : vector<32xf32>
    %473 = vector.multi_reduction <add>, %472, %cst_229 [1] : vector<32x16xf32> to vector<32xf32>
    %474 = vector.shape_cast %473 : vector<32xf32> to vector<32x1xf32>
    %cst_230 = arith.constant dense<0.000000e+00> : vector<32x20xf32>
    %475 = tpu.matmul %471, %469, %cst_230 {dimension_numbers = #tpu.dot_dimension_numbers<[1], [0], [0], [1], [0, 0, 1, 1], [], []>} : vector<32x16xf32>, vector<16x20xf32>, vector<32x20xf32> -> vector<32x20xf32>
    %cst_231 = arith.constant 2.000000e+00 : f32
    %476 = vector.broadcast %cst_231 : f32 to vector<32x20xf32>
    %477 = arith.mulf %476, %475 : vector<32x20xf32>
    %478 = vector.broadcast %474 : vector<32x1xf32> to vector<32x20xf32>
    %479 = arith.subf %478, %477 : vector<32x20xf32>
    %cst_232 = arith.constant dense<0x7F800000> : vector<20xf32>
    %480 = vector.multi_reduction <minimumf>, %479, %cst_232 [0] : vector<32x20xf32> to vector<20xf32>
    %481 = vector.shape_cast %480 : vector<20xf32> to vector<1x20xf32>
    %482 = vector.broadcast %481 : vector<1x20xf32> to vector<32x20xf32>
    %483 = arith.cmpf ole, %479, %482 : vector<32x20xf32>
    %cst_233 = arith.constant 3.200000e+01 : f32
    %484 = vector.broadcast %cst_233 : f32 to vector<32x20xf32>
    %485 = arith.select %483, %391, %484 : vector<32x20xi1>, vector<32x20xf32>
    %cst_234 = arith.constant dense<0x7F800000> : vector<20xf32>
    %486 = vector.multi_reduction <minimumf>, %485, %cst_234 [0] : vector<32x20xf32> to vector<20xf32>
    %487 = vector.shape_cast %486 : vector<20xf32> to vector<1x20xf32>
    %488 = tpu.concatenate %411, %437, %463, %487 in 0 : vector<1x20xf32>, vector<1x20xf32>, vector<1x20xf32>, vector<1x20xf32> -> vector<4x20xf32>
    %489 = arith.fptosi %488 : vector<4x20xf32> to vector<4x20xi32>
    %490 = vector.shape_cast %489 : vector<4x20xi32> to vector<1x4x20xi32>
    %c0_235 = arith.constant 0 : index
    %c0_236 = arith.constant 0 : index
    %c0_237 = arith.constant 0 : index
    %491 = vector.load %arg20[%c0_235, %c0_236, %c0_237] : memref<1x4x20xi32, #tpu.memory_space<vmem>>, vector<1x4x20xi32>
    tpu.vector_store %arg20[%c0_235, %c0_236, %c0_237], %490 {strides = array<i32>} : memref<1x4x20xi32, #tpu.memory_space<vmem>>, vector<1x4x20xi32>,
    %c1_i32_238 = arith.constant 1 : i32
    %492 = vector.broadcast %c1_i32_238 : i32 to vector<1x4x20xi32>
    %c0_239 = arith.constant 0 : index
    %c0_240 = arith.constant 0 : index
    %c0_241 = arith.constant 0 : index
    %493 = vector.load %arg21[%c0_239, %c0_240, %c0_241] : memref<1x4x20xi32, #tpu.memory_space<vmem>>, vector<1x4x20xi32>
    tpu.vector_store %arg21[%c0_239, %c0_240, %c0_241], %492 {strides = array<i32>} : memref<1x4x20xi32, #tpu.memory_space<vmem>>, vector<1x4x20xi32>,
    return
  }
  func.func @transform_0(%arg0: i32) -> (i32, i32, i32) {
    %c0_i32 = arith.constant 0 : i32
    %c0_i32_0 = arith.constant 0 : i32
    %c0_i32_1 = arith.constant 0 : i32
    return %arg0, %c0_i32, %c0_i32_0 : i32, i32, i32
  }
  func.func @transform_1(%arg0: i32) -> (i32, i32, i32) {
    %c0_i32 = arith.constant 0 : i32
    %c0_i32_0 = arith.constant 0 : i32
    %c0_i32_1 = arith.constant 0 : i32
    %c0_i32_2 = arith.constant 0 : i32
    return %c0_i32, %c0_i32_0, %c0_i32_1 : i32, i32, i32
  }
  func.func @transform_2(%arg0: i32) -> (i32, i32) {
    %c0_i32 = arith.constant 0 : i32
    %c0_i32_0 = arith.constant 0 : i32
    %c0_i32_1 = arith.constant 0 : i32
    return %c0_i32, %c0_i32_0 : i32, i32
  }
  func.func @transform_3(%arg0: i32) -> (i32, i32, i32) {
    %c0_i32 = arith.constant 0 : i32
    %c0_i32_0 = arith.constant 0 : i32
    %c0_i32_1 = arith.constant 0 : i32
    %c0_i32_2 = arith.constant 0 : i32
    return %c0_i32, %c0_i32_0, %c0_i32_1 : i32, i32, i32
  }
  func.func @transform_4(%arg0: i32) -> (i32, i32) {
    %c0_i32 = arith.constant 0 : i32
    %c0_i32_0 = arith.constant 0 : i32
    %c0_i32_1 = arith.constant 0 : i32
    return %c0_i32, %c0_i32_0 : i32, i32
  }
  func.func @transform_5(%arg0: i32) -> (i32, i32, i32) {
    %c0_i32 = arith.constant 0 : i32
    %c0_i32_0 = arith.constant 0 : i32
    %c0_i32_1 = arith.constant 0 : i32
    %c0_i32_2 = arith.constant 0 : i32
    return %c0_i32, %c0_i32_0, %c0_i32_1 : i32, i32, i32
  }
  func.func @transform_6(%arg0: i32) -> (i32, i32) {
    %c0_i32 = arith.constant 0 : i32
    %c0_i32_0 = arith.constant 0 : i32
    %c0_i32_1 = arith.constant 0 : i32
    return %c0_i32, %c0_i32_0 : i32, i32
  }
  func.func @transform_7(%arg0: i32) -> (i32, i32, i32) {
    %c0_i32 = arith.constant 0 : i32
    %c0_i32_0 = arith.constant 0 : i32
    %c0_i32_1 = arith.constant 0 : i32
    %c0_i32_2 = arith.constant 0 : i32
    return %c0_i32, %c0_i32_0, %c0_i32_1 : i32, i32, i32
  }
  func.func @transform_8(%arg0: i32) -> (i32, i32) {
    %c0_i32 = arith.constant 0 : i32
    %c0_i32_0 = arith.constant 0 : i32
    %c0_i32_1 = arith.constant 0 : i32
    return %c0_i32, %c0_i32_0 : i32, i32
  }
  func.func @transform_9(%arg0: i32) -> (i32, i32, i32) {
    %c0_i32 = arith.constant 0 : i32
    %c0_i32_0 = arith.constant 0 : i32
    %c0_i32_1 = arith.constant 0 : i32
    %c0_i32_2 = arith.constant 0 : i32
    return %c0_i32, %c0_i32_0, %c0_i32_1 : i32, i32, i32
  }
  func.func @transform_10(%arg0: i32) -> (i32, i32) {
    %c0_i32 = arith.constant 0 : i32
    %c0_i32_0 = arith.constant 0 : i32
    %c0_i32_1 = arith.constant 0 : i32
    return %c0_i32, %c0_i32_0 : i32, i32
  }
  func.func @transform_11(%arg0: i32) -> (i32, i32, i32) {
    %c0_i32 = arith.constant 0 : i32
    %c0_i32_0 = arith.constant 0 : i32
    %c0_i32_1 = arith.constant 0 : i32
    %c0_i32_2 = arith.constant 0 : i32
    return %c0_i32, %c0_i32_0, %c0_i32_1 : i32, i32, i32
  }
  func.func @transform_12(%arg0: i32) -> (i32, i32) {
    %c0_i32 = arith.constant 0 : i32
    %c0_i32_0 = arith.constant 0 : i32
    %c0_i32_1 = arith.constant 0 : i32
    return %c0_i32, %c0_i32_0 : i32, i32
  }
  func.func @transform_13(%arg0: i32) -> (i32, i32, i32) {
    %c0_i32 = arith.constant 0 : i32
    %c0_i32_0 = arith.constant 0 : i32
    %c0_i32_1 = arith.constant 0 : i32
    %c0_i32_2 = arith.constant 0 : i32
    return %c0_i32, %c0_i32_0, %c0_i32_1 : i32, i32, i32
  }
  func.func @transform_14(%arg0: i32) -> (i32, i32) {
    %c0_i32 = arith.constant 0 : i32
    %c0_i32_0 = arith.constant 0 : i32
    %c0_i32_1 = arith.constant 0 : i32
    return %c0_i32, %c0_i32_0 : i32, i32
  }
  func.func @transform_15(%arg0: i32) -> (i32, i32, i32) {
    %c0_i32 = arith.constant 0 : i32
    %c0_i32_0 = arith.constant 0 : i32
    %c0_i32_1 = arith.constant 0 : i32
    %c0_i32_2 = arith.constant 0 : i32
    return %c0_i32, %c0_i32_0, %c0_i32_1 : i32, i32, i32
  }
  func.func @transform_16(%arg0: i32) -> (i32, i32) {
    %c0_i32 = arith.constant 0 : i32
    %c0_i32_0 = arith.constant 0 : i32
    %c0_i32_1 = arith.constant 0 : i32
    return %c0_i32, %c0_i32_0 : i32, i32
  }
  func.func @transform_17(%arg0: i32) -> (i32, i32, i32) {
    %c0_i32 = arith.constant 0 : i32
    %c0_i32_0 = arith.constant 0 : i32
    %c0_i32_1 = arith.constant 0 : i32
    %c0_i32_2 = arith.constant 0 : i32
    return %c0_i32, %c0_i32_0, %c0_i32_1 : i32, i32, i32
  }
  func.func @transform_18(%arg0: i32) -> (i32, i32, i32) {
    %c0_i32 = arith.constant 0 : i32
    %c0_i32_0 = arith.constant 0 : i32
    %c0_i32_1 = arith.constant 0 : i32
    %c0_i32_2 = arith.constant 0 : i32
    return %c0_i32, %c0_i32_0, %c0_i32_1 : i32, i32, i32
  }
  func.func @transform_19(%arg0: i32) -> (i32, i32, i32) {
    %c0_i32 = arith.constant 0 : i32
    %c0_i32_0 = arith.constant 0 : i32
    %c0_i32_1 = arith.constant 0 : i32
    return %arg0, %c0_i32, %c0_i32_0 : i32, i32, i32
  }
  func.func @transform_20(%arg0: i32) -> (i32, i32, i32) {
    %c0_i32 = arith.constant 0 : i32
    %c0_i32_0 = arith.constant 0 : i32
    %c0_i32_1 = arith.constant 0 : i32
    return %arg0, %c0_i32, %c0_i32_0 : i32, i32, i32
  }
}

</mosaic_0001>

<llo_original>
// kernel: encodec_wrapper_forward.1
$region0: #{encodec_wrapper_forward.1}
  #allocation0 [shape = 'u32[]', space=smem, size = 0x4, offset = 0x4, fixed_abs, tag = 'smem constant byte address 0x4 - core index']
  #allocation1 [shape = 'u32[72,128]{1,0:T(1,128)}', space=vmem, size = 0x9000, scoped, tag = 'internal scratch']
  %s0 = inlined_call_operand.vmem [shape: f32[2,1,160], index: 0, kind: input, shape index: {}]
  %s1 = inlined_call_operand.vmem [shape: bf16[7,8,1], index: 1, kind: input, shape index: {}]
  %s2 = inlined_call_operand.vmem [shape: f32[8,1], index: 2, kind: input, shape index: {}]
  %s3 = inlined_call_operand.vmem [shape: bf16[3,4,8], index: 3, kind: input, shape index: {}]
  %s4 = inlined_call_operand.vmem [shape: f32[4,1], index: 4, kind: input, shape index: {}]
  %s5 = inlined_call_operand.vmem [shape: bf16[1,8,4], index: 5, kind: input, shape index: {}]
  %s6 = inlined_call_operand.vmem [shape: f32[8,1], index: 6, kind: input, shape index: {}]
  %s7 = inlined_call_operand.vmem [shape: bf16[4,16,8], index: 7, kind: input, shape index: {}]
  %s8 = inlined_call_operand.vmem [shape: f32[16,1], index: 8, kind: input, shape index: {}]
  %s9 = inlined_call_operand.vmem [shape: bf16[3,8,16], index: 9, kind: input, shape index: {}]
  %s10 = inlined_call_operand.vmem [shape: f32[8,1], index: 10, kind: input, shape index: {}]
  %s11 = inlined_call_operand.vmem [shape: bf16[1,16,8], index: 11, kind: input, shape index: {}]
  %s12 = inlined_call_operand.vmem [shape: f32[16,1], index: 12, kind: input, shape index: {}]
  %s13 = inlined_call_operand.vmem [shape: bf16[8,32,16], index: 13, kind: input, shape index: {}]
  %s14 = inlined_call_operand.vmem [shape: f32[32,1], index: 14, kind: input, shape index: {}]
  %s15 = inlined_call_operand.vmem [shape: bf16[3,16,32], index: 15, kind: input, shape index: {}]
  %s16 = inlined_call_operand.vmem [shape: f32[16,1], index: 16, kind: input, shape index: {}]
  %s17 = inlined_call_operand.vmem [shape: f32[4,32,16], index: 17, kind: input, shape index: {}]
  %s18 = inlined_call_operand.vmem [shape: f32[4,16,32], index: 18, kind: input, shape index: {}]
  %s19 = inlined_call_operand.hbm [shape: s32[2,4,20], index: 19, kind: output, shape index: {0}]
  %s20 = inlined_call_operand.hbm [shape: s32[2,4,20], index: 20, kind: output, shape index: {1}]
  %21 = xla_tuple %s19, %s20
  %s22 = sld [smem:[#allocation0]]
  $region117: #{encodec_wrapper_forward.1} parent=0
    _
  %s24 = ssub.s32 1, %s22
  %s25 = scalar_select 0, %s24, %s22
  $region1: #{encodec_wrapper_forward.1} parent=0
    #allocation2 [shape = 'u8[4096]{0}', space=vmem, size = 0x1000, scoped, tag = 'output window, operand 0']
    #allocation3 [shape = 's32[2]{0}', space=sflag, size = 0x8, scoped, tag = 'scoped memory for encodec_wrapper_forward.1']
    #allocation4 [shape = 'u8[4096]{0}', space=vmem, size = 0x1000, scoped, tag = 'output window, operand 1']
    #allocation5 [shape = 's32[2]{0}', space=sflag, size = 0x8, scoped, tag = 'scoped memory for encodec_wrapper_forward.1']
    %26 = vsyncpa [#allocation3], 0
    %s27 = scalar_lea.sflag [#allocation3], 1
    %28 = vsyncpa %s27, 0
    %29 = vsyncpa [#allocation5], 0
    %s30 = scalar_lea.sflag [#allocation5], 1
    %31 = vsyncpa %s30, 0
    loop: start=0, step=1, limit=4
    $region2: #{encodec_wrapper_forward.1} parent=1 // loop_pre_header
      _
    $region3: #{encodec_wrapper_forward.1} parent=1 // loop_header
      %s33 = sphi 0, %s37
      %p34 = scmp.ge.s32.totalorder %s33, 4
      %s43 = sphi 0, %s45
      %s46 = sphi 0, %s43
      %s47 = sphi 0, %s46
      %s63 = sphi 0, %s47
      %s67 = sphi 0, %s67
      %s69 = sphi 0, %s67
      %s70 = sphi 0, %s69
      %s84 = sphi 0, %s70
      %s88 = sphi 0, %s88
      %s90 = sphi 0, %s88
      %s91 = sphi 0, %s90
      %s105 = sphi 0, %s91
      %s109 = sphi 0, %s109
      %s111 = sphi 0, %s109
      %s112 = sphi 0, %s111
      %s126 = sphi 0, %s112
      %s130 = sphi 0, %s130
      %s132 = sphi 0, %s130
      %s133 = sphi 0, %s132
      %s147 = sphi 0, %s133
      %s151 = sphi 0, %s151
      %s153 = sphi 0, %s151
      %s154 = sphi 0, %s153
      %s168 = sphi 0, %s154
      %s172 = sphi 0, %s172
      %s174 = sphi 0, %s172
      %s175 = sphi 0, %s174
      %s189 = sphi 0, %s175
      %s193 = sphi 0, %s193
      %s195 = sphi 0, %s193
      %s196 = sphi 0, %s195
      %s210 = sphi 0, %s196
      %s214 = sphi 0, %s214
      %s216 = sphi 0, %s214
      %s217 = sphi 0, %s216
      %s231 = sphi 0, %s217
      %s235 = sphi 0, %s235
      %s237 = sphi 0, %s235
      %s238 = sphi 0, %s237
      %s252 = sphi 0, %s238
      %s256 = sphi 0, %s256
      %s258 = sphi 0, %s256
      %s259 = sphi 0, %s258
      %s273 = sphi 0, %s259
      %s277 = sphi 0, %s277
      %s279 = sphi 0, %s277
      %s280 = sphi 0, %s279
      %s294 = sphi 0, %s280
      %s298 = sphi 0, %s298
      %s300 = sphi 0, %s298
      %s301 = sphi 0, %s300
      %s315 = sphi 0, %s301
      %s319 = sphi 0, %s319
      %s321 = sphi 0, %s319
      %s322 = sphi 0, %s321
      %s336 = sphi 0, %s322
      %s340 = sphi 0, %s340
      %s342 = sphi 0, %s340
      %s343 = sphi 0, %s342
      %s357 = sphi 0, %s343
      %s361 = sphi 0, %s361
      %s363 = sphi 0, %s361
      %s364 = sphi 0, %s363
      %s378 = sphi 0, %s364
      %s382 = sphi 0, %s382
      %s384 = sphi 0, %s382
      %s385 = sphi 0, %s384
      %s399 = sphi 0, %s385
      %s403 = sphi 0, %s403
      %s405 = sphi 0, %s403
      %s406 = sphi 0, %s405
      %s420 = sphi 0, %s406
      %s424 = sphi 0, %s424
      %s426 = sphi 0, %s424
      %s427 = sphi 0, %s426
      %s441 = sphi 0, %s427
      %s447 = sphi 0, %s449
      %s450 = sphi 0, %s447
      %s451 = sphi 0, %s450
      %s467 = sphi 0, %s451
      %s473 = sphi 0, %s475
      %s476 = sphi 0, %s473
      %s477 = sphi 0, %s476
      %s493 = sphi 0, %s477
    $region4: #{encodec_wrapper_forward.1} parent=1 // loop_header_branch
      %36 = sbr.rel (%p34) target = $region8
    $region5: #{encodec_wrapper_forward.1} parent=1 // loop_body
      %s38 = ssub.s32 %s33, 1
      %s39 = ssub.s32 %s33, 2
      %s40 = sadd.s32 %s33, 1
      %s41 = ssub.s32 %s33, %s40
      %p42 = scmp.eq.s32.totalorder %s41, 0
      %s44 = sadd.s32 %s43, 1
      %s45 = scalar_select %p42, %s43, %s44
      %p48 = pneg %p42
      %p49 = scmp.eq.s32.totalorder %s33, 1
      %p50 = por %p48, %p49
      %p51 = scmp.ne.s32.totalorder %s43, %s46
      %p52 = scmp.eq.s32.totalorder %s33, 0
      %p53 = por %p51, %p52
      %p54 = scmp.ne.s32.totalorder %s43, %s46
      %p55 = scmp.eq.s32.totalorder %s38, 1
      %p56 = por %p54, %p55
      %p57 = scmp.ne.s32.totalorder %s46, %s47
      %p58 = scmp.eq.s32.totalorder %s38, 0
      %p59 = por %p57, %p58
      %p60 = scmp.ne.s32.totalorder %s46, %s47
      %p61 = scmp.eq.s32.totalorder %s39, 1
      %p62 = por %p60, %p61
      %p64 = scmp.ne.s32.totalorder %s47, %s63
      %p65 = scmp.eq.s32.totalorder %s39, 0
      %p66 = por %p64, %p65
      %s68 = sadd.s32 %s67, 1
      %p71 = scmp.eq.s32.totalorder %s33, 1
      %p72 = scmp.ne.s32.totalorder %s67, %s69
      %p73 = scmp.eq.s32.totalorder %s33, 0
      %p74 = por %p72, %p73
      %p75 = scmp.ne.s32.totalorder %s67, %s69
      %p76 = scmp.eq.s32.totalorder %s38, 1
      %p77 = por %p75, %p76
      %p78 = scmp.ne.s32.totalorder %s69, %s70
      %p79 = scmp.eq.s32.totalorder %s38, 0
      %p80 = por %p78, %p79
      %p81 = scmp.ne.s32.totalorder %s69, %s70
      %p82 = scmp.eq.s32.totalorder %s39, 1
      %p83 = por %p81, %p82
      %p85 = scmp.ne.s32.totalorder %s70, %s84
      %p86 = scmp.eq.s32.totalorder %s39, 0
      %p87 = por %p85, %p86
      %s89 = sadd.s32 %s88, 1
      %p92 = scmp.eq.s32.totalorder %s33, 1
      %p93 = scmp.ne.s32.totalorder %s88, %s90
      %p94 = scmp.eq.s32.totalorder %s33, 0
      %p95 = por %p93, %p94
      %p96 = scmp.ne.s32.totalorder %s88, %s90
      %p97 = scmp.eq.s32.totalorder %s38, 1
      %p98 = por %p96, %p97
      %p99 = scmp.ne.s32.totalorder %s90, %s91
      %p100 = scmp.eq.s32.totalorder %s38, 0
      %p101 = por %p99, %p100
      %p102 = scmp.ne.s32.totalorder %s90, %s91
      %p103 = scmp.eq.s32.totalorder %s39, 1
      %p104 = por %p102, %p103
      %p106 = scmp.ne.s32.totalorder %s91, %s105
      %p107 = scmp.eq.s32.totalorder %s39, 0
      %p108 = por %p106, %p107
      %s110 = sadd.s32 %s109, 1
      %p113 = scmp.eq.s32.totalorder %s33, 1
      %p114 = scmp.ne.s32.totalorder %s109, %s111
      %p115 = scmp.eq.s32.totalorder %s33, 0
      %p116 = por %p114, %p115
      %p117 = scmp.ne.s32.totalorder %s109, %s111
      %p118 = scmp.eq.s32.totalorder %s38, 1
      %p119 = por %p117, %p118
      %p120 = scmp.ne.s32.totalorder %s111, %s112
      %p121 = scmp.eq.s32.totalorder %s38, 0
      %p122 = por %p120, %p121
      %p123 = scmp.ne.s32.totalorder %s111, %s112
      %p124 = scmp.eq.s32.totalorder %s39, 1
      %p125 = por %p123, %p124
      %p127 = scmp.ne.s32.totalorder %s112, %s126
      %p128 = scmp.eq.s32.totalorder %s39, 0
      %p129 = por %p127, %p128
      %s131 = sadd.s32 %s130, 1
      %p134 = scmp.eq.s32.totalorder %s33, 1
      %p135 = scmp.ne.s32.totalorder %s130, %s132
      %p136 = scmp.eq.s32.totalorder %s33, 0
      %p137 = por %p135, %p136
      %p138 = scmp.ne.s32.totalorder %s130, %s132
      %p139 = scmp.eq.s32.totalorder %s38, 1
      %p140 = por %p138, %p139
      %p141 = scmp.ne.s32.totalorder %s132, %s133
      %p142 = scmp.eq.s32.totalorder %s38, 0
      %p143 = por %p141, %p142
      %p144 = scmp.ne.s32.totalorder %s132, %s133
      %p145 = scmp.eq.s32.totalorder %s39, 1
      %p146 = por %p144, %p145
      %p148 = scmp.ne.s32.totalorder %s133, %s147
      %p149 = scmp.eq.s32.totalorder %s39, 0
      %p150 = por %p148, %p149
      %s152 = sadd.s32 %s151, 1
      %p155 = scmp.eq.s32.totalorder %s33, 1
      %p156 = scmp.ne.s32.totalorder %s151, %s153
      %p157 = scmp.eq.s32.totalorder %s33, 0
      %p158 = por %p156, %p157
      %p159 = scmp.ne.s32.totalorder %s151, %s153
      %p160 = scmp.eq.s32.totalorder %s38, 1
      %p161 = por %p159, %p160
      %p162 = scmp.ne.s32.totalorder %s153, %s154
      %p163 = scmp.eq.s32.totalorder %s38, 0
      %p164 = por %p162, %p163
      %p165 = scmp.ne.s32.totalorder %s153, %s154
      %p166 = scmp.eq.s32.totalorder %s39, 1
      %p167 = por %p165, %p166
      %p169 = scmp.ne.s32.totalorder %s154, %s168
      %p170 = scmp.eq.s32.totalorder %s39, 0
      %p171 = por %p169, %p170
      %s173 = sadd.s32 %s172, 1
      %p176 = scmp.eq.s32.totalorder %s33, 1
      %p177 = scmp.ne.s32.totalorder %s172, %s174
      %p178 = scmp.eq.s32.totalorder %s33, 0
      %p179 = por %p177, %p178
      %p180 = scmp.ne.s32.totalorder %s172, %s174
      %p181 = scmp.eq.s32.totalorder %s38, 1
      %p182 = por %p180, %p181
      %p183 = scmp.ne.s32.totalorder %s174, %s175
      %p184 = scmp.eq.s32.totalorder %s38, 0
      %p185 = por %p183, %p184
      %p186 = scmp.ne.s32.totalorder %s174, %s175
      %p187 = scmp.eq.s32.totalorder %s39, 1
      %p188 = por %p186, %p187
      %p190 = scmp.ne.s32.totalorder %s175, %s189
      %p191 = scmp.eq.s32.totalorder %s39, 0
      %p192 = por %p190, %p191
      %s194 = sadd.s32 %s193, 1
      %p197 = scmp.eq.s32.totalorder %s33, 1
      %p198 = scmp.ne.s32.totalorder %s193, %s195
      %p199 = scmp.eq.s32.totalorder %s33, 0
      %p200 = por %p198, %p199
      %p201 = scmp.ne.s32.totalorder %s193, %s195
      %p202 = scmp.eq.s32.totalorder %s38, 1
      %p203 = por %p201, %p202
      %p204 = scmp.ne.s32.totalorder %s195, %s196
      %p205 = scmp.eq.s32.totalorder %s38, 0
      %p206 = por %p204, %p205
      %p207 = scmp.ne.s32.totalorder %s195, %s196
      %p208 = scmp.eq.s32.totalorder %s39, 1
      %p209 = por %p207, %p208
      %p211 = scmp.ne.s32.totalorder %s196, %s210
      %p212 = scmp.eq.s32.totalorder %s39, 0
      %p213 = por %p211, %p212
      %s215 = sadd.s32 %s214, 1
      %p218 = scmp.eq.s32.totalorder %s33, 1
      %p219 = scmp.ne.s32.totalorder %s214, %s216
      %p220 = scmp.eq.s32.totalorder %s33, 0
      %p221 = por %p219, %p220
      %p222 = scmp.ne.s32.totalorder %s214, %s216
      %p223 = scmp.eq.s32.totalorder %s38, 1
      %p224 = por %p222, %p223
      %p225 = scmp.ne.s32.totalorder %s216, %s217
      %p226 = scmp.eq.s32.totalorder %s38, 0
      %p227 = por %p225, %p226
      %p228 = scmp.ne.s32.totalorder %s216, %s217
      %p229 = scmp.eq.s32.totalorder %s39, 1
      %p230 = por %p228, %p229
      %p232 = scmp.ne.s32.totalorder %s217, %s231
      %p233 = scmp.eq.s32.totalorder %s39, 0
      %p234 = por %p232, %p233
      %s236 = sadd.s32 %s235, 1
      %p239 = scmp.eq.s32.totalorder %s33, 1
      %p240 = scmp.ne.s32.totalorder %s235, %s237
      %p241 = scmp.eq.s32.totalorder %s33, 0
      %p242 = por %p240, %p241
      %p243 = scmp.ne.s32.totalorder %s235, %s237
      %p244 = scmp.eq.s32.totalorder %s38, 1
      %p245 = por %p243, %p244
      %p246 = scmp.ne.s32.totalorder %s237, %s238
      %p247 = scmp.eq.s32.totalorder %s38, 0
      %p248 = por %p246, %p247
      %p249 = scmp.ne.s32.totalorder %s237, %s238
      %p250 = scmp.eq.s32.totalorder %s39, 1
      %p251 = por %p249, %p250
      %p253 = scmp.ne.s32.totalorder %s238, %s252
      %p254 = scmp.eq.s32.totalorder %s39, 0
      %p255 = por %p253, %p254
      %s257 = sadd.s32 %s256, 1
      %p260 = scmp.eq.s32.totalorder %s33, 1
      %p261 = scmp.ne.s32.totalorder %s256, %s258
      %p262 = scmp.eq.s32.totalorder %s33, 0
      %p263 = por %p261, %p262
      %p264 = scmp.ne.s32.totalorder %s256, %s258
      %p265 = scmp.eq.s32.totalorder %s38, 1
      %p266 = por %p264, %p265
      %p267 = scmp.ne.s32.totalorder %s258, %s259
      %p268 = scmp.eq.s32.totalorder %s38, 0
      %p269 = por %p267, %p268
      %p270 = scmp.ne.s32.totalorder %s258, %s259
      %p271 = scmp.eq.s32.totalorder %s39, 1
      %p272 = por %p270, %p271
      %p274 = scmp.ne.s32.totalorder %s259, %s273
      %p275 = scmp.eq.s32.totalorder %s39, 0
      %p276 = por %p274, %p275
      %s278 = sadd.s32 %s277, 1
      %p281 = scmp.eq.s32.totalorder %s33, 1
      %p282 = scmp.ne.s32.totalorder %s277, %s279
      %p283 = scmp.eq.s32.totalorder %s33, 0
      %p284 = por %p282, %p283
      %p285 = scmp.ne.s32.totalorder %s277, %s279
      %p286 = scmp.eq.s32.totalorder %s38, 1
      %p287 = por %p285, %p286
      %p288 = scmp.ne.s32.totalorder %s279, %s280
      %p289 = scmp.eq.s32.totalorder %s38, 0
      %p290 = por %p288, %p289
      %p291 = scmp.ne.s32.totalorder %s279, %s280
      %p292 = scmp.eq.s32.totalorder %s39, 1
      %p293 = por %p291, %p292
      %p295 = scmp.ne.s32.totalorder %s280, %s294
      %p296 = scmp.eq.s32.totalorder %s39, 0
      %p297 = por %p295, %p296
      %s299 = sadd.s32 %s298, 1
      %p302 = scmp.eq.s32.totalorder %s33, 1
      %p303 = scmp.ne.s32.totalorder %s298, %s300
      %p304 = scmp.eq.s32.totalorder %s33, 0
      %p305 = por %p303, %p304
      %p306 = scmp.ne.s32.totalorder %s298, %s300
      %p307 = scmp.eq.s32.totalorder %s38, 1
      %p308 = por %p306, %p307
      %p309 = scmp.ne.s32.totalorder %s300, %s301
      %p310 = scmp.eq.s32.totalorder %s38, 0
      %p311 = por %p309, %p310
      %p312 = scmp.ne.s32.totalorder %s300, %s301
      %p313 = scmp.eq.s32.totalorder %s39, 1
      %p314 = por %p312, %p313
      %p316 = scmp.ne.s32.totalorder %s301, %s315
      %p317 = scmp.eq.s32.totalorder %s39, 0
      %p318 = por %p316, %p317
      %s320 = sadd.s32 %s319, 1
      %p323 = scmp.eq.s32.totalorder %s33, 1
      %p324 = scmp.ne.s32.totalorder %s319, %s321
      %p325 = scmp.eq.s32.totalorder %s33, 0
      %p326 = por %p324, %p325
      %p327 = scmp.ne.s32.totalorder %s319, %s321
      %p328 = scmp.eq.s32.totalorder %s38, 1
      %p329 = por %p327, %p328
      %p330 = scmp.ne.s32.totalorder %s321, %s322
      %p331 = scmp.eq.s32.totalorder %s38, 0
      %p332 = por %p330, %p331
      %p333 = scmp.ne.s32.totalorder %s321, %s322
      %p334 = scmp.eq.s32.totalorder %s39, 1
      %p335 = por %p333, %p334
      %p337 = scmp.ne.s32.totalorder %s322, %s336
      %p338 = scmp.eq.s32.totalorder %s39, 0
      %p339 = por %p337, %p338
      %s341 = sadd.s32 %s340, 1
      %p344 = scmp.eq.s32.totalorder %s33, 1
      %p345 = scmp.ne.s32.totalorder %s340, %s342
      %p346 = scmp.eq.s32.totalorder %s33, 0
      %p347 = por %p345, %p346
      %p348 = scmp.ne.s32.totalorder %s340, %s342
      %p349 = scmp.eq.s32.totalorder %s38, 1
      %p350 = por %p348, %p349
      %p351 = scmp.ne.s32.totalorder %s342, %s343
      %p352 = scmp.eq.s32.totalorder %s38, 0
      %p353 = por %p351, %p352
      %p354 = scmp.ne.s32.totalorder %s342, %s343
      %p355 = scmp.eq.s32.totalorder %s39, 1
      %p356 = por %p354, %p355
      %p358 = scmp.ne.s32.totalorder %s343, %s357
      %p359 = scmp.eq.s32.totalorder %s39, 0
      %p360 = por %p358, %p359
      %s362 = sadd.s32 %s361, 1
      %p365 = scmp.eq.s32.totalorder %s33, 1
      %p366 = scmp.ne.s32.totalorder %s361, %s363
      %p367 = scmp.eq.s32.totalorder %s33, 0
      %p368 = por %p366, %p367
      %p369 = scmp.ne.s32.totalorder %s361, %s363
      %p370 = scmp.eq.s32.totalorder %s38, 1
      %p371 = por %p369, %p370
      %p372 = scmp.ne.s32.totalorder %s363, %s364
      %p373 = scmp.eq.s32.totalorder %s38, 0
      %p374 = por %p372, %p373
      %p375 = scmp.ne.s32.totalorder %s363, %s364
      %p376 = scmp.eq.s32.totalorder %s39, 1
      %p377 = por %p375, %p376
      %p379 = scmp.ne.s32.totalorder %s364, %s378
      %p380 = scmp.eq.s32.totalorder %s39, 0
      %p381 = por %p379, %p380
      %s383 = sadd.s32 %s382, 1
      %p386 = scmp.eq.s32.totalorder %s33, 1
      %p387 = scmp.ne.s32.totalorder %s382, %s384
      %p388 = scmp.eq.s32.totalorder %s33, 0
      %p389 = por %p387, %p388
      %p390 = scmp.ne.s32.totalorder %s382, %s384
      %p391 = scmp.eq.s32.totalorder %s38, 1
      %p392 = por %p390, %p391
      %p393 = scmp.ne.s32.totalorder %s384, %s385
      %p394 = scmp.eq.s32.totalorder %s38, 0
      %p395 = por %p393, %p394
      %p396 = scmp.ne.s32.totalorder %s384, %s385
      %p397 = scmp.eq.s32.totalorder %s39, 1
      %p398 = por %p396, %p397
      %p400 = scmp.ne.s32.totalorder %s385, %s399
      %p401 = scmp.eq.s32.totalorder %s39, 0
      %p402 = por %p400, %p401
      %s404 = sadd.s32 %s403, 1
      %p407 = scmp.eq.s32.totalorder %s33, 1
      %p408 = scmp.ne.s32.totalorder %s403, %s405
      %p409 = scmp.eq.s32.totalorder %s33, 0
      %p410 = por %p408, %p409
      %p411 = scmp.ne.s32.totalorder %s403, %s405
      %p412 = scmp.eq.s32.totalorder %s38, 1
      %p413 = por %p411, %p412
      %p414 = scmp.ne.s32.totalorder %s405, %s406
      %p415 = scmp.eq.s32.totalorder %s38, 0
      %p416 = por %p414, %p415
      %p417 = scmp.ne.s32.totalorder %s405, %s406
      %p418 = scmp.eq.s32.totalorder %s39, 1
      %p419 = por %p417, %p418
      %p421 = scmp.ne.s32.totalorder %s406, %s420
      %p422 = scmp.eq.s32.totalorder %s39, 0
      %p423 = por %p421, %p422
      %s425 = sadd.s32 %s424, 1
      %p428 = scmp.eq.s32.totalorder %s33, 1
      %p429 = scmp.ne.s32.totalorder %s424, %s426
      %p430 = scmp.eq.s32.totalorder %s33, 0
      %p431 = por %p429, %p430
      %p432 = scmp.ne.s32.totalorder %s424, %s426
      %p433 = scmp.eq.s32.totalorder %s38, 1
      %p434 = por %p432, %p433
      %p435 = scmp.ne.s32.totalorder %s426, %s427
      %p436 = scmp.eq.s32.totalorder %s38, 0
      %p437 = por %p435, %p436
      %p438 = scmp.ne.s32.totalorder %s426, %s427
      %p439 = scmp.eq.s32.totalorder %s39, 1
      %p440 = por %p438, %p439
      %p442 = scmp.ne.s32.totalorder %s427, %s441
      %p443 = scmp.eq.s32.totalorder %s39, 0
      %p444 = por %p442, %p443
      %s445 = ssub.s32 %s33, %s40
      %p446 = scmp.eq.s32.totalorder %s445, 0
      %s448 = sadd.s32 %s447, 1
      %s449 = scalar_select %p446, %s447, %s448
      %p452 = pneg %p446
      %p453 = scmp.eq.s32.totalorder %s33, 1
      %p454 = por %p452, %p453
      %p455 = scmp.ne.s32.totalorder %s447, %s450
      %p456 = scmp.eq.s32.totalorder %s33, 0
      %p457 = por %p455, %p456
      %p458 = scmp.ne.s32.totalorder %s447, %s450
      %p459 = scmp.eq.s32.totalorder %s38, 1
      %p460 = por %p458, %p459
      %p461 = scmp.ne.s32.totalorder %s450, %s451
      %p462 = scmp.eq.s32.totalorder %s38, 0
      %p463 = por %p461, %p462
      %p464 = scmp.ne.s32.totalorder %s450, %s451
      %p465 = scmp.eq.s32.totalorder %s39, 1
      %p466 = por %p464, %p465
      %p468 = scmp.ne.s32.totalorder %s451, %s467
      %p469 = scmp.eq.s32.totalorder %s39, 0
      %p470 = por %p468, %p469
      %s471 = ssub.s32 %s33, %s40
      %p472 = scmp.eq.s32.totalorder %s471, 0
      %s474 = sadd.s32 %s473, 1
      %s475 = scalar_select %p472, %s473, %s474
      %p478 = pneg %p472
      %p479 = scmp.eq.s32.totalorder %s33, 1
      %p480 = por %p478, %p479
      %p481 = scmp.ne.s32.totalorder %s473, %s476
      %p482 = scmp.eq.s32.totalorder %s33, 0
      %p483 = por %p481, %p482
      %p484 = scmp.ne.s32.totalorder %s473, %s476
      %p485 = scmp.eq.s32.totalorder %s38, 1
      %p486 = por %p484, %p485
      %p487 = scmp.ne.s32.totalorder %s476, %s477
      %p488 = scmp.eq.s32.totalorder %s38, 0
      %p489 = por %p487, %p488
      %p490 = scmp.ne.s32.totalorder %s476, %s477
      %p491 = scmp.eq.s32.totalorder %s39, 1
      %p492 = por %p490, %p491
      %p494 = scmp.ne.s32.totalorder %s477, %s493
      %p495 = scmp.eq.s32.totalorder %s39, 0
      %p496 = por %p494, %p495
      %p497 = scmp.le.s32.totalorder 1, %s33
      %p498 = scmp.lt.s32.totalorder %s33, 3
      %p499 = pnand %p497, %p498
      %p500 = pneg %p499
      // Predicated region
      $region9: #{encodec_wrapper_forward.1} parent=5 // pred_check
        _
      $region10: #{encodec_wrapper_forward.1} parent=5 // pred_check_branch
        %502 = sbr.rel (%p499) target = $region12
      $region11: #{encodec_wrapper_forward.1} parent=5 // pred_region
        %s503 = ssub.s32 %s33, 1
        // Predicated region
        $region13: #{encodec_wrapper_forward.1} parent=11 // pred_check
          %p504 = pneg %p80
        $region14: #{encodec_wrapper_forward.1} parent=11 // pred_check_branch
          %506 = sbr.rel (%p504) target = $region16
        $region15: #{encodec_wrapper_forward.1} parent=11 // pred_region
          _
        $region16: #{encodec_wrapper_forward.1} parent=11 // pred_fallthru
          _
        // Predicated region
        $region17: #{encodec_wrapper_forward.1} parent=11 // pred_check
          %p507 = pneg %p101
        $region18: #{encodec_wrapper_forward.1} parent=11 // pred_check_branch
          %509 = sbr.rel (%p507) target = $region20
        $region19: #{encodec_wrapper_forward.1} parent=11 // pred_region
          _
        $region20: #{encodec_wrapper_forward.1} parent=11 // pred_fallthru
          _
        // Predicated region
        $region21: #{encodec_wrapper_forward.1} parent=11 // pred_check
          %p510 = pneg %p122
        $region22: #{encodec_wrapper_forward.1} parent=11 // pred_check_branch
          %512 = sbr.rel (%p510) target = $region24
        $region23: #{encodec_wrapper_forward.1} parent=11 // pred_region
          _
        $region24: #{encodec_wrapper_forward.1} parent=11 // pred_fallthru
          _
        // Predicated region
        $region25: #{encodec_wrapper_forward.1} parent=11 // pred_check
          %p513 = pneg %p143
        $region26: #{encodec_wrapper_forward.1} parent=11 // pred_check_branch
          %515 = sbr.rel (%p513) target = $region28
        $region27: #{encodec_wrapper_forward.1} parent=11 // pred_region
          _
        $region28: #{encodec_wrapper_forward.1} parent=11 // pred_fallthru
          _
        // Predicated region
        $region29: #{encodec_wrapper_forward.1} parent=11 // pred_check
          %p516 = pneg %p164
        $region30: #{encodec_wrapper_forward.1} parent=11 // pred_check_branch
          %518 = sbr.rel (%p516) target = $region32
        $region31: #{encodec_wrapper_forward.1} parent=11 // pred_region
          _
        $region32: #{encodec_wrapper_forward.1} parent=11 // pred_fallthru
          _
        // Predicated region
        $region33: #{encodec_wrapper_forward.1} parent=11 // pred_check
          %p519 = pneg %p185
        $region34: #{encodec_wrapper_forward.1} parent=11 // pred_check_branch
          %521 = sbr.rel (%p519) target = $region36
        $region35: #{encodec_wrapper_forward.1} parent=11 // pred_region
          _
        $region36: #{encodec_wrapper_forward.1} parent=11 // pred_fallthru
          _
        // Predicated region
        $region37: #{encodec_wrapper_forward.1} parent=11 // pred_check
          %p522 = pneg %p206
        $region38: #{encodec_wrapper_forward.1} parent=11 // pred_check_branch
          %524 = sbr.rel (%p522) target = $region40
        $region39: #{encodec_wrapper_forward.1} parent=11 // pred_region
          _
        $region40: #{encodec_wrapper_forward.1} parent=11 // pred_fallthru
          _
        // Predicated region
        $region41: #{encodec_wrapper_forward.1} parent=11 // pred_check
          %p525 = pneg %p227
        $region42: #{encodec_wrapper_forward.1} parent=11 // pred_check_branch
          %527 = sbr.rel (%p525) target = $region44
        $region43: #{encodec_wrapper_forward.1} parent=11 // pred_region
          _
        $region44: #{encodec_wrapper_forward.1} parent=11 // pred_fallthru
          _
        // Predicated region
        $region45: #{encodec_wrapper_forward.1} parent=11 // pred_check
          %p528 = pneg %p248
        $region46: #{encodec_wrapper_forward.1} parent=11 // pred_check_branch
          %530 = sbr.rel (%p528) target = $region48
        $region47: #{encodec_wrapper_forward.1} parent=11 // pred_region
          _
        $region48: #{encodec_wrapper_forward.1} parent=11 // pred_fallthru
          _
        // Predicated region
        $region49: #{encodec_wrapper_forward.1} parent=11 // pred_check
          %p531 = pneg %p269
        $region50: #{encodec_wrapper_forward.1} parent=11 // pred_check_branch
          %533 = sbr.rel (%p531) target = $region52
        $region51: #{encodec_wrapper_forward.1} parent=11 // pred_region
          _
        $region52: #{encodec_wrapper_forward.1} parent=11 // pred_fallthru
          _
        // Predicated region
        $region53: #{encodec_wrapper_forward.1} parent=11 // pred_check
          %p534 = pneg %p290
        $region54: #{encodec_wrapper_forward.1} parent=11 // pred_check_branch
          %536 = sbr.rel (%p534) target = $region56
        $region55: #{encodec_wrapper_forward.1} parent=11 // pred_region
          _
        $region56: #{encodec_wrapper_forward.1} parent=11 // pred_fallthru
          _
        // Predicated region
        $region57: #{encodec_wrapper_forward.1} parent=11 // pred_check
          %p537 = pneg %p311
        $region58: #{encodec_wrapper_forward.1} parent=11 // pred_check_branch
          %539 = sbr.rel (%p537) target = $region60
        $region59: #{encodec_wrapper_forward.1} parent=11 // pred_region
          _
        $region60: #{encodec_wrapper_forward.1} parent=11 // pred_fallthru
          _
        // Predicated region
        $region61: #{encodec_wrapper_forward.1} parent=11 // pred_check
          %p540 = pneg %p332
        $region62: #{encodec_wrapper_forward.1} parent=11 // pred_check_branch
          %542 = sbr.rel (%p540) target = $region64
        $region63: #{encodec_wrapper_forward.1} parent=11 // pred_region
          _
        $region64: #{encodec_wrapper_forward.1} parent=11 // pred_fallthru
          _
        // Predicated region
        $region65: #{encodec_wrapper_forward.1} parent=11 // pred_check
          %p543 = pneg %p353
        $region66: #{encodec_wrapper_forward.1} parent=11 // pred_check_branch
          %545 = sbr.rel (%p543) target = $region68
        $region67: #{encodec_wrapper_forward.1} parent=11 // pred_region
          _
        $region68: #{encodec_wrapper_forward.1} parent=11 // pred_fallthru
          _
        // Predicated region
        $region69: #{encodec_wrapper_forward.1} parent=11 // pred_check
          %p546 = pneg %p374
        $region70: #{encodec_wrapper_forward.1} parent=11 // pred_check_branch
          %548 = sbr.rel (%p546) target = $region72
        $region71: #{encodec_wrapper_forward.1} parent=11 // pred_region
          _
        $region72: #{encodec_wrapper_forward.1} parent=11 // pred_fallthru
          _
        // Predicated region
        $region73: #{encodec_wrapper_forward.1} parent=11 // pred_check
          %p549 = pneg %p395
        $region74: #{encodec_wrapper_forward.1} parent=11 // pred_check_branch
          %551 = sbr.rel (%p549) target = $region76
        $region75: #{encodec_wrapper_forward.1} parent=11 // pred_region
          _
        $region76: #{encodec_wrapper_forward.1} parent=11 // pred_fallthru
          _
        // Predicated region
        $region77: #{encodec_wrapper_forward.1} parent=11 // pred_check
          %p552 = pneg %p416
        $region78: #{encodec_wrapper_forward.1} parent=11 // pred_check_branch
          %554 = sbr.rel (%p552) target = $region80
        $region79: #{encodec_wrapper_forward.1} parent=11 // pred_region
          _
        $region80: #{encodec_wrapper_forward.1} parent=11 // pred_fallthru
          _
        // Predicated region
        $region81: #{encodec_wrapper_forward.1} parent=11 // pred_check
          %p555 = pneg %p437
        $region82: #{encodec_wrapper_forward.1} parent=11 // pred_check_branch
          %557 = sbr.rel (%p555) target = $region84
        $region83: #{encodec_wrapper_forward.1} parent=11 // pred_region
          _
        $region84: #{encodec_wrapper_forward.1} parent=11 // pred_fallthru
          _
      $region12: #{encodec_wrapper_forward.1} parent=5 // pred_fallthru
        _
      %p558 = scmp.lt.s32.totalorder %s33, 2
      // Predicated region
      $region85: #{encodec_wrapper_forward.1} parent=5 // pred_check
        %p559 = pneg %p558
      $region86: #{encodec_wrapper_forward.1} parent=5 // pred_check_branch
        %561 = sbr.rel (%p559) target = $region88
      $region87: #{encodec_wrapper_forward.1} parent=5 // pred_region
        // Predicated region
        $region89: #{encodec_wrapper_forward.1} parent=87 // pred_check
          %p562 = pneg %p53
        $region90: #{encodec_wrapper_forward.1} parent=87 // pred_check_branch
          %564 = sbr.rel (%p562) target = $region92
        $region91: #{encodec_wrapper_forward.1} parent=87 // pred_region
          %p565 = scmp.lt.s32.totalorder %s33, 1
          %s566 = scalar_select %p565, %s33, 1
          %s567 = smul.addr %s566, 2
          %s568 = scalar_lea.vmem %s0, %s567
        $region92: #{encodec_wrapper_forward.1} parent=87 // pred_fallthru
          _
      $region88: #{encodec_wrapper_forward.1} parent=5 // pred_fallthru
        _
      %p569 = scmp.le.s32.totalorder 1, %s33
      %p570 = scmp.lt.s32.totalorder %s33, 3
      %p571 = pnand %p569, %p570
      %p572 = pneg %p571
      // Predicated region
      $region93: #{encodec_wrapper_forward.1} parent=5 // pred_check
        _
      $region94: #{encodec_wrapper_forward.1} parent=5 // pred_check_branch
        %574 = sbr.rel (%p571) target = $region96
      $region95: #{encodec_wrapper_forward.1} parent=5 // pred_region
        %s575 = ssub.s32 %s33, 1
        %p576 = scmp.lt.s32.totalorder %s38, 1
        %s577 = scalar_select %p576, %s38, 1
        %s578 = smul.addr %s577, 2
        %s579 = scalar_lea.vmem %s0, %s578
        %p580 = pneg %p59
        %p581 = pneg %p56
        %p582 = pneg %p80
        %p583 = pneg %p77
        %p584 = pneg %p101
        %p585 = pneg %p98
        %p586 = pneg %p122
        %p587 = pneg %p119
        %p588 = pneg %p143
        %p589 = pneg %p140
        %p590 = pneg %p164
        %p591 = pneg %p161
        %p592 = pneg %p185
        %p593 = pneg %p182
        %p594 = pneg %p206
        %p595 = pneg %p203
        %p596 = pneg %p227
        %p597 = pneg %p224
        %p598 = pneg %p248
        %p599 = pneg %p245
        %p600 = pneg %p269
        %p601 = pneg %p266
        %p602 = pneg %p290
        %p603 = pneg %p287
        %p604 = pneg %p311
        %p605 = pneg %p308
        %p606 = pneg %p332
        %p607 = pneg %p329
        %p608 = pneg %p353
        %p609 = pneg %p350
        %p610 = pneg %p374
        %p611 = pneg %p371
        %p612 = pneg %p395
        %p613 = pneg %p392
        %p614 = pneg %p416
        %p615 = pneg %p413
        %p616 = pneg %p437
        %p617 = pneg %p434
        %p618 = pneg %p463
        %p619 = pneg %p460
        %s620 = sand.u32 %s450, 1
        %s621 = scalar_lea.sflag [#allocation3], %s620
        %s622 = sand.u32 %s450, 1
        %s623 = smul.addr %s622, 4
        %s624 = scalar_lea.vmem [#allocation2], %s623
        %p625 = pneg %p489
        %p626 = pneg %p486
        %s627 = sand.u32 %s476, 1
        %s628 = scalar_lea.sflag [#allocation5], %s627
        %s629 = sand.u32 %s476, 1
        %s630 = smul.addr %s629, 4
        %s631 = scalar_lea.vmem [#allocation4], %s630
        %p632 = scmp.lt.s32.totalorder %s38, 1
        %s633 = scalar_select %p632, %s38, 1
        %s634 = smul.addr %s633, 2
        %s635 = scalar_lea.vmem %s0, %s634
        %v637 = vld [vmem:[%s635] sm:$0x3]
        %v638 = vlaneseq
        %v639 = vshrl.u32 %v638, 7
        %v640 = vadd.s32 %v639, 8
        %v641 = vadd.s32 %v639, 16
        %v642 = vadd.s32 %v639, 24
        %v643 = vadd.s32 %v639, 32
        %v644 = vadd.s32 %v639, 40
        %v645 = vadd.s32 %v639, 48
        %v646 = vadd.s32 %v639, 56
        %v647 = vadd.s32 %v639, 64
        %v648 = vadd.s32 %v639, 72
        %v649 = vadd.s32 %v639, 80
        %v650 = vadd.s32 %v639, 88
        %v651 = vadd.s32 %v639, 96
        %v652 = vadd.s32 %v639, 104
        %v653 = vadd.s32 %v639, 112
        %v654 = vadd.s32 %v639, 120
        %v655 = vadd.s32 %v639, 128
        %v656 = vadd.s32 %v639, 136
        %v657 = vadd.s32 %v639, 144
        %v658 = vadd.s32 %v639, 152
        %v659 = vlaneseq
        %v660 = vand.u32 %v659, 127
        %v661 = vadd.s32 %v660, 128
        %v662 = vsub.s32 %v639, %v660
        %v663 = vsub.s32 %v639, %v661
        %v664 = vsub.s32 %v640, %v660
        %v665 = vsub.s32 %v640, %v661
        %v666 = vsub.s32 %v641, %v660
        %v667 = vsub.s32 %v641, %v661
        %v668 = vsub.s32 %v642, %v660
        %v669 = vsub.s32 %v642, %v661
        %v670 = vsub.s32 %v643, %v660
        %v671 = vsub.s32 %v643, %v661
        %v672 = vsub.s32 %v644, %v660
        %v673 = vsub.s32 %v644, %v661
        %v674 = vsub.s32 %v645, %v660
        %v675 = vsub.s32 %v645, %v661
        %v676 = vsub.s32 %v646, %v660
        %v677 = vsub.s32 %v646, %v661
        %v678 = vsub.s32 %v647, %v660
        %v679 = vsub.s32 %v647, %v661
        %v680 = vsub.s32 %v648, %v660
        %v681 = vsub.s32 %v648, %v661
        %v682 = vsub.s32 %v649, %v660
        %v683 = vsub.s32 %v649, %v661
        %v684 = vsub.s32 %v650, %v660
        %v685 = vsub.s32 %v650, %v661
        %v686 = vsub.s32 %v651, %v660
        %v687 = vsub.s32 %v651, %v661
        %v688 = vsub.s32 %v652, %v660
        %v689 = vsub.s32 %v652, %v661
        %v690 = vsub.s32 %v653, %v660
        %v691 = vsub.s32 %v653, %v661
        %v692 = vsub.s32 %v654, %v660
        %v693 = vsub.s32 %v654, %v661
        %v694 = vsub.s32 %v655, %v660
        %v695 = vsub.s32 %v655, %v661
        %v696 = vsub.s32 %v656, %v660
        %v697 = vsub.s32 %v656, %v661
        %v698 = vsub.s32 %v657, %v660
        %v699 = vsub.s32 %v657, %v661
        %v700 = vsub.s32 %v658, %v660
        %v701 = vsub.s32 %v658, %v661
        %vm702 = vcmp.eq.s32.totalorder %v662, 4294967290
        %vm703 = vcmp.eq.s32.totalorder %v663, 4294967290
        %vm704 = vcmp.eq.s32.totalorder %v664, 4294967290
        %vm705 = vcmp.eq.s32.totalorder %v665, 4294967290
        %vm706 = vcmp.eq.s32.totalorder %v666, 4294967290
        %vm707 = vcmp.eq.s32.totalorder %v667, 4294967290
        %vm708 = vcmp.eq.s32.totalorder %v668, 4294967290
        %vm709 = vcmp.eq.s32.totalorder %v669, 4294967290
        %vm710 = vcmp.eq.s32.totalorder %v670, 4294967290
        %vm711 = vcmp.eq.s32.totalorder %v671, 4294967290
        %vm712 = vcmp.eq.s32.totalorder %v672, 4294967290
        %vm713 = vcmp.eq.s32.totalorder %v673, 4294967290
        %vm714 = vcmp.eq.s32.totalorder %v674, 4294967290
        %vm715 = vcmp.eq.s32.totalorder %v675, 4294967290
        %vm716 = vcmp.eq.s32.totalorder %v676, 4294967290
        %vm717 = vcmp.eq.s32.totalorder %v677, 4294967290
        %vm718 = vcmp.eq.s32.totalorder %v678, 4294967290
        %vm719 = vcmp.eq.s32.totalorder %v679, 4294967290
        %vm720 = vcmp.eq.s32.totalorder %v680, 4294967290
        %vm721 = vcmp.eq.s32.totalorder %v681, 4294967290
        %vm722 = vcmp.eq.s32.totalorder %v682, 4294967290
        %vm723 = vcmp.eq.s32.totalorder %v683, 4294967290
        %vm724 = vcmp.eq.s32.totalorder %v684, 4294967290
        %vm725 = vcmp.eq.s32.totalorder %v685, 4294967290
        %vm726 = vcmp.eq.s32.totalorder %v686, 4294967290
        %vm727 = vcmp.eq.s32.totalorder %v687, 4294967290
        %vm728 = vcmp.eq.s32.totalorder %v688, 4294967290
        %vm729 = vcmp.eq.s32.totalorder %v689, 4294967290
        %vm730 = vcmp.eq.s32.totalorder %v690, 4294967290
        %vm731 = vcmp.eq.s32.totalorder %v691, 4294967290
        %vm732 = vcmp.eq.s32.totalorder %v692, 4294967290
        %vm733 = vcmp.eq.s32.totalorder %v693, 4294967290
        %vm734 = vcmp.eq.s32.totalorder %v694, 4294967290
        %vm735 = vcmp.eq.s32.totalorder %v695, 4294967290
        %vm736 = vcmp.eq.s32.totalorder %v696, 4294967290
        %vm737 = vcmp.eq.s32.totalorder %v697, 4294967290
        %vm738 = vcmp.eq.s32.totalorder %v698, 4294967290
        %vm739 = vcmp.eq.s32.totalorder %v699, 4294967290
        %vm740 = vcmp.eq.s32.totalorder %v700, 4294967290
        %vm741 = vcmp.eq.s32.totalorder %v701, 4294967290
        %v742 = vsel %vm702, 1, 0
        %v743 = vsel %vm703, 1, 0
        %v744 = vsel %vm704, 1, 0
        %v745 = vsel %vm705, 1, 0
        %v746 = vsel %vm706, 1, 0
        %v747 = vsel %vm707, 1, 0
        %v748 = vsel %vm708, 1, 0
        %v749 = vsel %vm709, 1, 0
        %v750 = vsel %vm710, 1, 0
        %v751 = vsel %vm711, 1, 0
        %v752 = vsel %vm712, 1, 0
        %v753 = vsel %vm713, 1, 0
        %v754 = vsel %vm714, 1, 0
        %v755 = vsel %vm715, 1, 0
        %v756 = vsel %vm716, 1, 0
        %v757 = vsel %vm717, 1, 0
        %v758 = vsel %vm718, 1, 0
        %v759 = vsel %vm719, 1, 0
        %v760 = vsel %vm720, 1, 0
        %v761 = vsel %vm721, 1, 0
        %v762 = vsel %vm722, 1, 0
        %v763 = vsel %vm723, 1, 0
        %v764 = vsel %vm724, 1, 0
        %v765 = vsel %vm725, 1, 0
        %v766 = vsel %vm726, 1, 0
        %v767 = vsel %vm727, 1, 0
        %v768 = vsel %vm728, 1, 0
        %v769 = vsel %vm729, 1, 0
        %v770 = vsel %vm730, 1, 0
        %v771 = vsel %vm731, 1, 0
        %v772 = vsel %vm732, 1, 0
        %v773 = vsel %vm733, 1, 0
        %v774 = vsel %vm734, 1, 0
        %v775 = vsel %vm735, 1, 0
        %v776 = vsel %vm736, 1, 0
        %v777 = vsel %vm737, 1, 0
        %v778 = vsel %vm738, 1, 0
        %v779 = vsel %vm739, 1, 0
        %v780 = vsel %vm740, 1, 0
        %v781 = vsel %vm741, 1, 0
        %v782 = vcvt.s32.f32 %v742
        %v783 = vcvt.s32.f32 %v743
        %v784 = vcvt.s32.f32 %v744
        %v785 = vcvt.s32.f32 %v745
        %v786 = vcvt.s32.f32 %v746
        %v787 = vcvt.s32.f32 %v747
        %v788 = vcvt.s32.f32 %v748
        %v789 = vcvt.s32.f32 %v749
        %v790 = vcvt.s32.f32 %v750
        %v791 = vcvt.s32.f32 %v751
        %v792 = vcvt.s32.f32 %v752
        %v793 = vcvt.s32.f32 %v753
        %v794 = vcvt.s32.f32 %v754
        %v795 = vcvt.s32.f32 %v755
        %v796 = vcvt.s32.f32 %v756
        %v797 = vcvt.s32.f32 %v757
        %v798 = vcvt.s32.f32 %v758
        %v799 = vcvt.s32.f32 %v759
        %v800 = vcvt.s32.f32 %v760
        %v801 = vcvt.s32.f32 %v761
        %v802 = vcvt.s32.f32 %v762
        %v803 = vcvt.s32.f32 %v763
        %v804 = vcvt.s32.f32 %v764
        %v805 = vcvt.s32.f32 %v765
        %v806 = vcvt.s32.f32 %v766
        %v807 = vcvt.s32.f32 %v767
        %v808 = vcvt.s32.f32 %v768
        %v809 = vcvt.s32.f32 %v769
        %v810 = vcvt.s32.f32 %v770
        %v811 = vcvt.s32.f32 %v771
        %v812 = vcvt.s32.f32 %v772
        %v813 = vcvt.s32.f32 %v773
        %v814 = vcvt.s32.f32 %v774
        %v815 = vcvt.s32.f32 %v775
        %v816 = vcvt.s32.f32 %v776
        %v817 = vcvt.s32.f32 %v777
        %v818 = vcvt.s32.f32 %v778
        %v819 = vcvt.s32.f32 %v779
        %v820 = vcvt.s32.f32 %v780
        %v821 = vcvt.s32.f32 %v781
        %v823 = vperm.slane %v637, 0
        %v824 = vperm.slane %v637, 1
        %vm826 = vcmask 261120
        %v827 = vsel %vm826, %v824, 0
        %829 = vmatpush.msra.mxu0 %v812
        %830 = vmatpush.msra.mxu0 %v810
        %831 = vmatpush.msra.mxu0 %v808
        %832 = vmatpush.msra.mxu0 %v806
        %833 = vmatpush.msra.mxu0 %v804
        %834 = vmatpush.msra.mxu0 %v802
        %835 = vmatpush.msra.mxu0 %v800
        %836 = vmatpush.msra.mxu0 %v798
        %837 = vmatpush.msra.mxu0 %v796
        %838 = vmatpush.msra.mxu0 %v794
        %839 = vmatpush.msra.mxu0 %v792
        %840 = vmatpush.msra.mxu0 %v790
        %841 = vmatpush.msra.mxu0 %v788
        %842 = vmatpush.msra.mxu0 %v786
        %843 = vmatpush.msra.mxu0 %v784
        %844 = vmatpush.msra.mxu0 %v782
        %845 = vmatmul.f32.gmra.mxu0 %v823
        %v846 = vpop.f32.mrf.mxu0
        %v847 = vadd.f32 0.0, %v846
        %848 = vdwg.mxu0
        %849 = vmatpush.msra.mxu0 0.0
        %850 = vmatpush.msra.mxu0 0.0
        %851 = vmatpush.msra.mxu0 0.0
        %852 = vmatpush.msra.mxu0 0.0
        %853 = vmatpush.msra.mxu0 0.0
        %854 = vmatpush.msra.mxu0 0.0
        %855 = vmatpush.msra.mxu0 0.0
        %856 = vmatpush.msra.mxu0 0.0
        %857 = vmatpush.msra.mxu0 0.0
        %858 = vmatpush.msra.mxu0 0.0
        %859 = vmatpush.msra.mxu0 0.0
        %860 = vmatpush.msra.mxu0 0.0
        %861 = vmatpush.msra.mxu0 %v820
        %862 = vmatpush.msra.mxu0 %v818
        %863 = vmatpush.msra.mxu0 %v816
        %864 = vmatpush.msra.mxu0 %v814
        %865 = vmatmul.f32.gmra.mxu0 %v827
        %v866 = vpop.f32.mrf.mxu0
        %v867 = vadd.f32 %v847, %v866
        %868 = vdwg.mxu0
        %869 = vmatpush.msra.mxu0 %v813
        %870 = vmatpush.msra.mxu0 %v811
        %871 = vmatpush.msra.mxu0 %v809
        %872 = vmatpush.msra.mxu0 %v807
        %873 = vmatpush.msra.mxu0 %v805
        %874 = vmatpush.msra.mxu0 %v803
        %875 = vmatpush.msra.mxu0 %v801
        %876 = vmatpush.msra.mxu0 %v799
        %877 = vmatpush.msra.mxu0 %v797
        %878 = vmatpush.msra.mxu0 %v795
        %879 = vmatpush.msra.mxu0 %v793
        %880 = vmatpush.msra.mxu0 %v791
        %881 = vmatpush.msra.mxu0 %v789
        %882 = vmatpush.msra.mxu0 %v787
        %883 = vmatpush.msra.mxu0 %v785
        %884 = vmatpush.msra.mxu0 %v783
        %885 = vmatmul.f32.gmra.mxu0 %v823
        %v886 = vpop.f32.mrf.mxu0
        %v887 = vadd.f32 0.0, %v886
        %888 = vdwg.mxu0
        %889 = vmatpush.msra.mxu0 0.0
        %890 = vmatpush.msra.mxu0 0.0
        %891 = vmatpush.msra.mxu0 0.0
        %892 = vmatpush.msra.mxu0 0.0
        %893 = vmatpush.msra.mxu0 0.0
        %894 = vmatpush.msra.mxu0 0.0
        %895 = vmatpush.msra.mxu0 0.0
        %896 = vmatpush.msra.mxu0 0.0
        %897 = vmatpush.msra.mxu0 0.0
        %898 = vmatpush.msra.mxu0 0.0
        %899 = vmatpush.msra.mxu0 0.0
        %900 = vmatpush.msra.mxu0 0.0
        %901 = vmatpush.msra.mxu0 %v821
        %902 = vmatpush.msra.mxu0 %v819
        %903 = vmatpush.msra.mxu0 %v817
        %904 = vmatpush.msra.mxu0 %v815
        %905 = vmatmul.f32.gmra.mxu0 %v827
        %v906 = vpop.f32.mrf.mxu0
        %v907 = vadd.f32 %v887, %v906
        %908 = vdwg.mxu0
        %v909 = vld [vmem:[%s1] sm:$0xf]
        %v910 = vunpack.c.l.bf16 %v909
        %912 = vset.pattern.permute.xlu0 0
        %913 = vperm.xlu0 %912, %v910
        %v914 = vpop.permute.xlu0 %913
        %v916 = vperm.slane %v867, 0
        %v917 = vperm.slane %v907, 0
        %v918 = vmul.f32 %v914, %v916
        %v919 = vmul.f32 %v914, %v917
        %vm920 = vcmp.eq.s32.totalorder %v662, 4294967291
        %vm921 = vcmp.eq.s32.totalorder %v663, 4294967291
        %vm922 = vcmp.eq.s32.totalorder %v664, 4294967291
        %vm923 = vcmp.eq.s32.totalorder %v665, 4294967291
        %vm924 = vcmp.eq.s32.totalorder %v666, 4294967291
        %vm925 = vcmp.eq.s32.totalorder %v667, 4294967291
        %vm926 = vcmp.eq.s32.totalorder %v668, 4294967291
        %vm927 = vcmp.eq.s32.totalorder %v669, 4294967291
        %vm928 = vcmp.eq.s32.totalorder %v670, 4294967291
        %vm929 = vcmp.eq.s32.totalorder %v671, 4294967291
        %vm930 = vcmp.eq.s32.totalorder %v672, 4294967291
        %vm931 = vcmp.eq.s32.totalorder %v673, 4294967291
        %vm932 = vcmp.eq.s32.totalorder %v674, 4294967291
        %vm933 = vcmp.eq.s32.totalorder %v675, 4294967291
        %vm934 = vcmp.eq.s32.totalorder %v676, 4294967291
        %vm935 = vcmp.eq.s32.totalorder %v677, 4294967291
        %vm936 = vcmp.eq.s32.totalorder %v678, 4294967291
        %vm937 = vcmp.eq.s32.totalorder %v679, 4294967291
        %vm938 = vcmp.eq.s32.totalorder %v680, 4294967291
        %vm939 = vcmp.eq.s32.totalorder %v681, 4294967291
        %vm940 = vcmp.eq.s32.totalorder %v682, 4294967291
        %vm941 = vcmp.eq.s32.totalorder %v683, 4294967291
        %vm942 = vcmp.eq.s32.totalorder %v684, 4294967291
        %vm943 = vcmp.eq.s32.totalorder %v685, 4294967291
        %vm944 = vcmp.eq.s32.totalorder %v686, 4294967291
        %vm945 = vcmp.eq.s32.totalorder %v687, 4294967291
        %vm946 = vcmp.eq.s32.totalorder %v688, 4294967291
        %vm947 = vcmp.eq.s32.totalorder %v689, 4294967291
        %vm948 = vcmp.eq.s32.totalorder %v690, 4294967291
        %vm949 = vcmp.eq.s32.totalorder %v691, 4294967291
        %vm950 = vcmp.eq.s32.totalorder %v692, 4294967291
        %vm951 = vcmp.eq.s32.totalorder %v693, 4294967291
        %vm952 = vcmp.eq.s32.totalorder %v694, 4294967291
        %vm953 = vcmp.eq.s32.totalorder %v695, 4294967291
        %vm954 = vcmp.eq.s32.totalorder %v696, 4294967291
        %vm955 = vcmp.eq.s32.totalorder %v697, 4294967291
        %vm956 = vcmp.eq.s32.totalorder %v698, 4294967291
        %vm957 = vcmp.eq.s32.totalorder %v699, 4294967291
        %vm958 = vcmp.eq.s32.totalorder %v700, 4294967291
        %vm959 = vcmp.eq.s32.totalorder %v701, 4294967291
        %v960 = vsel %vm920, 1, 0
        %v961 = vsel %vm921, 1, 0
        %v962 = vsel %vm922, 1, 0
        %v963 = vsel %vm923, 1, 0
        %v964 = vsel %vm924, 1, 0
        %v965 = vsel %vm925, 1, 0
        %v966 = vsel %vm926, 1, 0
        %v967 = vsel %vm927, 1, 0
        %v968 = vsel %vm928, 1, 0
        %v969 = vsel %vm929, 1, 0
        %v970 = vsel %vm930, 1, 0
        %v971 = vsel %vm931, 1, 0
        %v972 = vsel %vm932, 1, 0
        %v973 = vsel %vm933, 1, 0
        %v974 = vsel %vm934, 1, 0
        %v975 = vsel %vm935, 1, 0
        %v976 = vsel %vm936, 1, 0
        %v977 = vsel %vm937, 1, 0
        %v978 = vsel %vm938, 1, 0
        %v979 = vsel %vm939, 1, 0
        %v980 = vsel %vm940, 1, 0
        %v981 = vsel %vm941, 1, 0
        %v982 = vsel %vm942, 1, 0
        %v983 = vsel %vm943, 1, 0
        %v984 = vsel %vm944, 1, 0
        %v985 = vsel %vm945, 1, 0
        %v986 = vsel %vm946, 1, 0
        %v987 = vsel %vm947, 1, 0
        %v988 = vsel %vm948, 1, 0
        %v989 = vsel %vm949, 1, 0
        %v990 = vsel %vm950, 1, 0
        %v991 = vsel %vm951, 1, 0
        %v992 = vsel %vm952, 1, 0
        %v993 = vsel %vm953, 1, 0
        %v994 = vsel %vm954, 1, 0
        %v995 = vsel %vm955, 1, 0
        %v996 = vsel %vm956, 1, 0
        %v997 = vsel %vm957, 1, 0
        %v998 = vsel %vm958, 1, 0
        %v999 = vsel %vm959, 1, 0
        %v1000 = vcvt.s32.f32 %v960
        %v1001 = vcvt.s32.f32 %v961
        %v1002 = vcvt.s32.f32 %v962
        %v1003 = vcvt.s32.f32 %v963
        %v1004 = vcvt.s32.f32 %v964
        %v1005 = vcvt.s32.f32 %v965
        %v1006 = vcvt.s32.f32 %v966
        %v1007 = vcvt.s32.f32 %v967
        %v1008 = vcvt.s32.f32 %v968
        %v1009 = vcvt.s32.f32 %v969
        %v1010 = vcvt.s32.f32 %v970
        %v1011 = vcvt.s32.f32 %v971
        %v1012 = vcvt.s32.f32 %v972
        %v1013 = vcvt.s32.f32 %v973
        %v1014 = vcvt.s32.f32 %v974
        %v1015 = vcvt.s32.f32 %v975
        %v1016 = vcvt.s32.f32 %v976
        %v1017 = vcvt.s32.f32 %v977
        %v1018 = vcvt.s32.f32 %v978
        %v1019 = vcvt.s32.f32 %v979
        %v1020 = vcvt.s32.f32 %v980
        %v1021 = vcvt.s32.f32 %v981
        %v1022 = vcvt.s32.f32 %v982
        %v1023 = vcvt.s32.f32 %v983
        %v1024 = vcvt.s32.f32 %v984
        %v1025 = vcvt.s32.f32 %v985
        %v1026 = vcvt.s32.f32 %v986
        %v1027 = vcvt.s32.f32 %v987
        %v1028 = vcvt.s32.f32 %v988
        %v1029 = vcvt.s32.f32 %v989
        %v1030 = vcvt.s32.f32 %v990
        %v1031 = vcvt.s32.f32 %v991
        %v1032 = vcvt.s32.f32 %v992
        %v1033 = vcvt.s32.f32 %v993
        %v1034 = vcvt.s32.f32 %v994
        %v1035 = vcvt.s32.f32 %v995
        %v1036 = vcvt.s32.f32 %v996
        %v1037 = vcvt.s32.f32 %v997
        %v1038 = vcvt.s32.f32 %v998
        %v1039 = vcvt.s32.f32 %v999
        %1040 = vmatpush.msra.mxu0 %v1030
        %1041 = vmatpush.msra.mxu0 %v1028
        %1042 = vmatpush.msra.mxu0 %v1026
        %1043 = vmatpush.msra.mxu0 %v1024
        %1044 = vmatpush.msra.mxu0 %v1022
        %1045 = vmatpush.msra.mxu0 %v1020
        %1046 = vmatpush.msra.mxu0 %v1018
        %1047 = vmatpush.msra.mxu0 %v1016
        %1048 = vmatpush.msra.mxu0 %v1014
        %1049 = vmatpush.msra.mxu0 %v1012
        %1050 = vmatpush.msra.mxu0 %v1010
        %1051 = vmatpush.msra.mxu0 %v1008
        %1052 = vmatpush.msra.mxu0 %v1006
        %1053 = vmatpush.msra.mxu0 %v1004
        %1054 = vmatpush.msra.mxu0 %v1002
        %1055 = vmatpush.msra.mxu0 %v1000
        %1056 = vmatmul.f32.gmra.mxu0 %v823
        %v1057 = vpop.f32.mrf.mxu0
        %v1058 = vadd.f32 0.0, %v1057
        %1059 = vdwg.mxu0
        %1060 = vmatpush.msra.mxu0 0.0
        %1061 = vmatpush.msra.mxu0 0.0
        %1062 = vmatpush.msra.mxu0 0.0
        %1063 = vmatpush.msra.mxu0 0.0
        %1064 = vmatpush.msra.mxu0 0.0
        %1065 = vmatpush.msra.mxu0 0.0
        %1066 = vmatpush.msra.mxu0 0.0
        %1067 = vmatpush.msra.mxu0 0.0
        %1068 = vmatpush.msra.mxu0 0.0
        %1069 = vmatpush.msra.mxu0 0.0
        %1070 = vmatpush.msra.mxu0 0.0
        %1071 = vmatpush.msra.mxu0 0.0
        %1072 = vmatpush.msra.mxu0 %v1038
        %1073 = vmatpush.msra.mxu0 %v1036
        %1074 = vmatpush.msra.mxu0 %v1034
        %1075 = vmatpush.msra.mxu0 %v1032
        %1076 = vmatmul.f32.gmra.mxu0 %v827
        %v1077 = vpop.f32.mrf.mxu0
        %v1078 = vadd.f32 %v1058, %v1077
        %1079 = vdwg.mxu0
        %1080 = vmatpush.msra.mxu0 %v1031
        %1081 = vmatpush.msra.mxu0 %v1029
        %1082 = vmatpush.msra.mxu0 %v1027
        %1083 = vmatpush.msra.mxu0 %v1025
        %1084 = vmatpush.msra.mxu0 %v1023
        %1085 = vmatpush.msra.mxu0 %v1021
        %1086 = vmatpush.msra.mxu0 %v1019
        %1087 = vmatpush.msra.mxu0 %v1017
        %1088 = vmatpush.msra.mxu0 %v1015
        %1089 = vmatpush.msra.mxu0 %v1013
        %1090 = vmatpush.msra.mxu0 %v1011
        %1091 = vmatpush.msra.mxu0 %v1009
        %1092 = vmatpush.msra.mxu0 %v1007
        %1093 = vmatpush.msra.mxu0 %v1005
        %1094 = vmatpush.msra.mxu0 %v1003
        %1095 = vmatpush.msra.mxu0 %v1001
        %1096 = vmatmul.f32.gmra.mxu0 %v823
        %v1097 = vpop.f32.mrf.mxu0
        %v1098 = vadd.f32 0.0, %v1097
        %1099 = vdwg.mxu0
        %1100 = vmatpush.msra.mxu0 0.0
        %1101 = vmatpush.msra.mxu0 0.0
        %1102 = vmatpush.msra.mxu0 0.0
        %1103 = vmatpush.msra.mxu0 0.0
        %1104 = vmatpush.msra.mxu0 0.0
        %1105 = vmatpush.msra.mxu0 0.0
        %1106 = vmatpush.msra.mxu0 0.0
        %1107 = vmatpush.msra.mxu0 0.0
        %1108 = vmatpush.msra.mxu0 0.0
        %1109 = vmatpush.msra.mxu0 0.0
        %1110 = vmatpush.msra.mxu0 0.0
        %1111 = vmatpush.msra.mxu0 0.0
        %1112 = vmatpush.msra.mxu0 %v1039
        %1113 = vmatpush.msra.mxu0 %v1037
        %1114 = vmatpush.msra.mxu0 %v1035
        %1115 = vmatpush.msra.mxu0 %v1033
        %1116 = vmatmul.f32.gmra.mxu0 %v827
        %v1117 = vpop.f32.mrf.mxu0
        %v1118 = vadd.f32 %v1098, %v1117
        %1119 = vdwg.mxu0
        %s1120 = scalar_lea.vmem %s1, 4
        %v1121 = vld [vmem:[%s1120] sm:$0xf]
        %v1122 = vunpack.c.l.bf16 %v1121
        %1124 = vset.pattern.permute.xlu0 0
        %1125 = vperm.xlu0 %1124, %v1122
        %v1126 = vpop.permute.xlu0 %1125
        %v1128 = vperm.slane %v1078, 0
        %v1129 = vperm.slane %v1118, 0
        %v1130 = vmul.f32 %v1126, %v1128
        %v1131 = vmul.f32 %v1126, %v1129
        %v1132 = vadd.f32 %v918, %v1130
        %v1133 = vadd.f32 %v919, %v1131
        %vm1134 = vcmp.eq.s32.totalorder %v662, 4294967292
        %vm1135 = vcmp.eq.s32.totalorder %v663, 4294967292
        %vm1136 = vcmp.eq.s32.totalorder %v664, 4294967292
        %vm1137 = vcmp.eq.s32.totalorder %v665, 4294967292
        %vm1138 = vcmp.eq.s32.totalorder %v666, 4294967292
        %vm1139 = vcmp.eq.s32.totalorder %v667, 4294967292
        %vm1140 = vcmp.eq.s32.totalorder %v668, 4294967292
        %vm1141 = vcmp.eq.s32.totalorder %v669, 4294967292
        %vm1142 = vcmp.eq.s32.totalorder %v670, 4294967292
        %vm1143 = vcmp.eq.s32.totalorder %v671, 4294967292
        %vm1144 = vcmp.eq.s32.totalorder %v672, 4294967292
        %vm1145 = vcmp.eq.s32.totalorder %v673, 4294967292
        %vm1146 = vcmp.eq.s32.totalorder %v674, 4294967292
        %vm1147 = vcmp.eq.s32.totalorder %v675, 4294967292
        %vm1148 = vcmp.eq.s32.totalorder %v676, 4294967292
        %vm1149 = vcmp.eq.s32.totalorder %v677, 4294967292
        %vm1150 = vcmp.eq.s32.totalorder %v678, 4294967292
        %vm1151 = vcmp.eq.s32.totalorder %v679, 4294967292
        %vm1152 = vcmp.eq.s32.totalorder %v680, 4294967292
        %vm1153 = vcmp.eq.s32.totalorder %v681, 4294967292
        %vm1154 = vcmp.eq.s32.totalorder %v682, 4294967292
        %vm1155 = vcmp.eq.s32.totalorder %v683, 4294967292
        %vm1156 = vcmp.eq.s32.totalorder %v684, 4294967292
        %vm1157 = vcmp.eq.s32.totalorder %v685, 4294967292
        %vm1158 = vcmp.eq.s32.totalorder %v686, 4294967292
        %vm1159 = vcmp.eq.s32.totalorder %v687, 4294967292
        %vm1160 = vcmp.eq.s32.totalorder %v688, 4294967292
        %vm1161 = vcmp.eq.s32.totalorder %v689, 4294967292
        %vm1162 = vcmp.eq.s32.totalorder %v690, 4294967292
        %vm1163 = vcmp.eq.s32.totalorder %v691, 4294967292
        %vm1164 = vcmp.eq.s32.totalorder %v692, 4294967292
        %vm1165 = vcmp.eq.s32.totalorder %v693, 4294967292
        %vm1166 = vcmp.eq.s32.totalorder %v694, 4294967292
        %vm1167 = vcmp.eq.s32.totalorder %v695, 4294967292
        %vm1168 = vcmp.eq.s32.totalorder %v696, 4294967292
        %vm1169 = vcmp.eq.s32.totalorder %v697, 4294967292
        %vm1170 = vcmp.eq.s32.totalorder %v698, 4294967292
        %vm1171 = vcmp.eq.s32.totalorder %v699, 4294967292
        %vm1172 = vcmp.eq.s32.totalorder %v700, 4294967292
        %vm1173 = vcmp.eq.s32.totalorder %v701, 4294967292
        %v1174 = vsel %vm1134, 1, 0
        %v1175 = vsel %vm1135, 1, 0
        %v1176 = vsel %vm1136, 1, 0
        %v1177 = vsel %vm1137, 1, 0
        %v1178 = vsel %vm1138, 1, 0
        %v1179 = vsel %vm1139, 1, 0
        %v1180 = vsel %vm1140, 1, 0
        %v1181 = vsel %vm1141, 1, 0
        %v1182 = vsel %vm1142, 1, 0
        %v1183 = vsel %vm1143, 1, 0
        %v1184 = vsel %vm1144, 1, 0
        %v1185 = vsel %vm1145, 1, 0
        %v1186 = vsel %vm1146, 1, 0
        %v1187 = vsel %vm1147, 1, 0
        %v1188 = vsel %vm1148, 1, 0
        %v1189 = vsel %vm1149, 1, 0
        %v1190 = vsel %vm1150, 1, 0
        %v1191 = vsel %vm1151, 1, 0
        %v1192 = vsel %vm1152, 1, 0
        %v1193 = vsel %vm1153, 1, 0
        %v1194 = vsel %vm1154, 1, 0
        %v1195 = vsel %vm1155, 1, 0
        %v1196 = vsel %vm1156, 1, 0
        %v1197 = vsel %vm1157, 1, 0
        %v1198 = vsel %vm1158, 1, 0
        %v1199 = vsel %vm1159, 1, 0
        %v1200 = vsel %vm1160, 1, 0
        %v1201 = vsel %vm1161, 1, 0
        %v1202 = vsel %vm1162, 1, 0
        %v1203 = vsel %vm1163, 1, 0
        %v1204 = vsel %vm1164, 1, 0
        %v1205 = vsel %vm1165, 1, 0
        %v1206 = vsel %vm1166, 1, 0
        %v1207 = vsel %vm1167, 1, 0
        %v1208 = vsel %vm1168, 1, 0
        %v1209 = vsel %vm1169, 1, 0
        %v1210 = vsel %vm1170, 1, 0
        %v1211 = vsel %vm1171, 1, 0
        %v1212 = vsel %vm1172, 1, 0
        %v1213 = vsel %vm1173, 1, 0
        %v1214 = vcvt.s32.f32 %v1174
        %v1215 = vcvt.s32.f32 %v1175
        %v1216 = vcvt.s32.f32 %v1176
        %v1217 = vcvt.s32.f32 %v1177
        %v1218 = vcvt.s32.f32 %v1178
        %v1219 = vcvt.s32.f32 %v1179
        %v1220 = vcvt.s32.f32 %v1180
        %v1221 = vcvt.s32.f32 %v1181
        %v1222 = vcvt.s32.f32 %v1182
        %v1223 = vcvt.s32.f32 %v1183
        %v1224 = vcvt.s32.f32 %v1184
        %v1225 = vcvt.s32.f32 %v1185
        %v1226 = vcvt.s32.f32 %v1186
        %v1227 = vcvt.s32.f32 %v1187
        %v1228 = vcvt.s32.f32 %v1188
        %v1229 = vcvt.s32.f32 %v1189
        %v1230 = vcvt.s32.f32 %v1190
        %v1231 = vcvt.s32.f32 %v1191
        %v1232 = vcvt.s32.f32 %v1192
        %v1233 = vcvt.s32.f32 %v1193
        %v1234 = vcvt.s32.f32 %v1194
        %v1235 = vcvt.s32.f32 %v1195
        %v1236 = vcvt.s32.f32 %v1196
        %v1237 = vcvt.s32.f32 %v1197
        %v1238 = vcvt.s32.f32 %v1198
        %v1239 = vcvt.s32.f32 %v1199
        %v1240 = vcvt.s32.f32 %v1200
        %v1241 = vcvt.s32.f32 %v1201
        %v1242 = vcvt.s32.f32 %v1202
        %v1243 = vcvt.s32.f32 %v1203
        %v1244 = vcvt.s32.f32 %v1204
        %v1245 = vcvt.s32.f32 %v1205
        %v1246 = vcvt.s32.f32 %v1206
        %v1247 = vcvt.s32.f32 %v1207
        %v1248 = vcvt.s32.f32 %v1208
        %v1249 = vcvt.s32.f32 %v1209
        %v1250 = vcvt.s32.f32 %v1210
        %v1251 = vcvt.s32.f32 %v1211
        %v1252 = vcvt.s32.f32 %v1212
        %v1253 = vcvt.s32.f32 %v1213
        %1254 = vmatpush.msra.mxu0 %v1244
        %1255 = vmatpush.msra.mxu0 %v1242
        %1256 = vmatpush.msra.mxu0 %v1240
        %1257 = vmatpush.msra.mxu0 %v1238
        %1258 = vmatpush.msra.mxu0 %v1236
        %1259 = vmatpush.msra.mxu0 %v1234
        %1260 = vmatpush.msra.mxu0 %v1232
        %1261 = vmatpush.msra.mxu0 %v1230
        %1262 = vmatpush.msra.mxu0 %v1228
        %1263 = vmatpush.msra.mxu0 %v1226
        %1264 = vmatpush.msra.mxu0 %v1224
        %1265 = vmatpush.msra.mxu0 %v1222
        %1266 = vmatpush.msra.mxu0 %v1220
        %1267 = vmatpush.msra.mxu0 %v1218
        %1268 = vmatpush.msra.mxu0 %v1216
        %1269 = vmatpush.msra.mxu0 %v1214
        %1270 = vmatmul.f32.gmra.mxu0 %v823
        %v1271 = vpop.f32.mrf.mxu0
        %v1272 = vadd.f32 0.0, %v1271
        %1273 = vdwg.mxu0
        %1274 = vmatpush.msra.mxu0 0.0
        %1275 = vmatpush.msra.mxu0 0.0
        %1276 = vmatpush.msra.mxu0 0.0
        %1277 = vmatpush.msra.mxu0 0.0
        %1278 = vmatpush.msra.mxu0 0.0
        %1279 = vmatpush.msra.mxu0 0.0
        %1280 = vmatpush.msra.mxu0 0.0
        %1281 = vmatpush.msra.mxu0 0.0
        %1282 = vmatpush.msra.mxu0 0.0
        %1283 = vmatpush.msra.mxu0 0.0
        %1284 = vmatpush.msra.mxu0 0.0
        %1285 = vmatpush.msra.mxu0 0.0
        %1286 = vmatpush.msra.mxu0 %v1252
        %1287 = vmatpush.msra.mxu0 %v1250
        %1288 = vmatpush.msra.mxu0 %v1248
        %1289 = vmatpush.msra.mxu0 %v1246
        %1290 = vmatmul.f32.gmra.mxu0 %v827
        %v1291 = vpop.f32.mrf.mxu0
        %v1292 = vadd.f32 %v1272, %v1291
        %1293 = vdwg.mxu0
        %1294 = vmatpush.msra.mxu0 %v1245
        %1295 = vmatpush.msra.mxu0 %v1243
        %1296 = vmatpush.msra.mxu0 %v1241
        %1297 = vmatpush.msra.mxu0 %v1239
        %1298 = vmatpush.msra.mxu0 %v1237
        %1299 = vmatpush.msra.mxu0 %v1235
        %1300 = vmatpush.msra.mxu0 %v1233
        %1301 = vmatpush.msra.mxu0 %v1231
        %1302 = vmatpush.msra.mxu0 %v1229
        %1303 = vmatpush.msra.mxu0 %v1227
        %1304 = vmatpush.msra.mxu0 %v1225
        %1305 = vmatpush.msra.mxu0 %v1223
        %1306 = vmatpush.msra.mxu0 %v1221
        %1307 = vmatpush.msra.mxu0 %v1219
        %1308 = vmatpush.msra.mxu0 %v1217
        %1309 = vmatpush.msra.mxu0 %v1215
        %1310 = vmatmul.f32.gmra.mxu0 %v823
        %v1311 = vpop.f32.mrf.mxu0
        %v1312 = vadd.f32 0.0, %v1311
        %1313 = vdwg.mxu0
        %1314 = vmatpush.msra.mxu0 0.0
        %1315 = vmatpush.msra.mxu0 0.0
        %1316 = vmatpush.msra.mxu0 0.0
        %1317 = vmatpush.msra.mxu0 0.0
        %1318 = vmatpush.msra.mxu0 0.0
        %1319 = vmatpush.msra.mxu0 0.0
        %1320 = vmatpush.msra.mxu0 0.0
        %1321 = vmatpush.msra.mxu0 0.0
        %1322 = vmatpush.msra.mxu0 0.0
        %1323 = vmatpush.msra.mxu0 0.0
        %1324 = vmatpush.msra.mxu0 0.0
        %1325 = vmatpush.msra.mxu0 0.0
        %1326 = vmatpush.msra.mxu0 %v1253
        %1327 = vmatpush.msra.mxu0 %v1251
        %1328 = vmatpush.msra.mxu0 %v1249
        %1329 = vmatpush.msra.mxu0 %v1247
        %1330 = vmatmul.f32.gmra.mxu0 %v827
        %v1331 = vpop.f32.mrf.mxu0
        %v1332 = vadd.f32 %v1312, %v1331
        %1333 = vdwg.mxu0
        %s1334 = scalar_lea.vmem %s1, 8
        %v1335 = vld [vmem:[%s1334] sm:$0xf]
        %v1336 = vunpack.c.l.bf16 %v1335
        %1338 = vset.pattern.permute.xlu0 0
        %1339 = vperm.xlu0 %1338, %v1336
        %v1340 = vpop.permute.xlu0 %1339
        %v1342 = vperm.slane %v1292, 0
        %v1343 = vperm.slane %v1332, 0
        %v1344 = vmul.f32 %v1340, %v1342
        %v1345 = vmul.f32 %v1340, %v1343
        %v1346 = vadd.f32 %v1132, %v1344
        %v1347 = vadd.f32 %v1133, %v1345
        %vm1348 = vcmp.eq.s32.totalorder %v662, 4294967293
        %vm1349 = vcmp.eq.s32.totalorder %v663, 4294967293
        %vm1350 = vcmp.eq.s32.totalorder %v664, 4294967293
        %vm1351 = vcmp.eq.s32.totalorder %v665, 4294967293
        %vm1352 = vcmp.eq.s32.totalorder %v666, 4294967293
        %vm1353 = vcmp.eq.s32.totalorder %v667, 4294967293
        %vm1354 = vcmp.eq.s32.totalorder %v668, 4294967293
        %vm1355 = vcmp.eq.s32.totalorder %v669, 4294967293
        %vm1356 = vcmp.eq.s32.totalorder %v670, 4294967293
        %vm1357 = vcmp.eq.s32.totalorder %v671, 4294967293
        %vm1358 = vcmp.eq.s32.totalorder %v672, 4294967293
        %vm1359 = vcmp.eq.s32.totalorder %v673, 4294967293
        %vm1360 = vcmp.eq.s32.totalorder %v674, 4294967293
        %vm1361 = vcmp.eq.s32.totalorder %v675, 4294967293
        %vm1362 = vcmp.eq.s32.totalorder %v676, 4294967293
        %vm1363 = vcmp.eq.s32.totalorder %v677, 4294967293
        %vm1364 = vcmp.eq.s32.totalorder %v678, 4294967293
        %vm1365 = vcmp.eq.s32.totalorder %v679, 4294967293
        %vm1366 = vcmp.eq.s32.totalorder %v680, 4294967293
        %vm1367 = vcmp.eq.s32.totalorder %v681, 4294967293
        %vm1368 = vcmp.eq.s32.totalorder %v682, 4294967293
        %vm1369 = vcmp.eq.s32.totalorder %v683, 4294967293
        %vm1370 = vcmp.eq.s32.totalorder %v684, 4294967293
        %vm1371 = vcmp.eq.s32.totalorder %v685, 4294967293
        %vm1372 = vcmp.eq.s32.totalorder %v686, 4294967293
        %vm1373 = vcmp.eq.s32.totalorder %v687, 4294967293
        %vm1374 = vcmp.eq.s32.totalorder %v688, 4294967293
        %vm1375 = vcmp.eq.s32.totalorder %v689, 4294967293
        %vm1376 = vcmp.eq.s32.totalorder %v690, 4294967293
        %vm1377 = vcmp.eq.s32.totalorder %v691, 4294967293
        %vm1378 = vcmp.eq.s32.totalorder %v692, 4294967293
        %vm1379 = vcmp.eq.s32.totalorder %v693, 4294967293
        %vm1380 = vcmp.eq.s32.totalorder %v694, 4294967293
        %vm1381 = vcmp.eq.s32.totalorder %v695, 4294967293
        %vm1382 = vcmp.eq.s32.totalorder %v696, 4294967293
        %vm1383 = vcmp.eq.s32.totalorder %v697, 4294967293
        %vm1384 = vcmp.eq.s32.totalorder %v698, 4294967293
        %vm1385 = vcmp.eq.s32.totalorder %v699, 4294967293
        %vm1386 = vcmp.eq.s32.totalorder %v700, 4294967293
        %vm1387 = vcmp.eq.s32.totalorder %v701, 4294967293
        %v1388 = vsel %vm1348, 1, 0
        %v1389 = vsel %vm1349, 1, 0
        %v1390 = vsel %vm1350, 1, 0
        %v1391 = vsel %vm1351, 1, 0
        %v1392 = vsel %vm1352, 1, 0
        %v1393 = vsel %vm1353, 1, 0
        %v1394 = vsel %vm1354, 1, 0
        %v1395 = vsel %vm1355, 1, 0
        %v1396 = vsel %vm1356, 1, 0
        %v1397 = vsel %vm1357, 1, 0
        %v1398 = vsel %vm1358, 1, 0
        %v1399 = vsel %vm1359, 1, 0
        %v1400 = vsel %vm1360, 1, 0
        %v1401 = vsel %vm1361, 1, 0
        %v1402 = vsel %vm1362, 1, 0
        %v1403 = vsel %vm1363, 1, 0
        %v1404 = vsel %vm1364, 1, 0
        %v1405 = vsel %vm1365, 1, 0
        %v1406 = vsel %vm1366, 1, 0
        %v1407 = vsel %vm1367, 1, 0
        %v1408 = vsel %vm1368, 1, 0
        %v1409 = vsel %vm1369, 1, 0
        %v1410 = vsel %vm1370, 1, 0
        %v1411 = vsel %vm1371, 1, 0
        %v1412 = vsel %vm1372, 1, 0
        %v1413 = vsel %vm1373, 1, 0
        %v1414 = vsel %vm1374, 1, 0
        %v1415 = vsel %vm1375, 1, 0
        %v1416 = vsel %vm1376, 1, 0
        %v1417 = vsel %vm1377, 1, 0
        %v1418 = vsel %vm1378, 1, 0
        %v1419 = vsel %vm1379, 1, 0
        %v1420 = vsel %vm1380, 1, 0
        %v1421 = vsel %vm1381, 1, 0
        %v1422 = vsel %vm1382, 1, 0
        %v1423 = vsel %vm1383, 1, 0
        %v1424 = vsel %vm1384, 1, 0
        %v1425 = vsel %vm1385, 1, 0
        %v1426 = vsel %vm1386, 1, 0
        %v1427 = vsel %vm1387, 1, 0
        %v1428 = vcvt.s32.f32 %v1388
        %v1429 = vcvt.s32.f32 %v1389
        %v1430 = vcvt.s32.f32 %v1390
        %v1431 = vcvt.s32.f32 %v1391
        %v1432 = vcvt.s32.f32 %v1392
        %v1433 = vcvt.s32.f32 %v1393
        %v1434 = vcvt.s32.f32 %v1394
        %v1435 = vcvt.s32.f32 %v1395
        %v1436 = vcvt.s32.f32 %v1396
        %v1437 = vcvt.s32.f32 %v1397
        %v1438 = vcvt.s32.f32 %v1398
        %v1439 = vcvt.s32.f32 %v1399
        %v1440 = vcvt.s32.f32 %v1400
        %v1441 = vcvt.s32.f32 %v1401
        %v1442 = vcvt.s32.f32 %v1402
        %v1443 = vcvt.s32.f32 %v1403
        %v1444 = vcvt.s32.f32 %v1404
        %v1445 = vcvt.s32.f32 %v1405
        %v1446 = vcvt.s32.f32 %v1406
        %v1447 = vcvt.s32.f32 %v1407
        %v1448 = vcvt.s32.f32 %v1408
        %v1449 = vcvt.s32.f32 %v1409
        %v1450 = vcvt.s32.f32 %v1410
        %v1451 = vcvt.s32.f32 %v1411
        %v1452 = vcvt.s32.f32 %v1412
        %v1453 = vcvt.s32.f32 %v1413
        %v1454 = vcvt.s32.f32 %v1414
        %v1455 = vcvt.s32.f32 %v1415
        %v1456 = vcvt.s32.f32 %v1416
        %v1457 = vcvt.s32.f32 %v1417
        %v1458 = vcvt.s32.f32 %v1418
        %v1459 = vcvt.s32.f32 %v1419
        %v1460 = vcvt.s32.f32 %v1420
        %v1461 = vcvt.s32.f32 %v1421
        %v1462 = vcvt.s32.f32 %v1422
        %v1463 = vcvt.s32.f32 %v1423
        %v1464 = vcvt.s32.f32 %v1424
        %v1465 = vcvt.s32.f32 %v1425
        %v1466 = vcvt.s32.f32 %v1426
        %v1467 = vcvt.s32.f32 %v1427
        %1468 = vmatpush.msra.mxu0 %v1458
        %1469 = vmatpush.msra.mxu0 %v1456
        %1470 = vmatpush.msra.mxu0 %v1454
        %1471 = vmatpush.msra.mxu0 %v1452
        %1472 = vmatpush.msra.mxu0 %v1450
        %1473 = vmatpush.msra.mxu0 %v1448
        %1474 = vmatpush.msra.mxu0 %v1446
        %1475 = vmatpush.msra.mxu0 %v1444
        %1476 = vmatpush.msra.mxu0 %v1442
        %1477 = vmatpush.msra.mxu0 %v1440
        %1478 = vmatpush.msra.mxu0 %v1438
        %1479 = vmatpush.msra.mxu0 %v1436
        %1480 = vmatpush.msra.mxu0 %v1434
        %1481 = vmatpush.msra.mxu0 %v1432
        %1482 = vmatpush.msra.mxu0 %v1430
        %1483 = vmatpush.msra.mxu0 %v1428
        %1484 = vmatmul.f32.gmra.mxu0 %v823
        %v1485 = vpop.f32.mrf.mxu0
        %v1486 = vadd.f32 0.0, %v1485
        %1487 = vdwg.mxu0
        %1488 = vmatpush.msra.mxu0 0.0
        %1489 = vmatpush.msra.mxu0 0.0
        %1490 = vmatpush.msra.mxu0 0.0
        %1491 = vmatpush.msra.mxu0 0.0
        %1492 = vmatpush.msra.mxu0 0.0
        %1493 = vmatpush.msra.mxu0 0.0
        %1494 = vmatpush.msra.mxu0 0.0
        %1495 = vmatpush.msra.mxu0 0.0
        %1496 = vmatpush.msra.mxu0 0.0
        %1497 = vmatpush.msra.mxu0 0.0
        %1498 = vmatpush.msra.mxu0 0.0
        %1499 = vmatpush.msra.mxu0 0.0
        %1500 = vmatpush.msra.mxu0 %v1466
        %1501 = vmatpush.msra.mxu0 %v1464
        %1502 = vmatpush.msra.mxu0 %v1462
        %1503 = vmatpush.msra.mxu0 %v1460
        %1504 = vmatmul.f32.gmra.mxu0 %v827
        %v1505 = vpop.f32.mrf.mxu0
        %v1506 = vadd.f32 %v1486, %v1505
        %1507 = vdwg.mxu0
        %1508 = vmatpush.msra.mxu0 %v1459
        %1509 = vmatpush.msra.mxu0 %v1457
        %1510 = vmatpush.msra.mxu0 %v1455
        %1511 = vmatpush.msra.mxu0 %v1453
        %1512 = vmatpush.msra.mxu0 %v1451
        %1513 = vmatpush.msra.mxu0 %v1449
        %1514 = vmatpush.msra.mxu0 %v1447
        %1515 = vmatpush.msra.mxu0 %v1445
        %1516 = vmatpush.msra.mxu0 %v1443
        %1517 = vmatpush.msra.mxu0 %v1441
        %1518 = vmatpush.msra.mxu0 %v1439
        %1519 = vmatpush.msra.mxu0 %v1437
        %1520 = vmatpush.msra.mxu0 %v1435
        %1521 = vmatpush.msra.mxu0 %v1433
        %1522 = vmatpush.msra.mxu0 %v1431
        %1523 = vmatpush.msra.mxu0 %v1429
        %1524 = vmatmul.f32.gmra.mxu0 %v823
        %v1525 = vpop.f32.mrf.mxu0
        %v1526 = vadd.f32 0.0, %v1525
        %1527 = vdwg.mxu0
        %1528 = vmatpush.msra.mxu0 0.0
        %1529 = vmatpush.msra.mxu0 0.0
        %1530 = vmatpush.msra.mxu0 0.0
        %1531 = vmatpush.msra.mxu0 0.0
        %1532 = vmatpush.msra.mxu0 0.0
        %1533 = vmatpush.msra.mxu0 0.0
        %1534 = vmatpush.msra.mxu0 0.0
        %1535 = vmatpush.msra.mxu0 0.0
        %1536 = vmatpush.msra.mxu0 0.0
        %1537 = vmatpush.msra.mxu0 0.0
        %1538 = vmatpush.msra.mxu0 0.0
        %1539 = vmatpush.msra.mxu0 0.0
        %1540 = vmatpush.msra.mxu0 %v1467
        %1541 = vmatpush.msra.mxu0 %v1465
        %1542 = vmatpush.msra.mxu0 %v1463
        %1543 = vmatpush.msra.mxu0 %v1461
        %1544 = vmatmul.f32.gmra.mxu0 %v827
        %v1545 = vpop.f32.mrf.mxu0
        %v1546 = vadd.f32 %v1526, %v1545
        %1547 = vdwg.mxu0
        %s1548 = scalar_lea.vmem %s1, 12
        %v1549 = vld [vmem:[%s1548] sm:$0xf]
        %v1550 = vunpack.c.l.bf16 %v1549
        %1552 = vset.pattern.permute.xlu0 0
        %1553 = vperm.xlu0 %1552, %v1550
        %v1554 = vpop.permute.xlu0 %1553
        %v1556 = vperm.slane %v1506, 0
        %v1557 = vperm.slane %v1546, 0
        %v1558 = vmul.f32 %v1554, %v1556
        %v1559 = vmul.f32 %v1554, %v1557
        %v1560 = vadd.f32 %v1346, %v1558
        %v1561 = vadd.f32 %v1347, %v1559
        %vm1562 = vcmp.eq.s32.totalorder %v662, 4294967294
        %vm1563 = vcmp.eq.s32.totalorder %v663, 4294967294
        %vm1564 = vcmp.eq.s32.totalorder %v664, 4294967294
        %vm1565 = vcmp.eq.s32.totalorder %v665, 4294967294
        %vm1566 = vcmp.eq.s32.totalorder %v666, 4294967294
        %vm1567 = vcmp.eq.s32.totalorder %v667, 4294967294
        %vm1568 = vcmp.eq.s32.totalorder %v668, 4294967294
        %vm1569 = vcmp.eq.s32.totalorder %v669, 4294967294
        %vm1570 = vcmp.eq.s32.totalorder %v670, 4294967294
        %vm1571 = vcmp.eq.s32.totalorder %v671, 4294967294
        %vm1572 = vcmp.eq.s32.totalorder %v672, 4294967294
        %vm1573 = vcmp.eq.s32.totalorder %v673, 4294967294
        %vm1574 = vcmp.eq.s32.totalorder %v674, 4294967294
        %vm1575 = vcmp.eq.s32.totalorder %v675, 4294967294
        %vm1576 = vcmp.eq.s32.totalorder %v676, 4294967294
        %vm1577 = vcmp.eq.s32.totalorder %v677, 4294967294
        %vm1578 = vcmp.eq.s32.totalorder %v678, 4294967294
        %vm1579 = vcmp.eq.s32.totalorder %v679, 4294967294
        %vm1580 = vcmp.eq.s32.totalorder %v680, 4294967294
        %vm1581 = vcmp.eq.s32.totalorder %v681, 4294967294
        %vm1582 = vcmp.eq.s32.totalorder %v682, 4294967294
        %vm1583 = vcmp.eq.s32.totalorder %v683, 4294967294
        %vm1584 = vcmp.eq.s32.totalorder %v684, 4294967294
        %vm1585 = vcmp.eq.s32.totalorder %v685, 4294967294
        %vm1586 = vcmp.eq.s32.totalorder %v686, 4294967294
        %vm1587 = vcmp.eq.s32.totalorder %v687, 4294967294
        %vm1588 = vcmp.eq.s32.totalorder %v688, 4294967294
        %vm1589 = vcmp.eq.s32.totalorder %v689, 4294967294
        %vm1590 = vcmp.eq.s32.totalorder %v690, 4294967294
        %vm1591 = vcmp.eq.s32.totalorder %v691, 4294967294
        %vm1592 = vcmp.eq.s32.totalorder %v692, 4294967294
        %vm1593 = vcmp.eq.s32.totalorder %v693, 4294967294
        %vm1594 = vcmp.eq.s32.totalorder %v694, 4294967294
        %vm1595 = vcmp.eq.s32.totalorder %v695, 4294967294
        %vm1596 = vcmp.eq.s32.totalorder %v696, 4294967294
        %vm1597 = vcmp.eq.s32.totalorder %v697, 4294967294
        %vm1598 = vcmp.eq.s32.totalorder %v698, 4294967294
        %vm1599 = vcmp.eq.s32.totalorder %v699, 4294967294
        %vm1600 = vcmp.eq.s32.totalorder %v700, 4294967294
        %vm1601 = vcmp.eq.s32.totalorder %v701, 4294967294
        %v1602 = vsel %vm1562, 1, 0
        %v1603 = vsel %vm1563, 1, 0
        %v1604 = vsel %vm1564, 1, 0
        %v1605 = vsel %vm1565, 1, 0
        %v1606 = vsel %vm1566, 1, 0
        %v1607 = vsel %vm1567, 1, 0
        %v1608 = vsel %vm1568, 1, 0
        %v1609 = vsel %vm1569, 1, 0
        %v1610 = vsel %vm1570, 1, 0
        %v1611 = vsel %vm1571, 1, 0
        %v1612 = vsel %vm1572, 1, 0
        %v1613 = vsel %vm1573, 1, 0
        %v1614 = vsel %vm1574, 1, 0
        %v1615 = vsel %vm1575, 1, 0
        %v1616 = vsel %vm1576, 1, 0
        %v1617 = vsel %vm1577, 1, 0
        %v1618 = vsel %vm1578, 1, 0
        %v1619 = vsel %vm1579, 1, 0
        %v1620 = vsel %vm1580, 1, 0
        %v1621 = vsel %vm1581, 1, 0
        %v1622 = vsel %vm1582, 1, 0
        %v1623 = vsel %vm1583, 1, 0
        %v1624 = vsel %vm1584, 1, 0
        %v1625 = vsel %vm1585, 1, 0
        %v1626 = vsel %vm1586, 1, 0
        %v1627 = vsel %vm1587, 1, 0
        %v1628 = vsel %vm1588, 1, 0
        %v1629 = vsel %vm1589, 1, 0
        %v1630 = vsel %vm1590, 1, 0
        %v1631 = vsel %vm1591, 1, 0
        %v1632 = vsel %vm1592, 1, 0
        %v1633 = vsel %vm1593, 1, 0
        %v1634 = vsel %vm1594, 1, 0
        %v1635 = vsel %vm1595, 1, 0
        %v1636 = vsel %vm1596, 1, 0
        %v1637 = vsel %vm1597, 1, 0
        %v1638 = vsel %vm1598, 1, 0
        %v1639 = vsel %vm1599, 1, 0
        %v1640 = vsel %vm1600, 1, 0
        %v1641 = vsel %vm1601, 1, 0
        %v1642 = vcvt.s32.f32 %v1602
        %v1643 = vcvt.s32.f32 %v1603
        %v1644 = vcvt.s32.f32 %v1604
        %v1645 = vcvt.s32.f32 %v1605
        %v1646 = vcvt.s32.f32 %v1606
        %v1647 = vcvt.s32.f32 %v1607
        %v1648 = vcvt.s32.f32 %v1608
        %v1649 = vcvt.s32.f32 %v1609
        %v1650 = vcvt.s32.f32 %v1610
        %v1651 = vcvt.s32.f32 %v1611
        %v1652 = vcvt.s32.f32 %v1612
        %v1653 = vcvt.s32.f32 %v1613
        %v1654 = vcvt.s32.f32 %v1614
        %v1655 = vcvt.s32.f32 %v1615
        %v1656 = vcvt.s32.f32 %v1616
        %v1657 = vcvt.s32.f32 %v1617
        %v1658 = vcvt.s32.f32 %v1618
        %v1659 = vcvt.s32.f32 %v1619
        %v1660 = vcvt.s32.f32 %v1620
        %v1661 = vcvt.s32.f32 %v1621
        %v1662 = vcvt.s32.f32 %v1622
        %v1663 = vcvt.s32.f32 %v1623
        %v1664 = vcvt.s32.f32 %v1624
        %v1665 = vcvt.s32.f32 %v1625
        %v1666 = vcvt.s32.f32 %v1626
        %v1667 = vcvt.s32.f32 %v1627
        %v1668 = vcvt.s32.f32 %v1628
        %v1669 = vcvt.s32.f32 %v1629
        %v1670 = vcvt.s32.f32 %v1630
        %v1671 = vcvt.s32.f32 %v1631
        %v1672 = vcvt.s32.f32 %v1632
        %v1673 = vcvt.s32.f32 %v1633
        %v1674 = vcvt.s32.f32 %v1634
        %v1675 = vcvt.s32.f32 %v1635
        %v1676 = vcvt.s32.f32 %v1636
        %v1677 = vcvt.s32.f32 %v1637
        %v1678 = vcvt.s32.f32 %v1638
        %v1679 = vcvt.s32.f32 %v1639
        %v1680 = vcvt.s32.f32 %v1640
        %v1681 = vcvt.s32.f32 %v1641
        %1682 = vmatpush.msra.mxu0 %v1672
        %1683 = vmatpush.msra.mxu0 %v1670
        %1684 = vmatpush.msra.mxu0 %v1668
        %1685 = vmatpush.msra.mxu0 %v1666
        %1686 = vmatpush.msra.mxu0 %v1664
        %1687 = vmatpush.msra.mxu0 %v1662
        %1688 = vmatpush.msra.mxu0 %v1660
        %1689 = vmatpush.msra.mxu0 %v1658
        %1690 = vmatpush.msra.mxu0 %v1656
        %1691 = vmatpush.msra.mxu0 %v1654
        %1692 = vmatpush.msra.mxu0 %v1652
        %1693 = vmatpush.msra.mxu0 %v1650
        %1694 = vmatpush.msra.mxu0 %v1648
        %1695 = vmatpush.msra.mxu0 %v1646
        %1696 = vmatpush.msra.mxu0 %v1644
        %1697 = vmatpush.msra.mxu0 %v1642
        %1698 = vmatmul.f32.gmra.mxu0 %v823
        %v1699 = vpop.f32.mrf.mxu0
        %v1700 = vadd.f32 0.0, %v1699
        %1701 = vdwg.mxu0
        %1702 = vmatpush.msra.mxu0 0.0
        %1703 = vmatpush.msra.mxu0 0.0
        %1704 = vmatpush.msra.mxu0 0.0
        %1705 = vmatpush.msra.mxu0 0.0
        %1706 = vmatpush.msra.mxu0 0.0
        %1707 = vmatpush.msra.mxu0 0.0
        %1708 = vmatpush.msra.mxu0 0.0
        %1709 = vmatpush.msra.mxu0 0.0
        %1710 = vmatpush.msra.mxu0 0.0
        %1711 = vmatpush.msra.mxu0 0.0
        %1712 = vmatpush.msra.mxu0 0.0
        %1713 = vmatpush.msra.mxu0 0.0
        %1714 = vmatpush.msra.mxu0 %v1680
        %1715 = vmatpush.msra.mxu0 %v1678
        %1716 = vmatpush.msra.mxu0 %v1676
        %1717 = vmatpush.msra.mxu0 %v1674
        %1718 = vmatmul.f32.gmra.mxu0 %v827
        %v1719 = vpop.f32.mrf.mxu0
        %v1720 = vadd.f32 %v1700, %v1719
        %1721 = vdwg.mxu0
        %1722 = vmatpush.msra.mxu0 %v1673
        %1723 = vmatpush.msra.mxu0 %v1671
        %1724 = vmatpush.msra.mxu0 %v1669
        %1725 = vmatpush.msra.mxu0 %v1667
        %1726 = vmatpush.msra.mxu0 %v1665
        %1727 = vmatpush.msra.mxu0 %v1663
        %1728 = vmatpush.msra.mxu0 %v1661
        %1729 = vmatpush.msra.mxu0 %v1659
        %1730 = vmatpush.msra.mxu0 %v1657
        %1731 = vmatpush.msra.mxu0 %v1655
        %1732 = vmatpush.msra.mxu0 %v1653
        %1733 = vmatpush.msra.mxu0 %v1651
        %1734 = vmatpush.msra.mxu0 %v1649
        %1735 = vmatpush.msra.mxu0 %v1647
        %1736 = vmatpush.msra.mxu0 %v1645
        %1737 = vmatpush.msra.mxu0 %v1643
        %1738 = vmatmul.f32.gmra.mxu0 %v823
        %v1739 = vpop.f32.mrf.mxu0
        %v1740 = vadd.f32 0.0, %v1739
        %1741 = vdwg.mxu0
        %1742 = vmatpush.msra.mxu0 0.0
        %1743 = vmatpush.msra.mxu0 0.0
        %1744 = vmatpush.msra.mxu0 0.0
        %1745 = vmatpush.msra.mxu0 0.0
        %1746 = vmatpush.msra.mxu0 0.0
        %1747 = vmatpush.msra.mxu0 0.0
        %1748 = vmatpush.msra.mxu0 0.0
        %1749 = vmatpush.msra.mxu0 0.0
        %1750 = vmatpush.msra.mxu0 0.0
        %1751 = vmatpush.msra.mxu0 0.0
        %1752 = vmatpush.msra.mxu0 0.0
        %1753 = vmatpush.msra.mxu0 0.0
        %1754 = vmatpush.msra.mxu0 %v1681
        %1755 = vmatpush.msra.mxu0 %v1679
        %1756 = vmatpush.msra.mxu0 %v1677
        %1757 = vmatpush.msra.mxu0 %v1675
        %1758 = vmatmul.f32.gmra.mxu0 %v827
        %v1759 = vpop.f32.mrf.mxu0
        %v1760 = vadd.f32 %v1740, %v1759
        %1761 = vdwg.mxu0
        %s1762 = scalar_lea.vmem %s1, 16
        %v1763 = vld [vmem:[%s1762] sm:$0xf]
        %v1764 = vunpack.c.l.bf16 %v1763
        %1766 = vset.pattern.permute.xlu0 0
        %1767 = vperm.xlu0 %1766, %v1764
        %v1768 = vpop.permute.xlu0 %1767
        %v1770 = vperm.slane %v1720, 0
        %v1771 = vperm.slane %v1760, 0
        %v1772 = vmul.f32 %v1768, %v1770
        %v1773 = vmul.f32 %v1768, %v1771
        %v1774 = vadd.f32 %v1560, %v1772
        %v1775 = vadd.f32 %v1561, %v1773
        %vm1776 = vcmp.eq.s32.totalorder %v662, 4294967295
        %vm1777 = vcmp.eq.s32.totalorder %v663, 4294967295
        %vm1778 = vcmp.eq.s32.totalorder %v664, 4294967295
        %vm1779 = vcmp.eq.s32.totalorder %v665, 4294967295
        %vm1780 = vcmp.eq.s32.totalorder %v666, 4294967295
        %vm1781 = vcmp.eq.s32.totalorder %v667, 4294967295
        %vm1782 = vcmp.eq.s32.totalorder %v668, 4294967295
        %vm1783 = vcmp.eq.s32.totalorder %v669, 4294967295
        %vm1784 = vcmp.eq.s32.totalorder %v670, 4294967295
        %vm1785 = vcmp.eq.s32.totalorder %v671, 4294967295
        %vm1786 = vcmp.eq.s32.totalorder %v672, 4294967295
        %vm1787 = vcmp.eq.s32.totalorder %v673, 4294967295
        %vm1788 = vcmp.eq.s32.totalorder %v674, 4294967295
        %vm1789 = vcmp.eq.s32.totalorder %v675, 4294967295
        %vm1790 = vcmp.eq.s32.totalorder %v676, 4294967295
        %vm1791 = vcmp.eq.s32.totalorder %v677, 4294967295
        %vm1792 = vcmp.eq.s32.totalorder %v678, 4294967295
        %vm1793 = vcmp.eq.s32.totalorder %v679, 4294967295
        %vm1794 = vcmp.eq.s32.totalorder %v680, 4294967295
        %vm1795 = vcmp.eq.s32.totalorder %v681, 4294967295
        %vm1796 = vcmp.eq.s32.totalorder %v682, 4294967295
        %vm1797 = vcmp.eq.s32.totalorder %v683, 4294967295
        %vm1798 = vcmp.eq.s32.totalorder %v684, 4294967295
        %vm1799 = vcmp.eq.s32.totalorder %v685, 4294967295
        %vm1800 = vcmp.eq.s32.totalorder %v686, 4294967295
        %vm1801 = vcmp.eq.s32.totalorder %v687, 4294967295
        %vm1802 = vcmp.eq.s32.totalorder %v688, 4294967295
        %vm1803 = vcmp.eq.s32.totalorder %v689, 4294967295
        %vm1804 = vcmp.eq.s32.totalorder %v690, 4294967295
        %vm1805 = vcmp.eq.s32.totalorder %v691, 4294967295
        %vm1806 = vcmp.eq.s32.totalorder %v692, 4294967295
        %vm1807 = vcmp.eq.s32.totalorder %v693, 4294967295
        %vm1808 = vcmp.eq.s32.totalorder %v694, 4294967295
        %vm1809 = vcmp.eq.s32.totalorder %v695, 4294967295
        %vm1810 = vcmp.eq.s32.totalorder %v696, 4294967295
        %vm1811 = vcmp.eq.s32.totalorder %v697, 4294967295
        %vm1812 = vcmp.eq.s32.totalorder %v698, 4294967295
        %vm1813 = vcmp.eq.s32.totalorder %v699, 4294967295
        %vm1814 = vcmp.eq.s32.totalorder %v700, 4294967295
        %vm1815 = vcmp.eq.s32.totalorder %v701, 4294967295
        %v1816 = vsel %vm1776, 1, 0
        %v1817 = vsel %vm1777, 1, 0
        %v1818 = vsel %vm1778, 1, 0
        %v1819 = vsel %vm1779, 1, 0
        %v1820 = vsel %vm1780, 1, 0
        %v1821 = vsel %vm1781, 1, 0
        %v1822 = vsel %vm1782, 1, 0
        %v1823 = vsel %vm1783, 1, 0
        %v1824 = vsel %vm1784, 1, 0
        %v1825 = vsel %vm1785, 1, 0
        %v1826 = vsel %vm1786, 1, 0
        %v1827 = vsel %vm1787, 1, 0
        %v1828 = vsel %vm1788, 1, 0
        %v1829 = vsel %vm1789, 1, 0
        %v1830 = vsel %vm1790, 1, 0
        %v1831 = vsel %vm1791, 1, 0
        %v1832 = vsel %vm1792, 1, 0
        %v1833 = vsel %vm1793, 1, 0
        %v1834 = vsel %vm1794, 1, 0
        %v1835 = vsel %vm1795, 1, 0
        %v1836 = vsel %vm1796, 1, 0
        %v1837 = vsel %vm1797, 1, 0
        %v1838 = vsel %vm1798, 1, 0
        %v1839 = vsel %vm1799, 1, 0
        %v1840 = vsel %vm1800, 1, 0
        %v1841 = vsel %vm1801, 1, 0
        %v1842 = vsel %vm1802, 1, 0
        %v1843 = vsel %vm1803, 1, 0
        %v1844 = vsel %vm1804, 1, 0
        %v1845 = vsel %vm1805, 1, 0
        %v1846 = vsel %vm1806, 1, 0
        %v1847 = vsel %vm1807, 1, 0
        %v1848 = vsel %vm1808, 1, 0
        %v1849 = vsel %vm1809, 1, 0
        %v1850 = vsel %vm1810, 1, 0
        %v1851 = vsel %vm1811, 1, 0
        %v1852 = vsel %vm1812, 1, 0
        %v1853 = vsel %vm1813, 1, 0
        %v1854 = vsel %vm1814, 1, 0
        %v1855 = vsel %vm1815, 1, 0
        %v1856 = vcvt.s32.f32 %v1816
        %v1857 = vcvt.s32.f32 %v1817
        %v1858 = vcvt.s32.f32 %v1818
        %v1859 = vcvt.s32.f32 %v1819
        %v1860 = vcvt.s32.f32 %v1820
        %v1861 = vcvt.s32.f32 %v1821
        %v1862 = vcvt.s32.f32 %v1822
        %v1863 = vcvt.s32.f32 %v1823
        %v1864 = vcvt.s32.f32 %v1824
        %v1865 = vcvt.s32.f32 %v1825
        %v1866 = vcvt.s32.f32 %v1826
        %v1867 = vcvt.s32.f32 %v1827
        %v1868 = vcvt.s32.f32 %v1828
        %v1869 = vcvt.s32.f32 %v1829
        %v1870 = vcvt.s32.f32 %v1830
        %v1871 = vcvt.s32.f32 %v1831
        %v1872 = vcvt.s32.f32 %v1832
        %v1873 = vcvt.s32.f32 %v1833
        %v1874 = vcvt.s32.f32 %v1834
        %v1875 = vcvt.s32.f32 %v1835
        %v1876 = vcvt.s32.f32 %v1836
        %v1877 = vcvt.s32.f32 %v1837
        %v1878 = vcvt.s32.f32 %v1838
        %v1879 = vcvt.s32.f32 %v1839
        %v1880 = vcvt.s32.f32 %v1840
        %v1881 = vcvt.s32.f32 %v1841
        %v1882 = vcvt.s32.f32 %v1842
        %v1883 = vcvt.s32.f32 %v1843
        %v1884 = vcvt.s32.f32 %v1844
        %v1885 = vcvt.s32.f32 %v1845
        %v1886 = vcvt.s32.f32 %v1846
        %v1887 = vcvt.s32.f32 %v1847
        %v1888 = vcvt.s32.f32 %v1848
        %v1889 = vcvt.s32.f32 %v1849
        %v1890 = vcvt.s32.f32 %v1850
        %v1891 = vcvt.s32.f32 %v1851
        %v1892 = vcvt.s32.f32 %v1852
        %v1893 = vcvt.s32.f32 %v1853
        %v1894 = vcvt.s32.f32 %v1854
        %v1895 = vcvt.s32.f32 %v1855
        %1896 = vmatpush.msra.mxu0 %v1886
        %1897 = vmatpush.msra.mxu0 %v1884
        %1898 = vmatpush.msra.mxu0 %v1882
        %1899 = vmatpush.msra.mxu0 %v1880
        %1900 = vmatpush.msra.mxu0 %v1878
        %1901 = vmatpush.msra.mxu0 %v1876
        %1902 = vmatpush.msra.mxu0 %v1874
        %1903 = vmatpush.msra.mxu0 %v1872
        %1904 = vmatpush.msra.mxu0 %v1870
        %1905 = vmatpush.msra.mxu0 %v1868
        %1906 = vmatpush.msra.mxu0 %v1866
        %1907 = vmatpush.msra.mxu0 %v1864
        %1908 = vmatpush.msra.mxu0 %v1862
        %1909 = vmatpush.msra.mxu0 %v1860
        %1910 = vmatpush.msra.mxu0 %v1858
        %1911 = vmatpush.msra.mxu0 %v1856
        %1912 = vmatmul.f32.gmra.mxu0 %v823
        %v1913 = vpop.f32.mrf.mxu0
        %v1914 = vadd.f32 0.0, %v1913
        %1915 = vdwg.mxu0
        %1916 = vmatpush.msra.mxu0 0.0
        %1917 = vmatpush.msra.mxu0 0.0
        %1918 = vmatpush.msra.mxu0 0.0
        %1919 = vmatpush.msra.mxu0 0.0
        %1920 = vmatpush.msra.mxu0 0.0
        %1921 = vmatpush.msra.mxu0 0.0
        %1922 = vmatpush.msra.mxu0 0.0
        %1923 = vmatpush.msra.mxu0 0.0
        %1924 = vmatpush.msra.mxu0 0.0
        %1925 = vmatpush.msra.mxu0 0.0
        %1926 = vmatpush.msra.mxu0 0.0
        %1927 = vmatpush.msra.mxu0 0.0
        %1928 = vmatpush.msra.mxu0 %v1894
        %1929 = vmatpush.msra.mxu0 %v1892
        %1930 = vmatpush.msra.mxu0 %v1890
        %1931 = vmatpush.msra.mxu0 %v1888
        %1932 = vmatmul.f32.gmra.mxu0 %v827
        %v1933 = vpop.f32.mrf.mxu0
        %v1934 = vadd.f32 %v1914, %v1933
        %1935 = vdwg.mxu0
        %1936 = vmatpush.msra.mxu0 %v1887
        %1937 = vmatpush.msra.mxu0 %v1885
        %1938 = vmatpush.msra.mxu0 %v1883
        %1939 = vmatpush.msra.mxu0 %v1881
        %1940 = vmatpush.msra.mxu0 %v1879
        %1941 = vmatpush.msra.mxu0 %v1877
        %1942 = vmatpush.msra.mxu0 %v1875
        %1943 = vmatpush.msra.mxu0 %v1873
        %1944 = vmatpush.msra.mxu0 %v1871
        %1945 = vmatpush.msra.mxu0 %v1869
        %1946 = vmatpush.msra.mxu0 %v1867
        %1947 = vmatpush.msra.mxu0 %v1865
        %1948 = vmatpush.msra.mxu0 %v1863
        %1949 = vmatpush.msra.mxu0 %v1861
        %1950 = vmatpush.msra.mxu0 %v1859
        %1951 = vmatpush.msra.mxu0 %v1857
        %1952 = vmatmul.f32.gmra.mxu0 %v823
        %v1953 = vpop.f32.mrf.mxu0
        %v1954 = vadd.f32 0.0, %v1953
        %1955 = vdwg.mxu0
        %1956 = vmatpush.msra.mxu0 0.0
        %1957 = vmatpush.msra.mxu0 0.0
        %1958 = vmatpush.msra.mxu0 0.0
        %1959 = vmatpush.msra.mxu0 0.0
        %1960 = vmatpush.msra.mxu0 0.0
        %1961 = vmatpush.msra.mxu0 0.0
        %1962 = vmatpush.msra.mxu0 0.0
        %1963 = vmatpush.msra.mxu0 0.0
        %1964 = vmatpush.msra.mxu0 0.0
        %1965 = vmatpush.msra.mxu0 0.0
        %1966 = vmatpush.msra.mxu0 0.0
        %1967 = vmatpush.msra.mxu0 0.0
        %1968 = vmatpush.msra.mxu0 %v1895
        %1969 = vmatpush.msra.mxu0 %v1893
        %1970 = vmatpush.msra.mxu0 %v1891
        %1971 = vmatpush.msra.mxu0 %v1889
        %1972 = vmatmul.f32.gmra.mxu0 %v827
        %v1973 = vpop.f32.mrf.mxu0
        %v1974 = vadd.f32 %v1954, %v1973
        %1975 = vdwg.mxu0
        %s1976 = scalar_lea.vmem %s1, 20
        %v1977 = vld [vmem:[%s1976] sm:$0xf]
        %v1978 = vunpack.c.l.bf16 %v1977
        %1980 = vset.pattern.permute.xlu0 0
        %1981 = vperm.xlu0 %1980, %v1978
        %v1982 = vpop.permute.xlu0 %1981
        %v1984 = vperm.slane %v1934, 0
        %v1985 = vperm.slane %v1974, 0
        %v1986 = vmul.f32 %v1982, %v1984
        %v1987 = vmul.f32 %v1982, %v1985
        %v1988 = vadd.f32 %v1774, %v1986
        %v1989 = vadd.f32 %v1775, %v1987
        %s1990 = scalar_lea.vmem %s1, 24
        %v1991 = vld [vmem:[%s1990] sm:$0xf]
        %v1992 = vunpack.c.l.bf16 %v1991
        %1994 = vset.pattern.permute.xlu0 0
        %1995 = vperm.xlu0 %1994, %v1992
        %v1996 = vpop.permute.xlu0 %1995
        %v1999 = vmul.f32 %v1996, %v823
        %v2000 = vmul.f32 %v1996, %v824
        %v2001 = vadd.f32 %v1988, %v1999
        %v2002 = vadd.f32 %v1989, %v2000
        %v2003 = vld [vmem:[%s2] sm:$0xff]
        %2005 = vset.pattern.permute.xlu0 0
        %2006 = vperm.xlu0 %2005, %v2003
        %v2007 = vpop.permute.xlu0 %2006
        %v2009 = vadd.f32 %v2001, %v2007
        %v2010 = vadd.f32 %v2002, %v2007
        %vm2011 = vcmp.gt.f32.partialorder %v2009, 0.0
        %vm2012 = vcmp.gt.f32.partialorder %v2010, 0.0
        %v2013 = vmin.f32 %v2009, 0.0
        %v2014 = vmin.f32 %v2010, 0.0
        %v2015 = vmul.f32 %v2013, 1.442695
        %v2016 = vpow.pop %v2015
        %v2017 = vmul.f32 %v2014, 1.442695
        %v2018 = vpow.pop %v2017
        %v2019 = vsub.f32 %v2016, 1.0
        %v2020 = vsub.f32 %v2018, 1.0
        %v2021 = vsel %vm2011, %v2009, %v2019
        %v2022 = vsel %vm2012, %v2010, %v2020
        %v2024 = vsel %vm826, %v2022, 0
        %2026 = vmatpush.msra.mxu0 %v1672
        %2027 = vmatpush.msra.mxu0 %v1670
        %2028 = vmatpush.msra.mxu0 %v1668
        %2029 = vmatpush.msra.mxu0 %v1666
        %2030 = vmatpush.msra.mxu0 %v1664
        %2031 = vmatpush.msra.mxu0 %v1662
        %2032 = vmatpush.msra.mxu0 %v1660
        %2033 = vmatpush.msra.mxu0 %v1658
        %2034 = vmatpush.msra.mxu0 %v1656
        %2035 = vmatpush.msra.mxu0 %v1654
        %2036 = vmatpush.msra.mxu0 %v1652
        %2037 = vmatpush.msra.mxu0 %v1650
        %2038 = vmatpush.msra.mxu0 %v1648
        %2039 = vmatpush.msra.mxu0 %v1646
        %2040 = vmatpush.msra.mxu0 %v1644
        %2041 = vmatpush.msra.mxu0 %v1642
        %2042 = vmatmul.f32.gmra.mxu0 %v2021
        %v2043 = vpop.f32.mrf.mxu0
        %v2044 = vadd.f32 0.0, %v2043
        %2045 = vdwg.mxu0
        %2046 = vmatpush.msra.mxu0 0.0
        %2047 = vmatpush.msra.mxu0 0.0
        %2048 = vmatpush.msra.mxu0 0.0
        %2049 = vmatpush.msra.mxu0 0.0
        %2050 = vmatpush.msra.mxu0 0.0
        %2051 = vmatpush.msra.mxu0 0.0
        %2052 = vmatpush.msra.mxu0 0.0
        %2053 = vmatpush.msra.mxu0 0.0
        %2054 = vmatpush.msra.mxu0 0.0
        %2055 = vmatpush.msra.mxu0 0.0
        %2056 = vmatpush.msra.mxu0 0.0
        %2057 = vmatpush.msra.mxu0 0.0
        %2058 = vmatpush.msra.mxu0 %v1680
        %2059 = vmatpush.msra.mxu0 %v1678
        %2060 = vmatpush.msra.mxu0 %v1676
        %2061 = vmatpush.msra.mxu0 %v1674
        %2062 = vmatmul.f32.gmra.mxu0 %v2024
        %v2063 = vpop.f32.mrf.mxu0
        %v2064 = vadd.f32 %v2044, %v2063
        %2065 = vdwg.mxu0
        %2066 = vmatpush.msra.mxu0 %v1673
        %2067 = vmatpush.msra.mxu0 %v1671
        %2068 = vmatpush.msra.mxu0 %v1669
        %2069 = vmatpush.msra.mxu0 %v1667
        %2070 = vmatpush.msra.mxu0 %v1665
        %2071 = vmatpush.msra.mxu0 %v1663
        %2072 = vmatpush.msra.mxu0 %v1661
        %2073 = vmatpush.msra.mxu0 %v1659
        %2074 = vmatpush.msra.mxu0 %v1657
        %2075 = vmatpush.msra.mxu0 %v1655
        %2076 = vmatpush.msra.mxu0 %v1653
        %2077 = vmatpush.msra.mxu0 %v1651
        %2078 = vmatpush.msra.mxu0 %v1649
        %2079 = vmatpush.msra.mxu0 %v1647
        %2080 = vmatpush.msra.mxu0 %v1645
        %2081 = vmatpush.msra.mxu0 %v1643
        %2082 = vmatmul.f32.gmra.mxu0 %v2021
        %v2083 = vpop.f32.mrf.mxu0
        %v2084 = vadd.f32 0.0, %v2083
        %2085 = vdwg.mxu0
        %2086 = vmatpush.msra.mxu0 0.0
        %2087 = vmatpush.msra.mxu0 0.0
        %2088 = vmatpush.msra.mxu0 0.0
        %2089 = vmatpush.msra.mxu0 0.0
        %2090 = vmatpush.msra.mxu0 0.0
        %2091 = vmatpush.msra.mxu0 0.0
        %2092 = vmatpush.msra.mxu0 0.0
        %2093 = vmatpush.msra.mxu0 0.0
        %2094 = vmatpush.msra.mxu0 0.0
        %2095 = vmatpush.msra.mxu0 0.0
        %2096 = vmatpush.msra.mxu0 0.0
        %2097 = vmatpush.msra.mxu0 0.0
        %2098 = vmatpush.msra.mxu0 %v1681
        %2099 = vmatpush.msra.mxu0 %v1679
        %2100 = vmatpush.msra.mxu0 %v1677
        %2101 = vmatpush.msra.mxu0 %v1675
        %2102 = vmatmul.f32.gmra.mxu0 %v2024
        %v2103 = vpop.f32.mrf.mxu0
        %v2104 = vadd.f32 %v2084, %v2103
        %2105 = vdwg.mxu0
        %v2106 = vld [vmem:[%s3] sm:$0x3]
        %v2107 = vpack.c.bf16 %v2064, %v2064
        %v2108 = vpack.c.bf16 %v2104, %v2104
        %2109 = vmatpush.msra.mxu0 %v1886
        %2110 = vmatpush.msra.mxu0 %v1884
        %2111 = vmatpush.msra.mxu0 %v1882
        %2112 = vmatpush.msra.mxu0 %v1880
        %2113 = vmatpush.msra.mxu0 %v1878
        %2114 = vmatpush.msra.mxu0 %v1876
        %2115 = vmatpush.msra.mxu0 %v1874
        %2116 = vmatpush.msra.mxu0 %v1872
        %2117 = vmatpush.msra.mxu0 %v1870
        %2118 = vmatpush.msra.mxu0 %v1868
        %2119 = vmatpush.msra.mxu0 %v1866
        %2120 = vmatpush.msra.mxu0 %v1864
        %2121 = vmatpush.msra.mxu0 %v1862
        %2122 = vmatpush.msra.mxu0 %v1860
        %2123 = vmatpush.msra.mxu0 %v1858
        %2124 = vmatpush.msra.mxu0 %v1856
        %2125 = vmatmul.f32.gmra.mxu0 %v2021
        %v2126 = vpop.f32.mrf.mxu0
        %v2127 = vadd.f32 0.0, %v2126
        %2128 = vdwg.mxu0
        %2129 = vmatpush.msra.mxu0 0.0
        %2130 = vmatpush.msra.mxu0 0.0
        %2131 = vmatpush.msra.mxu0 0.0
        %2132 = vmatpush.msra.mxu0 0.0
        %2133 = vmatpush.msra.mxu0 0.0
        %2134 = vmatpush.msra.mxu0 0.0
        %2135 = vmatpush.msra.mxu0 0.0
        %2136 = vmatpush.msra.mxu0 0.0
        %2137 = vmatpush.msra.mxu0 0.0
        %2138 = vmatpush.msra.mxu0 0.0
        %2139 = vmatpush.msra.mxu0 0.0
        %2140 = vmatpush.msra.mxu0 0.0
        %2141 = vmatpush.msra.mxu0 %v1894
        %2142 = vmatpush.msra.mxu0 %v1892
        %2143 = vmatpush.msra.mxu0 %v1890
        %2144 = vmatpush.msra.mxu0 %v1888
        %2145 = vmatmul.f32.gmra.mxu0 %v2024
        %v2146 = vpop.f32.mrf.mxu0
        %v2147 = vadd.f32 %v2127, %v2146
        %2148 = vdwg.mxu0
        %2149 = vmatpush.msra.mxu0 %v1887
        %2150 = vmatpush.msra.mxu0 %v1885
        %2151 = vmatpush.msra.mxu0 %v1883
        %2152 = vmatpush.msra.mxu0 %v1881
        %2153 = vmatpush.msra.mxu0 %v1879
        %2154 = vmatpush.msra.mxu0 %v1877
        %2155 = vmatpush.msra.mxu0 %v1875
        %2156 = vmatpush.msra.mxu0 %v1873
        %2157 = vmatpush.msra.mxu0 %v1871
        %2158 = vmatpush.msra.mxu0 %v1869
        %2159 = vmatpush.msra.mxu0 %v1867
        %2160 = vmatpush.msra.mxu0 %v1865
        %2161 = vmatpush.msra.mxu0 %v1863
        %2162 = vmatpush.msra.mxu0 %v1861
        %2163 = vmatpush.msra.mxu0 %v1859
        %2164 = vmatpush.msra.mxu0 %v1857
        %2165 = vmatmul.f32.gmra.mxu0 %v2021
        %v2166 = vpop.f32.mrf.mxu0
        %v2167 = vadd.f32 0.0, %v2166
        %2168 = vdwg.mxu0
        %2169 = vmatpush.msra.mxu0 0.0
        %2170 = vmatpush.msra.mxu0 0.0
        %2171 = vmatpush.msra.mxu0 0.0
        %2172 = vmatpush.msra.mxu0 0.0
        %2173 = vmatpush.msra.mxu0 0.0
        %2174 = vmatpush.msra.mxu0 0.0
        %2175 = vmatpush.msra.mxu0 0.0
        %2176 = vmatpush.msra.mxu0 0.0
        %2177 = vmatpush.msra.mxu0 0.0
        %2178 = vmatpush.msra.mxu0 0.0
        %2179 = vmatpush.msra.mxu0 0.0
        %2180 = vmatpush.msra.mxu0 0.0
        %2181 = vmatpush.msra.mxu0 %v1895
        %2182 = vmatpush.msra.mxu0 %v1893
        %2183 = vmatpush.msra.mxu0 %v1891
        %2184 = vmatpush.msra.mxu0 %v1889
        %2185 = vmatmul.f32.gmra.mxu0 %v2024
        %v2186 = vpop.f32.mrf.mxu0
        %v2187 = vadd.f32 %v2167, %v2186
        %2188 = vdwg.mxu0
        %s2189 = scalar_lea.vmem %s3, 2
        %v2190 = vld [vmem:[%s2189] sm:$0x3]
        %v2191 = vpack.c.bf16 %v2147, %v2147
        %v2192 = vpack.c.bf16 %v2187, %v2187
        %vm2193 = vcmask 64512
        %v2195 = vsel %vm2193, %v2190, 0
        %vm2197 = vcmask 1043456
        %v2199 = vsel %vm2197, %v2191, 0
        %v2202 = vsel %vm2197, %v2192, 0
        %2204 = vmatpush.bf16.msra.mxu0 0
        %2205 = vmatpush.bf16.msra.mxu0 0
        %2206 = vmatpush.bf16.msra.mxu0 0
        %2207 = vmatpush.bf16.msra.mxu0 0
        %2208 = vmatpush.bf16.msra.mxu0 0
        %2209 = vmatpush.bf16.msra.mxu0 0
        %2210 = vmatpush.bf16.msra.mxu0 0
        %2211 = vmatpush.bf16.msra.mxu0 %v2199
        %2212 = vmatmul.bf16.gmra.mxu0 %v2195
        %v2213 = vpop.f32.mrf.mxu0
        %v2214 = vadd.f32 0.0, %v2213
        %v2215 = vpop.f32.mrf.mxu0
        %2216 = vdwg.mxu0
        %2217 = vmatpush.bf16.msra.mxu0 0
        %2218 = vmatpush.bf16.msra.mxu0 0
        %2219 = vmatpush.bf16.msra.mxu0 0
        %2220 = vmatpush.bf16.msra.mxu0 0
        %2221 = vmatpush.bf16.msra.mxu0 0
        %2222 = vmatpush.bf16.msra.mxu0 0
        %2223 = vmatpush.bf16.msra.mxu0 0
        %2224 = vmatpush.bf16.msra.mxu0 %v2202
        %2225 = vmatmul.bf16.gmra.mxu0 %v2195
        %v2226 = vpop.f32.mrf.mxu0
        %v2227 = vadd.f32 0.0, %v2226
        %v2228 = vpop.f32.mrf.mxu0
        %2229 = vdwg.mxu0
        %v2231 = vsel %vm2193, %v2106, 0
        %v2234 = vsel %vm2197, %v2107, 0
        %v2237 = vsel %vm2197, %v2108, 0
        %2239 = vmatpush.bf16.msra.mxu0 0
        %2240 = vmatpush.bf16.msra.mxu0 0
        %2241 = vmatpush.bf16.msra.mxu0 0
        %2242 = vmatpush.bf16.msra.mxu0 0
        %2243 = vmatpush.bf16.msra.mxu0 0
        %2244 = vmatpush.bf16.msra.mxu0 0
        %2245 = vmatpush.bf16.msra.mxu0 0
        %2246 = vmatpush.bf16.msra.mxu0 %v2234
        %2247 = vmatmul.bf16.gmra.mxu0 %v2231
        %v2248 = vpop.f32.mrf.mxu0
        %v2249 = vadd.f32 %v2214, %v2248
        %v2250 = vpop.f32.mrf.mxu0
        %2251 = vdwg.mxu0
        %2252 = vmatpush.bf16.msra.mxu0 0
        %2253 = vmatpush.bf16.msra.mxu0 0
        %2254 = vmatpush.bf16.msra.mxu0 0
        %2255 = vmatpush.bf16.msra.mxu0 0
        %2256 = vmatpush.bf16.msra.mxu0 0
        %2257 = vmatpush.bf16.msra.mxu0 0
        %2258 = vmatpush.bf16.msra.mxu0 0
        %2259 = vmatpush.bf16.msra.mxu0 %v2237
        %2260 = vmatmul.bf16.gmra.mxu0 %v2231
        %v2261 = vpop.f32.mrf.mxu0
        %v2262 = vadd.f32 %v2227, %v2261
        %v2263 = vpop.f32.mrf.mxu0
        %2264 = vdwg.mxu0
        %s2265 = scalar_lea.vmem %s3, 4
        %v2266 = vld [vmem:[%s2265] sm:$0x3]
        %v2267 = vpack.c.bf16 %v2021, %v2021
        %v2268 = vpack.c.bf16 %v2022, %v2022
        %v2270 = vsel %vm2193, %v2266, 0
        %v2273 = vsel %vm2197, %v2267, 0
        %v2276 = vsel %vm2197, %v2268, 0
        %2278 = vmatpush.bf16.msra.mxu0 0
        %2279 = vmatpush.bf16.msra.mxu0 0
        %2280 = vmatpush.bf16.msra.mxu0 0
        %2281 = vmatpush.bf16.msra.mxu0 0
        %2282 = vmatpush.bf16.msra.mxu0 0
        %2283 = vmatpush.bf16.msra.mxu0 0
        %2284 = vmatpush.bf16.msra.mxu0 0
        %2285 = vmatpush.bf16.msra.mxu0 %v2273
        %2286 = vmatmul.bf16.gmra.mxu0 %v2270
        %v2287 = vpop.f32.mrf.mxu0
        %v2288 = vadd.f32 0.0, %v2287
        %v2289 = vpop.f32.mrf.mxu0
        %2290 = vdwg.mxu0
        %2291 = vmatpush.bf16.msra.mxu0 0
        %2292 = vmatpush.bf16.msra.mxu0 0
        %2293 = vmatpush.bf16.msra.mxu0 0
        %2294 = vmatpush.bf16.msra.mxu0 0
        %2295 = vmatpush.bf16.msra.mxu0 0
        %2296 = vmatpush.bf16.msra.mxu0 0
        %2297 = vmatpush.bf16.msra.mxu0 0
        %2298 = vmatpush.bf16.msra.mxu0 %v2276
        %2299 = vmatmul.bf16.gmra.mxu0 %v2270
        %v2300 = vpop.f32.mrf.mxu0
        %v2301 = vadd.f32 0.0, %v2300
        %v2302 = vpop.f32.mrf.mxu0
        %2303 = vdwg.mxu0
        %v2304 = vadd.f32 %v2249, %v2288
        %v2305 = vadd.f32 %v2262, %v2301
        %v2306 = vld [vmem:[%s4] sm:$0xf]
        %2308 = vset.pattern.permute.xlu0 0
        %2309 = vperm.xlu0 %2308, %v2306
        %v2310 = vpop.permute.xlu0 %2309
        %v2312 = vadd.f32 %v2304, %v2310
        %v2313 = vadd.f32 %v2305, %v2310
        %vm2314 = vcmp.gt.f32.partialorder %v2312, 0.0
        %vm2315 = vcmp.gt.f32.partialorder %v2313, 0.0
        %v2316 = vmin.f32 %v2312, 0.0
        %v2317 = vmin.f32 %v2313, 0.0
        %v2318 = vmul.f32 %v2316, 1.442695
        %v2319 = vpow.pop %v2318
        %v2320 = vmul.f32 %v2317, 1.442695
        %v2321 = vpow.pop %v2320
        %v2322 = vsub.f32 %v2319, 1.0
        %v2323 = vsub.f32 %v2321, 1.0
        %v2324 = vsel %vm2314, %v2312, %v2322
        %v2325 = vsel %vm2315, %v2313, %v2323
        %v2326 = vld [vmem:[%s5] sm:$0xf]
        %v2327 = vpack.c.bf16 %v2324, %v2324
        %v2328 = vpack.c.bf16 %v2325, %v2325
        %v2329 = vld [vmem:[%s6] sm:$0xff]
        %2331 = vset.pattern.permute.xlu0 0
        %2332 = vperm.xlu0 %2331, %v2329
        %v2333 = vpop.permute.xlu0 %2332
        %vm2335 = vcmask 31744
        %v2337 = vsel %vm2335, %v2326, 0
        %vm2339 = vcmask 1041408
        %v2341 = vsel %vm2339, %v2327, 0
        %v2344 = vsel %vm2339, %v2328, 0
        %2346 = vmatpush.bf16.msra.mxu0 0
        %2347 = vmatpush.bf16.msra.mxu0 0
        %2348 = vmatpush.bf16.msra.mxu0 0
        %2349 = vmatpush.bf16.msra.mxu0 0
        %2350 = vmatpush.bf16.msra.mxu0 0
        %2351 = vmatpush.bf16.msra.mxu0 0
        %2352 = vmatpush.bf16.msra.mxu0 0
        %2353 = vmatpush.bf16.msra.mxu0 %v2341
        %2354 = vmatmul.bf16.gmra.mxu0 %v2337
        %v2355 = vpop.f32.mrf.mxu0
        %v2356 = vadd.f32 %v2333, %v2355
        %v2357 = vpop.f32.mrf.mxu0
        %2358 = vdwg.mxu0
        %2359 = vmatpush.bf16.msra.mxu0 0
        %2360 = vmatpush.bf16.msra.mxu0 0
        %2361 = vmatpush.bf16.msra.mxu0 0
        %2362 = vmatpush.bf16.msra.mxu0 0
        %2363 = vmatpush.bf16.msra.mxu0 0
        %2364 = vmatpush.bf16.msra.mxu0 0
        %2365 = vmatpush.bf16.msra.mxu0 0
        %2366 = vmatpush.bf16.msra.mxu0 %v2344
        %2367 = vmatmul.bf16.gmra.mxu0 %v2337
        %v2368 = vpop.f32.mrf.mxu0
        %v2369 = vadd.f32 %v2333, %v2368
        %v2370 = vpop.f32.mrf.mxu0
        %2371 = vdwg.mxu0
        %v2372 = vadd.f32 %v2009, %v2356
        %v2373 = vadd.f32 %v2010, %v2369
        %vm2374 = vcmp.gt.f32.partialorder %v2372, 0.0
        %vm2375 = vcmp.gt.f32.partialorder %v2373, 0.0
        %v2376 = vmin.f32 %v2372, 0.0
        %v2377 = vmin.f32 %v2373, 0.0
        %v2378 = vmul.f32 %v2376, 1.442695
        %v2379 = vpow.pop %v2378
        %v2380 = vmul.f32 %v2377, 1.442695
        %v2381 = vpow.pop %v2380
        %v2382 = vsub.f32 %v2379, 1.0
        %v2383 = vsub.f32 %v2381, 1.0
        %v2384 = vsel %vm2374, %v2372, %v2382
        %v2385 = vsel %vm2375, %v2373, %v2383
        %v2386 = vmul.u32 %v660, 2
        %v2387 = vsub.s32 %v639, %v2386
        %v2388 = vsub.s32 %v640, %v2386
        %v2389 = vsub.s32 %v641, %v2386
        %v2390 = vsub.s32 %v642, %v2386
        %v2391 = vsub.s32 %v643, %v2386
        %v2392 = vsub.s32 %v644, %v2386
        %v2393 = vsub.s32 %v645, %v2386
        %v2394 = vsub.s32 %v646, %v2386
        %v2395 = vsub.s32 %v647, %v2386
        %v2396 = vsub.s32 %v648, %v2386
        %v2397 = vsub.s32 %v649, %v2386
        %v2398 = vsub.s32 %v650, %v2386
        %v2399 = vsub.s32 %v651, %v2386
        %v2400 = vsub.s32 %v652, %v2386
        %v2401 = vsub.s32 %v653, %v2386
        %v2402 = vsub.s32 %v654, %v2386
        %v2403 = vsub.s32 %v655, %v2386
        %v2404 = vsub.s32 %v656, %v2386
        %v2405 = vsub.s32 %v657, %v2386
        %v2406 = vsub.s32 %v658, %v2386
        %vm2407 = vcmp.eq.s32.totalorder %v2387, 4294967294
        %vm2408 = vcmp.eq.s32.totalorder %v2388, 4294967294
        %vm2409 = vcmp.eq.s32.totalorder %v2389, 4294967294
        %vm2410 = vcmp.eq.s32.totalorder %v2390, 4294967294
        %vm2411 = vcmp.eq.s32.totalorder %v2391, 4294967294
        %vm2412 = vcmp.eq.s32.totalorder %v2392, 4294967294
        %vm2413 = vcmp.eq.s32.totalorder %v2393, 4294967294
        %vm2414 = vcmp.eq.s32.totalorder %v2394, 4294967294
        %vm2415 = vcmp.eq.s32.totalorder %v2395, 4294967294
        %vm2416 = vcmp.eq.s32.totalorder %v2396, 4294967294
        %vm2417 = vcmp.eq.s32.totalorder %v2397, 4294967294
        %vm2418 = vcmp.eq.s32.totalorder %v2398, 4294967294
        %vm2419 = vcmp.eq.s32.totalorder %v2399, 4294967294
        %vm2420 = vcmp.eq.s32.totalorder %v2400, 4294967294
        %vm2421 = vcmp.eq.s32.totalorder %v2401, 4294967294
        %vm2422 = vcmp.eq.s32.totalorder %v2402, 4294967294
        %vm2423 = vcmp.eq.s32.totalorder %v2403, 4294967294
        %vm2424 = vcmp.eq.s32.totalorder %v2404, 4294967294
        %vm2425 = vcmp.eq.s32.totalorder %v2405, 4294967294
        %vm2426 = vcmp.eq.s32.totalorder %v2406, 4294967294
        %v2427 = vsel %vm2407, 1, 0
        %v2428 = vsel %vm2408, 1, 0
        %v2429 = vsel %vm2409, 1, 0
        %v2430 = vsel %vm2410, 1, 0
        %v2431 = vsel %vm2411, 1, 0
        %v2432 = vsel %vm2412, 1, 0
        %v2433 = vsel %vm2413, 1, 0
        %v2434 = vsel %vm2414, 1, 0
        %v2435 = vsel %vm2415, 1, 0
        %v2436 = vsel %vm2416, 1, 0
        %v2437 = vsel %vm2417, 1, 0
        %v2438 = vsel %vm2418, 1, 0
        %v2439 = vsel %vm2419, 1, 0
        %v2440 = vsel %vm2420, 1, 0
        %v2441 = vsel %vm2421, 1, 0
        %v2442 = vsel %vm2422, 1, 0
        %v2443 = vsel %vm2423, 1, 0
        %v2444 = vsel %vm2424, 1, 0
        %v2445 = vsel %vm2425, 1, 0
        %v2446 = vsel %vm2426, 1, 0
        %v2447 = vcvt.s32.f32 %v2427
        %v2448 = vcvt.s32.f32 %v2428
        %v2449 = vcvt.s32.f32 %v2429
        %v2450 = vcvt.s32.f32 %v2430
        %v2451 = vcvt.s32.f32 %v2431
        %v2452 = vcvt.s32.f32 %v2432
        %v2453 = vcvt.s32.f32 %v2433
        %v2454 = vcvt.s32.f32 %v2434
        %v2455 = vcvt.s32.f32 %v2435
        %v2456 = vcvt.s32.f32 %v2436
        %v2457 = vcvt.s32.f32 %v2437
        %v2458 = vcvt.s32.f32 %v2438
        %v2459 = vcvt.s32.f32 %v2439
        %v2460 = vcvt.s32.f32 %v2440
        %v2461 = vcvt.s32.f32 %v2441
        %v2462 = vcvt.s32.f32 %v2442
        %v2463 = vcvt.s32.f32 %v2443
        %v2464 = vcvt.s32.f32 %v2444
        %v2465 = vcvt.s32.f32 %v2445
        %v2466 = vcvt.s32.f32 %v2446
        %v2468 = vsel %vm826, %v2385, 0
        %2470 = vmatpush.msra.mxu0 %v2462
        %2471 = vmatpush.msra.mxu0 %v2461
        %2472 = vmatpush.msra.mxu0 %v2460
        %2473 = vmatpush.msra.mxu0 %v2459
        %2474 = vmatpush.msra.mxu0 %v2458
        %2475 = vmatpush.msra.mxu0 %v2457
        %2476 = vmatpush.msra.mxu0 %v2456
        %2477 = vmatpush.msra.mxu0 %v2455
        %2478 = vmatpush.msra.mxu0 %v2454
        %2479 = vmatpush.msra.mxu0 %v2453
        %2480 = vmatpush.msra.mxu0 %v2452
        %2481 = vmatpush.msra.mxu0 %v2451
        %2482 = vmatpush.msra.mxu0 %v2450
        %2483 = vmatpush.msra.mxu0 %v2449
        %2484 = vmatpush.msra.mxu0 %v2448
        %2485 = vmatpush.msra.mxu0 %v2447
        %2486 = vmatmul.f32.gmra.mxu0 %v2384
        %v2487 = vpop.f32.mrf.mxu0
        %v2488 = vadd.f32 0.0, %v2487
        %2489 = vdwg.mxu0
        %2490 = vmatpush.msra.mxu0 0.0
        %2491 = vmatpush.msra.mxu0 0.0
        %2492 = vmatpush.msra.mxu0 0.0
        %2493 = vmatpush.msra.mxu0 0.0
        %2494 = vmatpush.msra.mxu0 0.0
        %2495 = vmatpush.msra.mxu0 0.0
        %2496 = vmatpush.msra.mxu0 0.0
        %2497 = vmatpush.msra.mxu0 0.0
        %2498 = vmatpush.msra.mxu0 0.0
        %2499 = vmatpush.msra.mxu0 0.0
        %2500 = vmatpush.msra.mxu0 0.0
        %2501 = vmatpush.msra.mxu0 0.0
        %2502 = vmatpush.msra.mxu0 %v2466
        %2503 = vmatpush.msra.mxu0 %v2465
        %2504 = vmatpush.msra.mxu0 %v2464
        %2505 = vmatpush.msra.mxu0 %v2463
        %2506 = vmatmul.f32.gmra.mxu0 %v2468
        %v2507 = vpop.f32.mrf.mxu0
        %v2508 = vadd.f32 %v2488, %v2507
        %2509 = vdwg.mxu0
        %v2510 = vld [vmem:[%s7] sm:$0xf]
        %v2511 = vld [vmem:[%s7 + $0x4] sm:$0xf]
        %v2512 = vpack.c.bf16 %v2508, %v2508
        %vm2513 = vcmp.eq.s32.totalorder %v2387, 4294967295
        %vm2514 = vcmp.eq.s32.totalorder %v2388, 4294967295
        %vm2515 = vcmp.eq.s32.totalorder %v2389, 4294967295
        %vm2516 = vcmp.eq.s32.totalorder %v2390, 4294967295
        %vm2517 = vcmp.eq.s32.totalorder %v2391, 4294967295
        %vm2518 = vcmp.eq.s32.totalorder %v2392, 4294967295
        %vm2519 = vcmp.eq.s32.totalorder %v2393, 4294967295
        %vm2520 = vcmp.eq.s32.totalorder %v2394, 4294967295
        %vm2521 = vcmp.eq.s32.totalorder %v2395, 4294967295
        %vm2522 = vcmp.eq.s32.totalorder %v2396, 4294967295
        %vm2523 = vcmp.eq.s32.totalorder %v2397, 4294967295
        %vm2524 = vcmp.eq.s32.totalorder %v2398, 4294967295
        %vm2525 = vcmp.eq.s32.totalorder %v2399, 4294967295
        %vm2526 = vcmp.eq.s32.totalorder %v2400, 4294967295
        %vm2527 = vcmp.eq.s32.totalorder %v2401, 4294967295
        %vm2528 = vcmp.eq.s32.totalorder %v2402, 4294967295
        %vm2529 = vcmp.eq.s32.totalorder %v2403, 4294967295
        %vm2530 = vcmp.eq.s32.totalorder %v2404, 4294967295
        %vm2531 = vcmp.eq.s32.totalorder %v2405, 4294967295
        %vm2532 = vcmp.eq.s32.totalorder %v2406, 4294967295
        %v2533 = vsel %vm2513, 1, 0
        %v2534 = vsel %vm2514, 1, 0
        %v2535 = vsel %vm2515, 1, 0
        %v2536 = vsel %vm2516, 1, 0
        %v2537 = vsel %vm2517, 1, 0
        %v2538 = vsel %vm2518, 1, 0
        %v2539 = vsel %vm2519, 1, 0
        %v2540 = vsel %vm2520, 1, 0
        %v2541 = vsel %vm2521, 1, 0
        %v2542 = vsel %vm2522, 1, 0
        %v2543 = vsel %vm2523, 1, 0
        %v2544 = vsel %vm2524, 1, 0
        %v2545 = vsel %vm2525, 1, 0
        %v2546 = vsel %vm2526, 1, 0
        %v2547 = vsel %vm2527, 1, 0
        %v2548 = vsel %vm2528, 1, 0
        %v2549 = vsel %vm2529, 1, 0
        %v2550 = vsel %vm2530, 1, 0
        %v2551 = vsel %vm2531, 1, 0
        %v2552 = vsel %vm2532, 1, 0
        %v2553 = vcvt.s32.f32 %v2533
        %v2554 = vcvt.s32.f32 %v2534
        %v2555 = vcvt.s32.f32 %v2535
        %v2556 = vcvt.s32.f32 %v2536
        %v2557 = vcvt.s32.f32 %v2537
        %v2558 = vcvt.s32.f32 %v2538
        %v2559 = vcvt.s32.f32 %v2539
        %v2560 = vcvt.s32.f32 %v2540
        %v2561 = vcvt.s32.f32 %v2541
        %v2562 = vcvt.s32.f32 %v2542
        %v2563 = vcvt.s32.f32 %v2543
        %v2564 = vcvt.s32.f32 %v2544
        %v2565 = vcvt.s32.f32 %v2545
        %v2566 = vcvt.s32.f32 %v2546
        %v2567 = vcvt.s32.f32 %v2547
        %v2568 = vcvt.s32.f32 %v2548
        %v2569 = vcvt.s32.f32 %v2549
        %v2570 = vcvt.s32.f32 %v2550
        %v2571 = vcvt.s32.f32 %v2551
        %v2572 = vcvt.s32.f32 %v2552
        %2573 = vmatpush.msra.mxu0 %v2568
        %2574 = vmatpush.msra.mxu0 %v2567
        %2575 = vmatpush.msra.mxu0 %v2566
        %2576 = vmatpush.msra.mxu0 %v2565
        %2577 = vmatpush.msra.mxu0 %v2564
        %2578 = vmatpush.msra.mxu0 %v2563
        %2579 = vmatpush.msra.mxu0 %v2562
        %2580 = vmatpush.msra.mxu0 %v2561
        %2581 = vmatpush.msra.mxu0 %v2560
        %2582 = vmatpush.msra.mxu0 %v2559
        %2583 = vmatpush.msra.mxu0 %v2558
        %2584 = vmatpush.msra.mxu0 %v2557
        %2585 = vmatpush.msra.mxu0 %v2556
        %2586 = vmatpush.msra.mxu0 %v2555
        %2587 = vmatpush.msra.mxu0 %v2554
        %2588 = vmatpush.msra.mxu0 %v2553
        %2589 = vmatmul.f32.gmra.mxu0 %v2384
        %v2590 = vpop.f32.mrf.mxu0
        %v2591 = vadd.f32 0.0, %v2590
        %2592 = vdwg.mxu0
        %2593 = vmatpush.msra.mxu0 0.0
        %2594 = vmatpush.msra.mxu0 0.0
        %2595 = vmatpush.msra.mxu0 0.0
        %2596 = vmatpush.msra.mxu0 0.0
        %2597 = vmatpush.msra.mxu0 0.0
        %2598 = vmatpush.msra.mxu0 0.0
        %2599 = vmatpush.msra.mxu0 0.0
        %2600 = vmatpush.msra.mxu0 0.0
        %2601 = vmatpush.msra.mxu0 0.0
        %2602 = vmatpush.msra.mxu0 0.0
        %2603 = vmatpush.msra.mxu0 0.0
        %2604 = vmatpush.msra.mxu0 0.0
        %2605 = vmatpush.msra.mxu0 %v2572
        %2606 = vmatpush.msra.mxu0 %v2571
        %2607 = vmatpush.msra.mxu0 %v2570
        %2608 = vmatpush.msra.mxu0 %v2569
        %2609 = vmatmul.f32.gmra.mxu0 %v2468
        %v2610 = vpop.f32.mrf.mxu0
        %v2611 = vadd.f32 %v2591, %v2610
        %2612 = vdwg.mxu0
        %s2613 = scalar_lea.vmem %s7, 8
        %v2614 = vld [vmem:[%s2613] sm:$0xf]
        %v2615 = vld [vmem:[%s2613 + $0x4] sm:$0xf]
        %v2616 = vpack.c.bf16 %v2611, %v2611
        %v2619 = vunpack.c.l.b16 %v2614
        %v2620 = vunpack.c.l.b16 %v2615
        %v2621 = vpack.c.b16 %v2620, %v2619
        %v2623 = vsel %vm2193, %v2621, 0
        %v2626 = vsel %vm2197, %v2616, 0
        %2628 = vmatpush.bf16.msra.mxu0 0
        %2629 = vmatpush.bf16.msra.mxu0 0
        %2630 = vmatpush.bf16.msra.mxu0 0
        %2631 = vmatpush.bf16.msra.mxu0 0
        %2632 = vmatpush.bf16.msra.mxu0 0
        %2633 = vmatpush.bf16.msra.mxu0 0
        %2634 = vmatpush.bf16.msra.mxu0 0
        %2635 = vmatpush.bf16.msra.mxu0 %v2626
        %2636 = vmatmul.bf16.gmra.mxu0 %v2623
        %v2637 = vpop.f32.mrf.mxu0
        %v2638 = vadd.f32 0.0, %v2637
        %v2639 = vpop.f32.mrf.mxu0
        %v2640 = vadd.f32 0.0, %v2639
        %2641 = vdwg.mxu0
        %v2644 = vunpack.c.l.b16 %v2510
        %v2645 = vunpack.c.l.b16 %v2511
        %v2646 = vpack.c.b16 %v2645, %v2644
        %v2648 = vsel %vm2193, %v2646, 0
        %v2651 = vsel %vm2197, %v2512, 0
        %2653 = vmatpush.bf16.msra.mxu0 0
        %2654 = vmatpush.bf16.msra.mxu0 0
        %2655 = vmatpush.bf16.msra.mxu0 0
        %2656 = vmatpush.bf16.msra.mxu0 0
        %2657 = vmatpush.bf16.msra.mxu0 0
        %2658 = vmatpush.bf16.msra.mxu0 0
        %2659 = vmatpush.bf16.msra.mxu0 0
        %2660 = vmatpush.bf16.msra.mxu0 %v2651
        %2661 = vmatmul.bf16.gmra.mxu0 %v2648
        %v2662 = vpop.f32.mrf.mxu0
        %v2663 = vadd.f32 %v2638, %v2662
        %v2664 = vpop.f32.mrf.mxu0
        %v2665 = vadd.f32 %v2640, %v2664
        %2666 = vdwg.mxu0
        %vm2667 = vcmp.eq.s32.totalorder %v2387, 0
        %vm2668 = vcmp.eq.s32.totalorder %v2388, 0
        %vm2669 = vcmp.eq.s32.totalorder %v2389, 0
        %vm2670 = vcmp.eq.s32.totalorder %v2390, 0
        %vm2671 = vcmp.eq.s32.totalorder %v2391, 0
        %vm2672 = vcmp.eq.s32.totalorder %v2392, 0
        %vm2673 = vcmp.eq.s32.totalorder %v2393, 0
        %vm2674 = vcmp.eq.s32.totalorder %v2394, 0
        %vm2675 = vcmp.eq.s32.totalorder %v2395, 0
        %vm2676 = vcmp.eq.s32.totalorder %v2396, 0
        %vm2677 = vcmp.eq.s32.totalorder %v2397, 0
        %vm2678 = vcmp.eq.s32.totalorder %v2398, 0
        %vm2679 = vcmp.eq.s32.totalorder %v2399, 0
        %vm2680 = vcmp.eq.s32.totalorder %v2400, 0
        %vm2681 = vcmp.eq.s32.totalorder %v2401, 0
        %vm2682 = vcmp.eq.s32.totalorder %v2402, 0
        %vm2683 = vcmp.eq.s32.totalorder %v2403, 0
        %vm2684 = vcmp.eq.s32.totalorder %v2404, 0
        %vm2685 = vcmp.eq.s32.totalorder %v2405, 0
        %vm2686 = vcmp.eq.s32.totalorder %v2406, 0
        %v2687 = vsel %vm2667, 1, 0
        %v2688 = vsel %vm2668, 1, 0
        %v2689 = vsel %vm2669, 1, 0
        %v2690 = vsel %vm2670, 1, 0
        %v2691 = vsel %vm2671, 1, 0
        %v2692 = vsel %vm2672, 1, 0
        %v2693 = vsel %vm2673, 1, 0
        %v2694 = vsel %vm2674, 1, 0
        %v2695 = vsel %vm2675, 1, 0
        %v2696 = vsel %vm2676, 1, 0
        %v2697 = vsel %vm2677, 1, 0
        %v2698 = vsel %vm2678, 1, 0
        %v2699 = vsel %vm2679, 1, 0
        %v2700 = vsel %vm2680, 1, 0
        %v2701 = vsel %vm2681, 1, 0
        %v2702 = vsel %vm2682, 1, 0
        %v2703 = vsel %vm2683, 1, 0
        %v2704 = vsel %vm2684, 1, 0
        %v2705 = vsel %vm2685, 1, 0
        %v2706 = vsel %vm2686, 1, 0
        %v2707 = vcvt.s32.f32 %v2687
        %v2708 = vcvt.s32.f32 %v2688
        %v2709 = vcvt.s32.f32 %v2689
        %v2710 = vcvt.s32.f32 %v2690
        %v2711 = vcvt.s32.f32 %v2691
        %v2712 = vcvt.s32.f32 %v2692
        %v2713 = vcvt.s32.f32 %v2693
        %v2714 = vcvt.s32.f32 %v2694
        %v2715 = vcvt.s32.f32 %v2695
        %v2716 = vcvt.s32.f32 %v2696
        %v2717 = vcvt.s32.f32 %v2697
        %v2718 = vcvt.s32.f32 %v2698
        %v2719 = vcvt.s32.f32 %v2699
        %v2720 = vcvt.s32.f32 %v2700
        %v2721 = vcvt.s32.f32 %v2701
        %v2722 = vcvt.s32.f32 %v2702
        %v2723 = vcvt.s32.f32 %v2703
        %v2724 = vcvt.s32.f32 %v2704
        %v2725 = vcvt.s32.f32 %v2705
        %v2726 = vcvt.s32.f32 %v2706
        %2727 = vmatpush.msra.mxu0 %v2722
        %2728 = vmatpush.msra.mxu0 %v2721
        %2729 = vmatpush.msra.mxu0 %v2720
        %2730 = vmatpush.msra.mxu0 %v2719
        %2731 = vmatpush.msra.mxu0 %v2718
        %2732 = vmatpush.msra.mxu0 %v2717
        %2733 = vmatpush.msra.mxu0 %v2716
        %2734 = vmatpush.msra.mxu0 %v2715
        %2735 = vmatpush.msra.mxu0 %v2714
        %2736 = vmatpush.msra.mxu0 %v2713
        %2737 = vmatpush.msra.mxu0 %v2712
        %2738 = vmatpush.msra.mxu0 %v2711
        %2739 = vmatpush.msra.mxu0 %v2710
        %2740 = vmatpush.msra.mxu0 %v2709
        %2741 = vmatpush.msra.mxu0 %v2708
        %2742 = vmatpush.msra.mxu0 %v2707
        %2743 = vmatmul.f32.gmra.mxu0 %v2384
        %v2744 = vpop.f32.mrf.mxu0
        %v2745 = vadd.f32 0.0, %v2744
        %2746 = vdwg.mxu0
        %2747 = vmatpush.msra.mxu0 0.0
        %2748 = vmatpush.msra.mxu0 0.0
        %2749 = vmatpush.msra.mxu0 0.0
        %2750 = vmatpush.msra.mxu0 0.0
        %2751 = vmatpush.msra.mxu0 0.0
        %2752 = vmatpush.msra.mxu0 0.0
        %2753 = vmatpush.msra.mxu0 0.0
        %2754 = vmatpush.msra.mxu0 0.0
        %2755 = vmatpush.msra.mxu0 0.0
        %2756 = vmatpush.msra.mxu0 0.0
        %2757 = vmatpush.msra.mxu0 0.0
        %2758 = vmatpush.msra.mxu0 0.0
        %2759 = vmatpush.msra.mxu0 %v2726
        %2760 = vmatpush.msra.mxu0 %v2725
        %2761 = vmatpush.msra.mxu0 %v2724
        %2762 = vmatpush.msra.mxu0 %v2723
        %2763 = vmatmul.f32.gmra.mxu0 %v2468
        %v2764 = vpop.f32.mrf.mxu0
        %v2765 = vadd.f32 %v2745, %v2764
        %2766 = vdwg.mxu0
        %s2767 = scalar_lea.vmem %s7, 16
        %v2768 = vld [vmem:[%s2767] sm:$0xf]
        %v2769 = vld [vmem:[%s2767 + $0x4] sm:$0xf]
        %v2770 = vpack.c.bf16 %v2765, %v2765
        %v2773 = vunpack.c.l.b16 %v2768
        %v2774 = vunpack.c.l.b16 %v2769
        %v2775 = vpack.c.b16 %v2774, %v2773
        %v2777 = vsel %vm2193, %v2775, 0
        %v2780 = vsel %vm2197, %v2770, 0
        %2782 = vmatpush.bf16.msra.mxu0 0
        %2783 = vmatpush.bf16.msra.mxu0 0
        %2784 = vmatpush.bf16.msra.mxu0 0
        %2785 = vmatpush.bf16.msra.mxu0 0
        %2786 = vmatpush.bf16.msra.mxu0 0
        %2787 = vmatpush.bf16.msra.mxu0 0
        %2788 = vmatpush.bf16.msra.mxu0 0
        %2789 = vmatpush.bf16.msra.mxu0 %v2780
        %2790 = vmatmul.bf16.gmra.mxu0 %v2777
        %v2791 = vpop.f32.mrf.mxu0
        %v2792 = vadd.f32 0.0, %v2791
        %v2793 = vpop.f32.mrf.mxu0
        %v2794 = vadd.f32 0.0, %v2793
        %2795 = vdwg.mxu0
        %v2796 = vadd.f32 %v2663, %v2792
        %v2797 = vadd.f32 %v2665, %v2794
        %vm2798 = vcmp.eq.s32.totalorder %v2387, 1
        %vm2799 = vcmp.eq.s32.totalorder %v2388, 1
        %vm2800 = vcmp.eq.s32.totalorder %v2389, 1
        %vm2801 = vcmp.eq.s32.totalorder %v2390, 1
        %vm2802 = vcmp.eq.s32.totalorder %v2391, 1
        %vm2803 = vcmp.eq.s32.totalorder %v2392, 1
        %vm2804 = vcmp.eq.s32.totalorder %v2393, 1
        %vm2805 = vcmp.eq.s32.totalorder %v2394, 1
        %vm2806 = vcmp.eq.s32.totalorder %v2395, 1
        %vm2807 = vcmp.eq.s32.totalorder %v2396, 1
        %vm2808 = vcmp.eq.s32.totalorder %v2397, 1
        %vm2809 = vcmp.eq.s32.totalorder %v2398, 1
        %vm2810 = vcmp.eq.s32.totalorder %v2399, 1
        %vm2811 = vcmp.eq.s32.totalorder %v2400, 1
        %vm2812 = vcmp.eq.s32.totalorder %v2401, 1
        %vm2813 = vcmp.eq.s32.totalorder %v2402, 1
        %vm2814 = vcmp.eq.s32.totalorder %v2403, 1
        %vm2815 = vcmp.eq.s32.totalorder %v2404, 1
        %vm2816 = vcmp.eq.s32.totalorder %v2405, 1
        %vm2817 = vcmp.eq.s32.totalorder %v2406, 1
        %v2818 = vsel %vm2798, 1, 0
        %v2819 = vsel %vm2799, 1, 0
        %v2820 = vsel %vm2800, 1, 0
        %v2821 = vsel %vm2801, 1, 0
        %v2822 = vsel %vm2802, 1, 0
        %v2823 = vsel %vm2803, 1, 0
        %v2824 = vsel %vm2804, 1, 0
        %v2825 = vsel %vm2805, 1, 0
        %v2826 = vsel %vm2806, 1, 0
        %v2827 = vsel %vm2807, 1, 0
        %v2828 = vsel %vm2808, 1, 0
        %v2829 = vsel %vm2809, 1, 0
        %v2830 = vsel %vm2810, 1, 0
        %v2831 = vsel %vm2811, 1, 0
        %v2832 = vsel %vm2812, 1, 0
        %v2833 = vsel %vm2813, 1, 0
        %v2834 = vsel %vm2814, 1, 0
        %v2835 = vsel %vm2815, 1, 0
        %v2836 = vsel %vm2816, 1, 0
        %v2837 = vsel %vm2817, 1, 0
        %v2838 = vcvt.s32.f32 %v2818
        %v2839 = vcvt.s32.f32 %v2819
        %v2840 = vcvt.s32.f32 %v2820
        %v2841 = vcvt.s32.f32 %v2821
        %v2842 = vcvt.s32.f32 %v2822
        %v2843 = vcvt.s32.f32 %v2823
        %v2844 = vcvt.s32.f32 %v2824
        %v2845 = vcvt.s32.f32 %v2825
        %v2846 = vcvt.s32.f32 %v2826
        %v2847 = vcvt.s32.f32 %v2827
        %v2848 = vcvt.s32.f32 %v2828
        %v2849 = vcvt.s32.f32 %v2829
        %v2850 = vcvt.s32.f32 %v2830
        %v2851 = vcvt.s32.f32 %v2831
        %v2852 = vcvt.s32.f32 %v2832
        %v2853 = vcvt.s32.f32 %v2833
        %v2854 = vcvt.s32.f32 %v2834
        %v2855 = vcvt.s32.f32 %v2835
        %v2856 = vcvt.s32.f32 %v2836
        %v2857 = vcvt.s32.f32 %v2837
        %2858 = vmatpush.msra.mxu0 %v2853
        %2859 = vmatpush.msra.mxu0 %v2852
        %2860 = vmatpush.msra.mxu0 %v2851
        %2861 = vmatpush.msra.mxu0 %v2850
        %2862 = vmatpush.msra.mxu0 %v2849
        %2863 = vmatpush.msra.mxu0 %v2848
        %2864 = vmatpush.msra.mxu0 %v2847
        %2865 = vmatpush.msra.mxu0 %v2846
        %2866 = vmatpush.msra.mxu0 %v2845
        %2867 = vmatpush.msra.mxu0 %v2844
        %2868 = vmatpush.msra.mxu0 %v2843
        %2869 = vmatpush.msra.mxu0 %v2842
        %2870 = vmatpush.msra.mxu0 %v2841
        %2871 = vmatpush.msra.mxu0 %v2840
        %2872 = vmatpush.msra.mxu0 %v2839
        %2873 = vmatpush.msra.mxu0 %v2838
        %2874 = vmatmul.f32.gmra.mxu0 %v2384
        %v2875 = vpop.f32.mrf.mxu0
        %v2876 = vadd.f32 0.0, %v2875
        %2877 = vdwg.mxu0
        %2878 = vmatpush.msra.mxu0 0.0
        %2879 = vmatpush.msra.mxu0 0.0
        %2880 = vmatpush.msra.mxu0 0.0
        %2881 = vmatpush.msra.mxu0 0.0
        %2882 = vmatpush.msra.mxu0 0.0
        %2883 = vmatpush.msra.mxu0 0.0
        %2884 = vmatpush.msra.mxu0 0.0
        %2885 = vmatpush.msra.mxu0 0.0
        %2886 = vmatpush.msra.mxu0 0.0
        %2887 = vmatpush.msra.mxu0 0.0
        %2888 = vmatpush.msra.mxu0 0.0
        %2889 = vmatpush.msra.mxu0 0.0
        %2890 = vmatpush.msra.mxu0 %v2857
        %2891 = vmatpush.msra.mxu0 %v2856
        %2892 = vmatpush.msra.mxu0 %v2855
        %2893 = vmatpush.msra.mxu0 %v2854
        %2894 = vmatmul.f32.gmra.mxu0 %v2468
        %v2895 = vpop.f32.mrf.mxu0
        %v2896 = vadd.f32 %v2876, %v2895
        %2897 = vdwg.mxu0
        %s2898 = scalar_lea.vmem %s7, 24
        %v2899 = vld [vmem:[%s2898] sm:$0xf]
        %v2900 = vld [vmem:[%s2898 + $0x4] sm:$0xf]
        %v2901 = vpack.c.bf16 %v2896, %v2896
        %v2904 = vunpack.c.l.b16 %v2899
        %v2905 = vunpack.c.l.b16 %v2900
        %v2906 = vpack.c.b16 %v2905, %v2904
        %v2908 = vsel %vm2193, %v2906, 0
        %v2911 = vsel %vm2197, %v2901, 0
        %2913 = vmatpush.bf16.msra.mxu0 0
        %2914 = vmatpush.bf16.msra.mxu0 0
        %2915 = vmatpush.bf16.msra.mxu0 0
        %2916 = vmatpush.bf16.msra.mxu0 0
        %2917 = vmatpush.bf16.msra.mxu0 0
        %2918 = vmatpush.bf16.msra.mxu0 0
        %2919 = vmatpush.bf16.msra.mxu0 0
        %2920 = vmatpush.bf16.msra.mxu0 %v2911
        %2921 = vmatmul.bf16.gmra.mxu0 %v2908
        %v2922 = vpop.f32.mrf.mxu0
        %v2923 = vadd.f32 0.0, %v2922
        %v2924 = vpop.f32.mrf.mxu0
        %v2925 = vadd.f32 0.0, %v2924
        %2926 = vdwg.mxu0
        %v2927 = vadd.f32 %v2796, %v2923
        %v2928 = vadd.f32 %v2797, %v2925
        %v2929 = vld [vmem:[%s8] sm:$0xff]
        %v2930 = vld [vmem:[%s8 + $0x8] sm:$0xff]
        %2932 = vset.pattern.permute.xlu0 0
        %2933 = vperm.xlu0 %2932, %v2929
        %v2934 = vpop.permute.xlu0 %2933
        %2937 = vset.pattern.permute.xlu0 0
        %2938 = vperm.xlu0 %2937, %v2930
        %v2939 = vpop.permute.xlu0 %2938
        %v2941 = vadd.f32 %v2927, %v2934
        %v2942 = vadd.f32 %v2928, %v2939
        %vm2943 = vcmp.gt.f32.partialorder %v2941, 0.0
        %vm2944 = vcmp.gt.f32.partialorder %v2942, 0.0
        %v2945 = vmin.f32 %v2941, 0.0
        %v2946 = vmin.f32 %v2942, 0.0
        %v2947 = vmul.f32 %v2945, 1.442695
        %v2948 = vpow.pop %v2947
        %v2949 = vmul.f32 %v2946, 1.442695
        %v2950 = vpow.pop %v2949
        %v2951 = vsub.f32 %v2948, 1.0
        %v2952 = vsub.f32 %v2950, 1.0
        %v2953 = vsel %vm2943, %v2941, %v2951
        %v2954 = vsel %vm2944, %v2942, %v2952
        %vm2955 = vcmask 654336
        %v2957 = vsel %vm2955, %v2953, 0
        %v2960 = vsel %vm2955, %v2954, 0
        %2962 = vmatpush.msra.mxu0 0.0
        %2963 = vmatpush.msra.mxu0 0.0
        %2964 = vmatpush.msra.mxu0 0.0
        %2965 = vmatpush.msra.mxu0 0.0
        %2966 = vmatpush.msra.mxu0 0.0
        %2967 = vmatpush.msra.mxu0 0.0
        %2968 = vmatpush.msra.mxu0 %v1660
        %2969 = vmatpush.msra.mxu0 %v1658
        %2970 = vmatpush.msra.mxu0 %v1656
        %2971 = vmatpush.msra.mxu0 %v1654
        %2972 = vmatpush.msra.mxu0 %v1652
        %2973 = vmatpush.msra.mxu0 %v1650
        %2974 = vmatpush.msra.mxu0 %v1648
        %2975 = vmatpush.msra.mxu0 %v1646
        %2976 = vmatpush.msra.mxu0 %v1644
        %2977 = vmatpush.msra.mxu0 %v1642
        %2978 = vmatmul.f32.gmra.mxu0 %v2957
        %v2979 = vpop.f32.mrf.mxu0
        %v2980 = vadd.f32 0.0, %v2979
        %2981 = vmatmul.f32.gmra.mxu0 %v2960
        %v2982 = vpop.f32.mrf.mxu0
        %v2983 = vadd.f32 0.0, %v2982
        %2984 = vdwg.mxu0
        %v2985 = vld [vmem:[%s9] sm:$0xf]
        %v2986 = vpack.c.bf16 %v2983, %v2980
        %2987 = vmatpush.msra.mxu0 0.0
        %2988 = vmatpush.msra.mxu0 0.0
        %2989 = vmatpush.msra.mxu0 0.0
        %2990 = vmatpush.msra.mxu0 0.0
        %2991 = vmatpush.msra.mxu0 0.0
        %2992 = vmatpush.msra.mxu0 0.0
        %2993 = vmatpush.msra.mxu0 %v1874
        %2994 = vmatpush.msra.mxu0 %v1872
        %2995 = vmatpush.msra.mxu0 %v1870
        %2996 = vmatpush.msra.mxu0 %v1868
        %2997 = vmatpush.msra.mxu0 %v1866
        %2998 = vmatpush.msra.mxu0 %v1864
        %2999 = vmatpush.msra.mxu0 %v1862
        %3000 = vmatpush.msra.mxu0 %v1860
        %3001 = vmatpush.msra.mxu0 %v1858
        %3002 = vmatpush.msra.mxu0 %v1856
        %3003 = vmatmul.f32.gmra.mxu0 %v2957
        %v3004 = vpop.f32.mrf.mxu0
        %v3005 = vadd.f32 0.0, %v3004
        %3006 = vmatmul.f32.gmra.mxu0 %v2960
        %v3007 = vpop.f32.mrf.mxu0
        %v3008 = vadd.f32 0.0, %v3007
        %3009 = vdwg.mxu0
        %s3010 = scalar_lea.vmem %s9, 4
        %v3011 = vld [vmem:[%s3010] sm:$0xf]
        %v3012 = vpack.c.bf16 %v3008, %v3005
        %vm3013 = vcmask 130048
        %v3015 = vsel %vm3013, %v3011, 0
        %3017 = vmatpush.bf16.msra.mxu0 0
        %3018 = vmatpush.bf16.msra.mxu0 0
        %3019 = vmatpush.bf16.msra.mxu0 0
        %3020 = vmatpush.bf16.msra.mxu0 0
        %3021 = vmatpush.bf16.msra.mxu0 0
        %3022 = vmatpush.bf16.msra.mxu0 0
        %3023 = vmatpush.bf16.msra.mxu0 0
        %3024 = vmatpush.bf16.msra.mxu0 %v3012
        %3025 = vmatmul.bf16.gmra.mxu0 %v3015
        %v3026 = vpop.f32.mrf.mxu0
        %v3027 = vadd.f32 0.0, %v3026
        %v3028 = vpop.f32.mrf.mxu0
        %3029 = vdwg.mxu0
        %v3031 = vsel %vm3013, %v2985, 0
        %3033 = vmatpush.bf16.msra.mxu0 0
        %3034 = vmatpush.bf16.msra.mxu0 0
        %3035 = vmatpush.bf16.msra.mxu0 0
        %3036 = vmatpush.bf16.msra.mxu0 0
        %3037 = vmatpush.bf16.msra.mxu0 0
        %3038 = vmatpush.bf16.msra.mxu0 0
        %3039 = vmatpush.bf16.msra.mxu0 0
        %3040 = vmatpush.bf16.msra.mxu0 %v2986
        %3041 = vmatmul.bf16.gmra.mxu0 %v3031
        %v3042 = vpop.f32.mrf.mxu0
        %v3043 = vadd.f32 %v3027, %v3042
        %v3044 = vpop.f32.mrf.mxu0
        %3045 = vdwg.mxu0
        %s3046 = scalar_lea.vmem %s9, 8
        %v3047 = vld [vmem:[%s3046] sm:$0xf]
        %v3048 = vpack.c.bf16 %v2954, %v2953
        %v3050 = vsel %vm3013, %v3047, 0
        %3052 = vmatpush.bf16.msra.mxu0 0
        %3053 = vmatpush.bf16.msra.mxu0 0
        %3054 = vmatpush.bf16.msra.mxu0 0
        %3055 = vmatpush.bf16.msra.mxu0 0
        %3056 = vmatpush.bf16.msra.mxu0 0
        %3057 = vmatpush.bf16.msra.mxu0 0
        %3058 = vmatpush.bf16.msra.mxu0 0
        %3059 = vmatpush.bf16.msra.mxu0 %v3048
        %3060 = vmatmul.bf16.gmra.mxu0 %v3050
        %v3061 = vpop.f32.mrf.mxu0
        %v3062 = vadd.f32 0.0, %v3061
        %v3063 = vpop.f32.mrf.mxu0
        %3064 = vdwg.mxu0
        %v3065 = vadd.f32 %v3043, %v3062
        %v3066 = vld [vmem:[%s10] sm:$0xff]
        %3068 = vset.pattern.permute.xlu0 0
        %3069 = vperm.xlu0 %3068, %v3066
        %v3070 = vpop.permute.xlu0 %3069
        %v3072 = vadd.f32 %v3065, %v3070
        %vm3073 = vcmp.gt.f32.partialorder %v3072, 0.0
        %v3074 = vmin.f32 %v3072, 0.0
        %v3075 = vmul.f32 %v3074, 1.442695
        %v3076 = vpow.pop %v3075
        %v3077 = vsub.f32 %v3076, 1.0
        %v3078 = vsel %vm3073, %v3072, %v3077
        %v3079 = vld [vmem:[%s11] sm:$0xf]
        %v3080 = vld [vmem:[%s11 + $0x4] sm:$0xf]
        %v3081 = vpack.c.bf16 %v3078, %v3078
        %v3082 = vld [vmem:[%s12] sm:$0xff]
        %v3083 = vld [vmem:[%s12 + $0x8] sm:$0xff]
        %3085 = vset.pattern.permute.xlu0 0
        %3086 = vperm.xlu0 %3085, %v3082
        %v3087 = vpop.permute.xlu0 %3086
        %3090 = vset.pattern.permute.xlu0 0
        %3091 = vperm.xlu0 %3090, %v3083
        %v3092 = vpop.permute.xlu0 %3091
        %v3096 = vunpack.c.l.b16 %v3079
        %v3097 = vunpack.c.l.b16 %v3080
        %v3098 = vpack.c.b16 %v3097, %v3096
        %v3100 = vsel %vm2193, %v3098, 0
        %v3103 = vsel %vm2197, %v3081, 0
        %3105 = vmatpush.bf16.msra.mxu0 0
        %3106 = vmatpush.bf16.msra.mxu0 0
        %3107 = vmatpush.bf16.msra.mxu0 0
        %3108 = vmatpush.bf16.msra.mxu0 0
        %3109 = vmatpush.bf16.msra.mxu0 0
        %3110 = vmatpush.bf16.msra.mxu0 0
        %3111 = vmatpush.bf16.msra.mxu0 0
        %3112 = vmatpush.bf16.msra.mxu0 %v3103
        %3113 = vmatmul.bf16.gmra.mxu0 %v3100
        %v3114 = vpop.f32.mrf.mxu0
        %v3115 = vadd.f32 %v3087, %v3114
        %v3116 = vpop.f32.mrf.mxu0
        %v3117 = vadd.f32 %v3092, %v3116
        %3118 = vdwg.mxu0
        %v3119 = vadd.f32 %v2941, %v3115
        %v3120 = vadd.f32 %v2942, %v3117
        %vm3121 = vcmp.gt.f32.partialorder %v3119, 0.0
        %vm3122 = vcmp.gt.f32.partialorder %v3120, 0.0
        %v3123 = vmin.f32 %v3119, 0.0
        %v3124 = vmin.f32 %v3120, 0.0
        %v3125 = vmul.f32 %v3123, 1.442695
        %v3126 = vpow.pop %v3125
        %v3127 = vmul.f32 %v3124, 1.442695
        %v3128 = vpow.pop %v3127
        %v3129 = vsub.f32 %v3126, 1.0
        %v3130 = vsub.f32 %v3128, 1.0
        %v3131 = vsel %vm3121, %v3119, %v3129
        %v3132 = vsel %vm3122, %v3120, %v3130
        %v3133 = vmul.u32 %v660, 4
        %v3134 = vsub.s32 %v639, %v3133
        %v3135 = vsub.s32 %v640, %v3133
        %v3136 = vsub.s32 %v641, %v3133
        %v3137 = vsub.s32 %v642, %v3133
        %v3138 = vsub.s32 %v643, %v3133
        %v3139 = vsub.s32 %v644, %v3133
        %v3140 = vsub.s32 %v645, %v3133
        %v3141 = vsub.s32 %v646, %v3133
        %v3142 = vsub.s32 %v647, %v3133
        %v3143 = vsub.s32 %v648, %v3133
        %vm3144 = vcmp.eq.s32.totalorder %v3134, 4294967292
        %vm3145 = vcmp.eq.s32.totalorder %v3135, 4294967292
        %vm3146 = vcmp.eq.s32.totalorder %v3136, 4294967292
        %vm3147 = vcmp.eq.s32.totalorder %v3137, 4294967292
        %vm3148 = vcmp.eq.s32.totalorder %v3138, 4294967292
        %vm3149 = vcmp.eq.s32.totalorder %v3139, 4294967292
        %vm3150 = vcmp.eq.s32.totalorder %v3140, 4294967292
        %vm3151 = vcmp.eq.s32.totalorder %v3141, 4294967292
        %vm3152 = vcmp.eq.s32.totalorder %v3142, 4294967292
        %vm3153 = vcmp.eq.s32.totalorder %v3143, 4294967292
        %v3154 = vsel %vm3144, 1, 0
        %v3155 = vsel %vm3145, 1, 0
        %v3156 = vsel %vm3146, 1, 0
        %v3157 = vsel %vm3147, 1, 0
        %v3158 = vsel %vm3148, 1, 0
        %v3159 = vsel %vm3149, 1, 0
        %v3160 = vsel %vm3150, 1, 0
        %v3161 = vsel %vm3151, 1, 0
        %v3162 = vsel %vm3152, 1, 0
        %v3163 = vsel %vm3153, 1, 0
        %v3164 = vcvt.s32.f32 %v3154
        %v3165 = vcvt.s32.f32 %v3155
        %v3166 = vcvt.s32.f32 %v3156
        %v3167 = vcvt.s32.f32 %v3157
        %v3168 = vcvt.s32.f32 %v3158
        %v3169 = vcvt.s32.f32 %v3159
        %v3170 = vcvt.s32.f32 %v3160
        %v3171 = vcvt.s32.f32 %v3161
        %v3172 = vcvt.s32.f32 %v3162
        %v3173 = vcvt.s32.f32 %v3163
        %v3175 = vsel %vm2955, %v3131, 0
        %v3178 = vsel %vm2955, %v3132, 0
        %3180 = vmatpush.msra.mxu0 0.0
        %3181 = vmatpush.msra.mxu0 0.0
        %3182 = vmatpush.msra.mxu0 0.0
        %3183 = vmatpush.msra.mxu0 0.0
        %3184 = vmatpush.msra.mxu0 0.0
        %3185 = vmatpush.msra.mxu0 0.0
        %3186 = vmatpush.msra.mxu0 %v3173
        %3187 = vmatpush.msra.mxu0 %v3172
        %3188 = vmatpush.msra.mxu0 %v3171
        %3189 = vmatpush.msra.mxu0 %v3170
        %3190 = vmatpush.msra.mxu0 %v3169
        %3191 = vmatpush.msra.mxu0 %v3168
        %3192 = vmatpush.msra.mxu0 %v3167
        %3193 = vmatpush.msra.mxu0 %v3166
        %3194 = vmatpush.msra.mxu0 %v3165
        %3195 = vmatpush.msra.mxu0 %v3164
        %3196 = vmatmul.f32.gmra.mxu0 %v3175
        %v3197 = vpop.f32.mrf.mxu0
        %v3198 = vadd.f32 0.0, %v3197
        %3199 = vmatmul.f32.gmra.mxu0 %v3178
        %v3200 = vpop.f32.mrf.mxu0
        %v3201 = vadd.f32 0.0, %v3200
        %3202 = vdwg.mxu0
        %v3203 = vld [vmem:[%s13] sm:$0xf]
        %v3204 = vld [vmem:[%s13 + $0x4] sm:$0xf]
        %v3205 = vld [vmem:[%s13 + $0x8] sm:$0xf]
        %v3206 = vld [vmem:[%s13 + $0xc] sm:$0xf]
        %v3207 = vpack.c.bf16 %v3201, %v3198
        %vm3208 = vcmp.eq.s32.totalorder %v3134, 4294967293
        %vm3209 = vcmp.eq.s32.totalorder %v3135, 4294967293
        %vm3210 = vcmp.eq.s32.totalorder %v3136, 4294967293
        %vm3211 = vcmp.eq.s32.totalorder %v3137, 4294967293
        %vm3212 = vcmp.eq.s32.totalorder %v3138, 4294967293
        %vm3213 = vcmp.eq.s32.totalorder %v3139, 4294967293
        %vm3214 = vcmp.eq.s32.totalorder %v3140, 4294967293
        %vm3215 = vcmp.eq.s32.totalorder %v3141, 4294967293
        %vm3216 = vcmp.eq.s32.totalorder %v3142, 4294967293
        %vm3217 = vcmp.eq.s32.totalorder %v3143, 4294967293
        %v3218 = vsel %vm3208, 1, 0
        %v3219 = vsel %vm3209, 1, 0
        %v3220 = vsel %vm3210, 1, 0
        %v3221 = vsel %vm3211, 1, 0
        %v3222 = vsel %vm3212, 1, 0
        %v3223 = vsel %vm3213, 1, 0
        %v3224 = vsel %vm3214, 1, 0
        %v3225 = vsel %vm3215, 1, 0
        %v3226 = vsel %vm3216, 1, 0
        %v3227 = vsel %vm3217, 1, 0
        %v3228 = vcvt.s32.f32 %v3218
        %v3229 = vcvt.s32.f32 %v3219
        %v3230 = vcvt.s32.f32 %v3220
        %v3231 = vcvt.s32.f32 %v3221
        %v3232 = vcvt.s32.f32 %v3222
        %v3233 = vcvt.s32.f32 %v3223
        %v3234 = vcvt.s32.f32 %v3224
        %v3235 = vcvt.s32.f32 %v3225
        %v3236 = vcvt.s32.f32 %v3226
        %v3237 = vcvt.s32.f32 %v3227
        %3238 = vmatpush.msra.mxu0 0.0
        %3239 = vmatpush.msra.mxu0 0.0
        %3240 = vmatpush.msra.mxu0 0.0
        %3241 = vmatpush.msra.mxu0 0.0
        %3242 = vmatpush.msra.mxu0 0.0
        %3243 = vmatpush.msra.mxu0 0.0
        %3244 = vmatpush.msra.mxu0 %v3237
        %3245 = vmatpush.msra.mxu0 %v3236
        %3246 = vmatpush.msra.mxu0 %v3235
        %3247 = vmatpush.msra.mxu0 %v3234
        %3248 = vmatpush.msra.mxu0 %v3233
        %3249 = vmatpush.msra.mxu0 %v3232
        %3250 = vmatpush.msra.mxu0 %v3231
        %3251 = vmatpush.msra.mxu0 %v3230
        %3252 = vmatpush.msra.mxu0 %v3229
        %3253 = vmatpush.msra.mxu0 %v3228
        %3254 = vmatmul.f32.gmra.mxu0 %v3175
        %v3255 = vpop.f32.mrf.mxu0
        %v3256 = vadd.f32 0.0, %v3255
        %3257 = vmatmul.f32.gmra.mxu0 %v3178
        %v3258 = vpop.f32.mrf.mxu0
        %v3259 = vadd.f32 0.0, %v3258
        %3260 = vdwg.mxu0
        %s3261 = scalar_lea.vmem %s13, 16
        %v3262 = vld [vmem:[%s3261] sm:$0xf]
        %v3263 = vld [vmem:[%s3261 + $0x4] sm:$0xf]
        %v3264 = vld [vmem:[%s3261 + $0x8] sm:$0xf]
        %v3265 = vld [vmem:[%s3261 + $0xc] sm:$0xf]
        %v3266 = vpack.c.bf16 %v3259, %v3256
        %v3271 = vunpack.c.l.b16 %v3262
        %v3272 = vunpack.c.l.b16 %v3263
        %v3273 = vunpack.c.l.b16 %v3264
        %v3274 = vunpack.c.l.b16 %v3265
        %v3275 = vpack.c.b16 %v3272, %v3271
        %v3276 = vpack.c.b16 %v3274, %v3273
        %v3278 = vsel %vm3013, %v3275, 0
        %v3281 = vsel %vm3013, %v3276, 0
        %3283 = vmatpush.bf16.msra.mxu0 0
        %3284 = vmatpush.bf16.msra.mxu0 0
        %3285 = vmatpush.bf16.msra.mxu0 0
        %3286 = vmatpush.bf16.msra.mxu0 0
        %3287 = vmatpush.bf16.msra.mxu0 0
        %3288 = vmatpush.bf16.msra.mxu0 0
        %3289 = vmatpush.bf16.msra.mxu0 0
        %3290 = vmatpush.bf16.msra.mxu0 %v3266
        %3291 = vmatmul.bf16.gmra.mxu0 %v3278
        %v3292 = vpop.f32.mrf.mxu0
        %v3293 = vadd.f32 0.0, %v3292
        %v3294 = vpop.f32.mrf.mxu0
        %v3295 = vadd.f32 0.0, %v3294
        %3296 = vmatmul.bf16.gmra.mxu0 %v3281
        %v3297 = vpop.f32.mrf.mxu0
        %v3298 = vadd.f32 0.0, %v3297
        %v3299 = vpop.f32.mrf.mxu0
        %v3300 = vadd.f32 0.0, %v3299
        %3301 = vdwg.mxu0
        %v3306 = vunpack.c.l.b16 %v3203
        %v3307 = vunpack.c.l.b16 %v3204
        %v3308 = vunpack.c.l.b16 %v3205
        %v3309 = vunpack.c.l.b16 %v3206
        %v3310 = vpack.c.b16 %v3307, %v3306
        %v3311 = vpack.c.b16 %v3309, %v3308
        %v3313 = vsel %vm3013, %v3310, 0
        %v3316 = vsel %vm3013, %v3311, 0
        %3318 = vmatpush.bf16.msra.mxu0 0
        %3319 = vmatpush.bf16.msra.mxu0 0
        %3320 = vmatpush.bf16.msra.mxu0 0
        %3321 = vmatpush.bf16.msra.mxu0 0
        %3322 = vmatpush.bf16.msra.mxu0 0
        %3323 = vmatpush.bf16.msra.mxu0 0
        %3324 = vmatpush.bf16.msra.mxu0 0
        %3325 = vmatpush.bf16.msra.mxu0 %v3207
        %3326 = vmatmul.bf16.gmra.mxu0 %v3313
        %v3327 = vpop.f32.mrf.mxu0
        %v3328 = vadd.f32 %v3293, %v3327
        %v3329 = vpop.f32.mrf.mxu0
        %v3330 = vadd.f32 %v3295, %v3329
        %3331 = vmatmul.bf16.gmra.mxu0 %v3316
        %v3332 = vpop.f32.mrf.mxu0
        %v3333 = vadd.f32 %v3298, %v3332
        %v3334 = vpop.f32.mrf.mxu0
        %v3335 = vadd.f32 %v3300, %v3334
        %3336 = vdwg.mxu0
        %vm3337 = vcmp.eq.s32.totalorder %v3134, 4294967294
        %vm3338 = vcmp.eq.s32.totalorder %v3135, 4294967294
        %vm3339 = vcmp.eq.s32.totalorder %v3136, 4294967294
        %vm3340 = vcmp.eq.s32.totalorder %v3137, 4294967294
        %vm3341 = vcmp.eq.s32.totalorder %v3138, 4294967294
        %vm3342 = vcmp.eq.s32.totalorder %v3139, 4294967294
        %vm3343 = vcmp.eq.s32.totalorder %v3140, 4294967294
        %vm3344 = vcmp.eq.s32.totalorder %v3141, 4294967294
        %vm3345 = vcmp.eq.s32.totalorder %v3142, 4294967294
        %vm3346 = vcmp.eq.s32.totalorder %v3143, 4294967294
        %v3347 = vsel %vm3337, 1, 0
        %v3348 = vsel %vm3338, 1, 0
        %v3349 = vsel %vm3339, 1, 0
        %v3350 = vsel %vm3340, 1, 0
        %v3351 = vsel %vm3341, 1, 0
        %v3352 = vsel %vm3342, 1, 0
        %v3353 = vsel %vm3343, 1, 0
        %v3354 = vsel %vm3344, 1, 0
        %v3355 = vsel %vm3345, 1, 0
        %v3356 = vsel %vm3346, 1, 0
        %v3357 = vcvt.s32.f32 %v3347
        %v3358 = vcvt.s32.f32 %v3348
        %v3359 = vcvt.s32.f32 %v3349
        %v3360 = vcvt.s32.f32 %v3350
        %v3361 = vcvt.s32.f32 %v3351
        %v3362 = vcvt.s32.f32 %v3352
        %v3363 = vcvt.s32.f32 %v3353
        %v3364 = vcvt.s32.f32 %v3354
        %v3365 = vcvt.s32.f32 %v3355
        %v3366 = vcvt.s32.f32 %v3356
        %3367 = vmatpush.msra.mxu0 0.0
        %3368 = vmatpush.msra.mxu0 0.0
        %3369 = vmatpush.msra.mxu0 0.0
        %3370 = vmatpush.msra.mxu0 0.0
        %3371 = vmatpush.msra.mxu0 0.0
        %3372 = vmatpush.msra.mxu0 0.0
        %3373 = vmatpush.msra.mxu0 %v3366
        %3374 = vmatpush.msra.mxu0 %v3365
        %3375 = vmatpush.msra.mxu0 %v3364
        %3376 = vmatpush.msra.mxu0 %v3363
        %3377 = vmatpush.msra.mxu0 %v3362
        %3378 = vmatpush.msra.mxu0 %v3361
        %3379 = vmatpush.msra.mxu0 %v3360
        %3380 = vmatpush.msra.mxu0 %v3359
        %3381 = vmatpush.msra.mxu0 %v3358
        %3382 = vmatpush.msra.mxu0 %v3357
        %3383 = vmatmul.f32.gmra.mxu0 %v3175
        %v3384 = vpop.f32.mrf.mxu0
        %v3385 = vadd.f32 0.0, %v3384
        %3386 = vmatmul.f32.gmra.mxu0 %v3178
        %v3387 = vpop.f32.mrf.mxu0
        %v3388 = vadd.f32 0.0, %v3387
        %3389 = vdwg.mxu0
        %s3390 = scalar_lea.vmem %s13, 32
        %v3391 = vld [vmem:[%s3390] sm:$0xf]
        %v3392 = vld [vmem:[%s3390 + $0x4] sm:$0xf]
        %v3393 = vld [vmem:[%s3390 + $0x8] sm:$0xf]
        %v3394 = vld [vmem:[%s3390 + $0xc] sm:$0xf]
        %v3395 = vpack.c.bf16 %v3388, %v3385
        %v3400 = vunpack.c.l.b16 %v3391
        %v3401 = vunpack.c.l.b16 %v3392
        %v3402 = vunpack.c.l.b16 %v3393
        %v3403 = vunpack.c.l.b16 %v3394
        %v3404 = vpack.c.b16 %v3401, %v3400
        %v3405 = vpack.c.b16 %v3403, %v3402
        %v3407 = vsel %vm3013, %v3404, 0
        %v3410 = vsel %vm3013, %v3405, 0
        %3412 = vmatpush.bf16.msra.mxu0 0
        %3413 = vmatpush.bf16.msra.mxu0 0
        %3414 = vmatpush.bf16.msra.mxu0 0
        %3415 = vmatpush.bf16.msra.mxu0 0
        %3416 = vmatpush.bf16.msra.mxu0 0
        %3417 = vmatpush.bf16.msra.mxu0 0
        %3418 = vmatpush.bf16.msra.mxu0 0
        %3419 = vmatpush.bf16.msra.mxu0 %v3395
        %3420 = vmatmul.bf16.gmra.mxu0 %v3407
        %v3421 = vpop.f32.mrf.mxu0
        %v3422 = vadd.f32 0.0, %v3421
        %v3423 = vpop.f32.mrf.mxu0
        %v3424 = vadd.f32 0.0, %v3423
        %3425 = vmatmul.bf16.gmra.mxu0 %v3410
        %v3426 = vpop.f32.mrf.mxu0
        %v3427 = vadd.f32 0.0, %v3426
        %v3428 = vpop.f32.mrf.mxu0
        %v3429 = vadd.f32 0.0, %v3428
        %3430 = vdwg.mxu0
        %v3431 = vadd.f32 %v3328, %v3422
        %v3432 = vadd.f32 %v3330, %v3424
        %v3433 = vadd.f32 %v3333, %v3427
        %v3434 = vadd.f32 %v3335, %v3429
        %vm3435 = vcmp.eq.s32.totalorder %v3134, 4294967295
        %vm3436 = vcmp.eq.s32.totalorder %v3135, 4294967295
        %vm3437 = vcmp.eq.s32.totalorder %v3136, 4294967295
        %vm3438 = vcmp.eq.s32.totalorder %v3137, 4294967295
        %vm3439 = vcmp.eq.s32.totalorder %v3138, 4294967295
        %vm3440 = vcmp.eq.s32.totalorder %v3139, 4294967295
        %vm3441 = vcmp.eq.s32.totalorder %v3140, 4294967295
        %vm3442 = vcmp.eq.s32.totalorder %v3141, 4294967295
        %vm3443 = vcmp.eq.s32.totalorder %v3142, 4294967295
        %vm3444 = vcmp.eq.s32.totalorder %v3143, 4294967295
        %v3445 = vsel %vm3435, 1, 0
        %v3446 = vsel %vm3436, 1, 0
        %v3447 = vsel %vm3437, 1, 0
        %v3448 = vsel %vm3438, 1, 0
        %v3449 = vsel %vm3439, 1, 0
        %v3450 = vsel %vm3440, 1, 0
        %v3451 = vsel %vm3441, 1, 0
        %v3452 = vsel %vm3442, 1, 0
        %v3453 = vsel %vm3443, 1, 0
        %v3454 = vsel %vm3444, 1, 0
        %v3455 = vcvt.s32.f32 %v3445
        %v3456 = vcvt.s32.f32 %v3446
        %v3457 = vcvt.s32.f32 %v3447
        %v3458 = vcvt.s32.f32 %v3448
        %v3459 = vcvt.s32.f32 %v3449
        %v3460 = vcvt.s32.f32 %v3450
        %v3461 = vcvt.s32.f32 %v3451
        %v3462 = vcvt.s32.f32 %v3452
        %v3463 = vcvt.s32.f32 %v3453
        %v3464 = vcvt.s32.f32 %v3454
        %3465 = vmatpush.msra.mxu0 0.0
        %3466 = vmatpush.msra.mxu0 0.0
        %3467 = vmatpush.msra.mxu0 0.0
        %3468 = vmatpush.msra.mxu0 0.0
        %3469 = vmatpush.msra.mxu0 0.0
        %3470 = vmatpush.msra.mxu0 0.0
        %3471 = vmatpush.msra.mxu0 %v3464
        %3472 = vmatpush.msra.mxu0 %v3463
        %3473 = vmatpush.msra.mxu0 %v3462
        %3474 = vmatpush.msra.mxu0 %v3461
        %3475 = vmatpush.msra.mxu0 %v3460
        %3476 = vmatpush.msra.mxu0 %v3459
        %3477 = vmatpush.msra.mxu0 %v3458
        %3478 = vmatpush.msra.mxu0 %v3457
        %3479 = vmatpush.msra.mxu0 %v3456
        %3480 = vmatpush.msra.mxu0 %v3455
        %3481 = vmatmul.f32.gmra.mxu0 %v3175
        %v3482 = vpop.f32.mrf.mxu0
        %v3483 = vadd.f32 0.0, %v3482
        %3484 = vmatmul.f32.gmra.mxu0 %v3178
        %v3485 = vpop.f32.mrf.mxu0
        %v3486 = vadd.f32 0.0, %v3485
        %3487 = vdwg.mxu0
        %s3488 = scalar_lea.vmem %s13, 48
        %v3489 = vld [vmem:[%s3488] sm:$0xf]
        %v3490 = vld [vmem:[%s3488 + $0x4] sm:$0xf]
        %v3491 = vld [vmem:[%s3488 + $0x8] sm:$0xf]
        %v3492 = vld [vmem:[%s3488 + $0xc] sm:$0xf]
        %v3493 = vpack.c.bf16 %v3486, %v3483
        %v3498 = vunpack.c.l.b16 %v3489
        %v3499 = vunpack.c.l.b16 %v3490
        %v3500 = vunpack.c.l.b16 %v3491
        %v3501 = vunpack.c.l.b16 %v3492
        %v3502 = vpack.c.b16 %v3499, %v3498
        %v3503 = vpack.c.b16 %v3501, %v3500
        %v3505 = vsel %vm3013, %v3502, 0
        %v3508 = vsel %vm3013, %v3503, 0
        %3510 = vmatpush.bf16.msra.mxu0 0
        %3511 = vmatpush.bf16.msra.mxu0 0
        %3512 = vmatpush.bf16.msra.mxu0 0
        %3513 = vmatpush.bf16.msra.mxu0 0
        %3514 = vmatpush.bf16.msra.mxu0 0
        %3515 = vmatpush.bf16.msra.mxu0 0
        %3516 = vmatpush.bf16.msra.mxu0 0
        %3517 = vmatpush.bf16.msra.mxu0 %v3493
        %3518 = vmatmul.bf16.gmra.mxu0 %v3505
        %v3519 = vpop.f32.mrf.mxu0
        %v3520 = vadd.f32 0.0, %v3519
        %v3521 = vpop.f32.mrf.mxu0
        %v3522 = vadd.f32 0.0, %v3521
        %3523 = vmatmul.bf16.gmra.mxu0 %v3508
        %v3524 = vpop.f32.mrf.mxu0
        %v3525 = vadd.f32 0.0, %v3524
        %v3526 = vpop.f32.mrf.mxu0
        %v3527 = vadd.f32 0.0, %v3526
        %3528 = vdwg.mxu0
        %v3529 = vadd.f32 %v3431, %v3520
        %v3530 = vadd.f32 %v3432, %v3522
        %v3531 = vadd.f32 %v3433, %v3525
        %v3532 = vadd.f32 %v3434, %v3527
        %vm3533 = vcmp.eq.s32.totalorder %v3134, 0
        %vm3534 = vcmp.eq.s32.totalorder %v3135, 0
        %vm3535 = vcmp.eq.s32.totalorder %v3136, 0
        %vm3536 = vcmp.eq.s32.totalorder %v3137, 0
        %vm3537 = vcmp.eq.s32.totalorder %v3138, 0
        %vm3538 = vcmp.eq.s32.totalorder %v3139, 0
        %vm3539 = vcmp.eq.s32.totalorder %v3140, 0
        %vm3540 = vcmp.eq.s32.totalorder %v3141, 0
        %vm3541 = vcmp.eq.s32.totalorder %v3142, 0
        %vm3542 = vcmp.eq.s32.totalorder %v3143, 0
        %v3543 = vsel %vm3533, 1, 0
        %v3544 = vsel %vm3534, 1, 0
        %v3545 = vsel %vm3535, 1, 0
        %v3546 = vsel %vm3536, 1, 0
        %v3547 = vsel %vm3537, 1, 0
        %v3548 = vsel %vm3538, 1, 0
        %v3549 = vsel %vm3539, 1, 0
        %v3550 = vsel %vm3540, 1, 0
        %v3551 = vsel %vm3541, 1, 0
        %v3552 = vsel %vm3542, 1, 0
        %v3553 = vcvt.s32.f32 %v3543
        %v3554 = vcvt.s32.f32 %v3544
        %v3555 = vcvt.s32.f32 %v3545
        %v3556 = vcvt.s32.f32 %v3546
        %v3557 = vcvt.s32.f32 %v3547
        %v3558 = vcvt.s32.f32 %v3548
        %v3559 = vcvt.s32.f32 %v3549
        %v3560 = vcvt.s32.f32 %v3550
        %v3561 = vcvt.s32.f32 %v3551
        %v3562 = vcvt.s32.f32 %v3552
        %3563 = vmatpush.msra.mxu0 0.0
        %3564 = vmatpush.msra.mxu0 0.0
        %3565 = vmatpush.msra.mxu0 0.0
        %3566 = vmatpush.msra.mxu0 0.0
        %3567 = vmatpush.msra.mxu0 0.0
        %3568 = vmatpush.msra.mxu0 0.0
        %3569 = vmatpush.msra.mxu0 %v3562
        %3570 = vmatpush.msra.mxu0 %v3561
        %3571 = vmatpush.msra.mxu0 %v3560
        %3572 = vmatpush.msra.mxu0 %v3559
        %3573 = vmatpush.msra.mxu0 %v3558
        %3574 = vmatpush.msra.mxu0 %v3557
        %3575 = vmatpush.msra.mxu0 %v3556
        %3576 = vmatpush.msra.mxu0 %v3555
        %3577 = vmatpush.msra.mxu0 %v3554
        %3578 = vmatpush.msra.mxu0 %v3553
        %3579 = vmatmul.f32.gmra.mxu0 %v3175
        %v3580 = vpop.f32.mrf.mxu0
        %v3581 = vadd.f32 0.0, %v3580
        %3582 = vmatmul.f32.gmra.mxu0 %v3178
        %v3583 = vpop.f32.mrf.mxu0
        %v3584 = vadd.f32 0.0, %v3583
        %3585 = vdwg.mxu0
        %s3586 = scalar_lea.vmem %s13, 64
        %v3587 = vld [vmem:[%s3586] sm:$0xf]
        %v3588 = vld [vmem:[%s3586 + $0x4] sm:$0xf]
        %v3589 = vld [vmem:[%s3586 + $0x8] sm:$0xf]
        %v3590 = vld [vmem:[%s3586 + $0xc] sm:$0xf]
        %v3591 = vpack.c.bf16 %v3584, %v3581
        %v3596 = vunpack.c.l.b16 %v3587
        %v3597 = vunpack.c.l.b16 %v3588
        %v3598 = vunpack.c.l.b16 %v3589
        %v3599 = vunpack.c.l.b16 %v3590
        %v3600 = vpack.c.b16 %v3597, %v3596
        %v3601 = vpack.c.b16 %v3599, %v3598
        %v3603 = vsel %vm3013, %v3600, 0
        %v3606 = vsel %vm3013, %v3601, 0
        %3608 = vmatpush.bf16.msra.mxu0 0
        %3609 = vmatpush.bf16.msra.mxu0 0
        %3610 = vmatpush.bf16.msra.mxu0 0
        %3611 = vmatpush.bf16.msra.mxu0 0
        %3612 = vmatpush.bf16.msra.mxu0 0
        %3613 = vmatpush.bf16.msra.mxu0 0
        %3614 = vmatpush.bf16.msra.mxu0 0
        %3615 = vmatpush.bf16.msra.mxu0 %v3591
        %3616 = vmatmul.bf16.gmra.mxu0 %v3603
        %v3617 = vpop.f32.mrf.mxu0
        %v3618 = vadd.f32 0.0, %v3617
        %v3619 = vpop.f32.mrf.mxu0
        %v3620 = vadd.f32 0.0, %v3619
        %3621 = vmatmul.bf16.gmra.mxu0 %v3606
        %v3622 = vpop.f32.mrf.mxu0
        %v3623 = vadd.f32 0.0, %v3622
        %v3624 = vpop.f32.mrf.mxu0
        %v3625 = vadd.f32 0.0, %v3624
        %3626 = vdwg.mxu0
        %v3627 = vadd.f32 %v3529, %v3618
        %v3628 = vadd.f32 %v3530, %v3620
        %v3629 = vadd.f32 %v3531, %v3623
        %v3630 = vadd.f32 %v3532, %v3625
        %vm3631 = vcmp.eq.s32.totalorder %v3134, 1
        %vm3632 = vcmp.eq.s32.totalorder %v3135, 1
        %vm3633 = vcmp.eq.s32.totalorder %v3136, 1
        %vm3634 = vcmp.eq.s32.totalorder %v3137, 1
        %vm3635 = vcmp.eq.s32.totalorder %v3138, 1
        %vm3636 = vcmp.eq.s32.totalorder %v3139, 1
        %vm3637 = vcmp.eq.s32.totalorder %v3140, 1
        %vm3638 = vcmp.eq.s32.totalorder %v3141, 1
        %vm3639 = vcmp.eq.s32.totalorder %v3142, 1
        %vm3640 = vcmp.eq.s32.totalorder %v3143, 1
        %v3641 = vsel %vm3631, 1, 0
        %v3642 = vsel %vm3632, 1, 0
        %v3643 = vsel %vm3633, 1, 0
        %v3644 = vsel %vm3634, 1, 0
        %v3645 = vsel %vm3635, 1, 0
        %v3646 = vsel %vm3636, 1, 0
        %v3647 = vsel %vm3637, 1, 0
        %v3648 = vsel %vm3638, 1, 0
        %v3649 = vsel %vm3639, 1, 0
        %v3650 = vsel %vm3640, 1, 0
        %v3651 = vcvt.s32.f32 %v3641
        %v3652 = vcvt.s32.f32 %v3642
        %v3653 = vcvt.s32.f32 %v3643
        %v3654 = vcvt.s32.f32 %v3644
        %v3655 = vcvt.s32.f32 %v3645
        %v3656 = vcvt.s32.f32 %v3646
        %v3657 = vcvt.s32.f32 %v3647
        %v3658 = vcvt.s32.f32 %v3648
        %v3659 = vcvt.s32.f32 %v3649
        %v3660 = vcvt.s32.f32 %v3650
        %3661 = vmatpush.msra.mxu0 0.0
        %3662 = vmatpush.msra.mxu0 0.0
        %3663 = vmatpush.msra.mxu0 0.0
        %3664 = vmatpush.msra.mxu0 0.0
        %3665 = vmatpush.msra.mxu0 0.0
        %3666 = vmatpush.msra.mxu0 0.0
        %3667 = vmatpush.msra.mxu0 %v3660
        %3668 = vmatpush.msra.mxu0 %v3659
        %3669 = vmatpush.msra.mxu0 %v3658
        %3670 = vmatpush.msra.mxu0 %v3657
        %3671 = vmatpush.msra.mxu0 %v3656
        %3672 = vmatpush.msra.mxu0 %v3655
        %3673 = vmatpush.msra.mxu0 %v3654
        %3674 = vmatpush.msra.mxu0 %v3653
        %3675 = vmatpush.msra.mxu0 %v3652
        %3676 = vmatpush.msra.mxu0 %v3651
        %3677 = vmatmul.f32.gmra.mxu0 %v3175
        %v3678 = vpop.f32.mrf.mxu0
        %v3679 = vadd.f32 0.0, %v3678
        %3680 = vmatmul.f32.gmra.mxu0 %v3178
        %v3681 = vpop.f32.mrf.mxu0
        %v3682 = vadd.f32 0.0, %v3681
        %3683 = vdwg.mxu0
        %s3684 = scalar_lea.vmem %s13, 80
        %v3685 = vld [vmem:[%s3684] sm:$0xf]
        %v3686 = vld [vmem:[%s3684 + $0x4] sm:$0xf]
        %v3687 = vld [vmem:[%s3684 + $0x8] sm:$0xf]
        %v3688 = vld [vmem:[%s3684 + $0xc] sm:$0xf]
        %v3689 = vpack.c.bf16 %v3682, %v3679
        %v3694 = vunpack.c.l.b16 %v3685
        %v3695 = vunpack.c.l.b16 %v3686
        %v3696 = vunpack.c.l.b16 %v3687
        %v3697 = vunpack.c.l.b16 %v3688
        %v3698 = vpack.c.b16 %v3695, %v3694
        %v3699 = vpack.c.b16 %v3697, %v3696
        %v3701 = vsel %vm3013, %v3698, 0
        %v3704 = vsel %vm3013, %v3699, 0
        %3706 = vmatpush.bf16.msra.mxu0 0
        %3707 = vmatpush.bf16.msra.mxu0 0
        %3708 = vmatpush.bf16.msra.mxu0 0
        %3709 = vmatpush.bf16.msra.mxu0 0
        %3710 = vmatpush.bf16.msra.mxu0 0
        %3711 = vmatpush.bf16.msra.mxu0 0
        %3712 = vmatpush.bf16.msra.mxu0 0
        %3713 = vmatpush.bf16.msra.mxu0 %v3689
        %3714 = vmatmul.bf16.gmra.mxu0 %v3701
        %v3715 = vpop.f32.mrf.mxu0
        %v3716 = vadd.f32 0.0, %v3715
        %v3717 = vpop.f32.mrf.mxu0
        %v3718 = vadd.f32 0.0, %v3717
        %3719 = vmatmul.bf16.gmra.mxu0 %v3704
        %v3720 = vpop.f32.mrf.mxu0
        %v3721 = vadd.f32 0.0, %v3720
        %v3722 = vpop.f32.mrf.mxu0
        %v3723 = vadd.f32 0.0, %v3722
        %3724 = vdwg.mxu0
        %v3725 = vadd.f32 %v3627, %v3716
        %v3726 = vadd.f32 %v3628, %v3718
        %v3727 = vadd.f32 %v3629, %v3721
        %v3728 = vadd.f32 %v3630, %v3723
        %vm3729 = vcmp.eq.s32.totalorder %v3134, 2
        %vm3730 = vcmp.eq.s32.totalorder %v3135, 2
        %vm3731 = vcmp.eq.s32.totalorder %v3136, 2
        %vm3732 = vcmp.eq.s32.totalorder %v3137, 2
        %vm3733 = vcmp.eq.s32.totalorder %v3138, 2
        %vm3734 = vcmp.eq.s32.totalorder %v3139, 2
        %vm3735 = vcmp.eq.s32.totalorder %v3140, 2
        %vm3736 = vcmp.eq.s32.totalorder %v3141, 2
        %vm3737 = vcmp.eq.s32.totalorder %v3142, 2
        %vm3738 = vcmp.eq.s32.totalorder %v3143, 2
        %v3739 = vsel %vm3729, 1, 0
        %v3740 = vsel %vm3730, 1, 0
        %v3741 = vsel %vm3731, 1, 0
        %v3742 = vsel %vm3732, 1, 0
        %v3743 = vsel %vm3733, 1, 0
        %v3744 = vsel %vm3734, 1, 0
        %v3745 = vsel %vm3735, 1, 0
        %v3746 = vsel %vm3736, 1, 0
        %v3747 = vsel %vm3737, 1, 0
        %v3748 = vsel %vm3738, 1, 0
        %v3749 = vcvt.s32.f32 %v3739
        %v3750 = vcvt.s32.f32 %v3740
        %v3751 = vcvt.s32.f32 %v3741
        %v3752 = vcvt.s32.f32 %v3742
        %v3753 = vcvt.s32.f32 %v3743
        %v3754 = vcvt.s32.f32 %v3744
        %v3755 = vcvt.s32.f32 %v3745
        %v3756 = vcvt.s32.f32 %v3746
        %v3757 = vcvt.s32.f32 %v3747
        %v3758 = vcvt.s32.f32 %v3748
        %3759 = vmatpush.msra.mxu0 0.0
        %3760 = vmatpush.msra.mxu0 0.0
        %3761 = vmatpush.msra.mxu0 0.0
        %3762 = vmatpush.msra.mxu0 0.0
        %3763 = vmatpush.msra.mxu0 0.0
        %3764 = vmatpush.msra.mxu0 0.0
        %3765 = vmatpush.msra.mxu0 %v3758
        %3766 = vmatpush.msra.mxu0 %v3757
        %3767 = vmatpush.msra.mxu0 %v3756
        %3768 = vmatpush.msra.mxu0 %v3755
        %3769 = vmatpush.msra.mxu0 %v3754
        %3770 = vmatpush.msra.mxu0 %v3753
        %3771 = vmatpush.msra.mxu0 %v3752
        %3772 = vmatpush.msra.mxu0 %v3751
        %3773 = vmatpush.msra.mxu0 %v3750
        %3774 = vmatpush.msra.mxu0 %v3749
        %3775 = vmatmul.f32.gmra.mxu0 %v3175
        %v3776 = vpop.f32.mrf.mxu0
        %v3777 = vadd.f32 0.0, %v3776
        %3778 = vmatmul.f32.gmra.mxu0 %v3178
        %v3779 = vpop.f32.mrf.mxu0
        %v3780 = vadd.f32 0.0, %v3779
        %3781 = vdwg.mxu0
        %s3782 = scalar_lea.vmem %s13, 96
        %v3783 = vld [vmem:[%s3782] sm:$0xf]
        %v3784 = vld [vmem:[%s3782 + $0x4] sm:$0xf]
        %v3785 = vld [vmem:[%s3782 + $0x8] sm:$0xf]
        %v3786 = vld [vmem:[%s3782 + $0xc] sm:$0xf]
        %v3787 = vpack.c.bf16 %v3780, %v3777
        %v3792 = vunpack.c.l.b16 %v3783
        %v3793 = vunpack.c.l.b16 %v3784
        %v3794 = vunpack.c.l.b16 %v3785
        %v3795 = vunpack.c.l.b16 %v3786
        %v3796 = vpack.c.b16 %v3793, %v3792
        %v3797 = vpack.c.b16 %v3795, %v3794
        %v3799 = vsel %vm3013, %v3796, 0
        %v3802 = vsel %vm3013, %v3797, 0
        %3804 = vmatpush.bf16.msra.mxu0 0
        %3805 = vmatpush.bf16.msra.mxu0 0
        %3806 = vmatpush.bf16.msra.mxu0 0
        %3807 = vmatpush.bf16.msra.mxu0 0
        %3808 = vmatpush.bf16.msra.mxu0 0
        %3809 = vmatpush.bf16.msra.mxu0 0
        %3810 = vmatpush.bf16.msra.mxu0 0
        %3811 = vmatpush.bf16.msra.mxu0 %v3787
        %3812 = vmatmul.bf16.gmra.mxu0 %v3799
        %v3813 = vpop.f32.mrf.mxu0
        %v3814 = vadd.f32 0.0, %v3813
        %v3815 = vpop.f32.mrf.mxu0
        %v3816 = vadd.f32 0.0, %v3815
        %3817 = vmatmul.bf16.gmra.mxu0 %v3802
        %v3818 = vpop.f32.mrf.mxu0
        %v3819 = vadd.f32 0.0, %v3818
        %v3820 = vpop.f32.mrf.mxu0
        %v3821 = vadd.f32 0.0, %v3820
        %3822 = vdwg.mxu0
        %v3823 = vadd.f32 %v3725, %v3814
        %v3824 = vadd.f32 %v3726, %v3816
        %v3825 = vadd.f32 %v3727, %v3819
        %v3826 = vadd.f32 %v3728, %v3821
        %vm3827 = vcmp.eq.s32.totalorder %v3134, 3
        %vm3828 = vcmp.eq.s32.totalorder %v3135, 3
        %vm3829 = vcmp.eq.s32.totalorder %v3136, 3
        %vm3830 = vcmp.eq.s32.totalorder %v3137, 3
        %vm3831 = vcmp.eq.s32.totalorder %v3138, 3
        %vm3832 = vcmp.eq.s32.totalorder %v3139, 3
        %vm3833 = vcmp.eq.s32.totalorder %v3140, 3
        %vm3834 = vcmp.eq.s32.totalorder %v3141, 3
        %vm3835 = vcmp.eq.s32.totalorder %v3142, 3
        %vm3836 = vcmp.eq.s32.totalorder %v3143, 3
        %v3837 = vsel %vm3827, 1, 0
        %v3838 = vsel %vm3828, 1, 0
        %v3839 = vsel %vm3829, 1, 0
        %v3840 = vsel %vm3830, 1, 0
        %v3841 = vsel %vm3831, 1, 0
        %v3842 = vsel %vm3832, 1, 0
        %v3843 = vsel %vm3833, 1, 0
        %v3844 = vsel %vm3834, 1, 0
        %v3845 = vsel %vm3835, 1, 0
        %v3846 = vsel %vm3836, 1, 0
        %v3847 = vcvt.s32.f32 %v3837
        %v3848 = vcvt.s32.f32 %v3838
        %v3849 = vcvt.s32.f32 %v3839
        %v3850 = vcvt.s32.f32 %v3840
        %v3851 = vcvt.s32.f32 %v3841
        %v3852 = vcvt.s32.f32 %v3842
        %v3853 = vcvt.s32.f32 %v3843
        %v3854 = vcvt.s32.f32 %v3844
        %v3855 = vcvt.s32.f32 %v3845
        %v3856 = vcvt.s32.f32 %v3846
        %3857 = vmatpush.msra.mxu0 0.0
        %3858 = vmatpush.msra.mxu0 0.0
        %3859 = vmatpush.msra.mxu0 0.0
        %3860 = vmatpush.msra.mxu0 0.0
        %3861 = vmatpush.msra.mxu0 0.0
        %3862 = vmatpush.msra.mxu0 0.0
        %3863 = vmatpush.msra.mxu0 %v3856
        %3864 = vmatpush.msra.mxu0 %v3855
        %3865 = vmatpush.msra.mxu0 %v3854
        %3866 = vmatpush.msra.mxu0 %v3853
        %3867 = vmatpush.msra.mxu0 %v3852
        %3868 = vmatpush.msra.mxu0 %v3851
        %3869 = vmatpush.msra.mxu0 %v3850
        %3870 = vmatpush.msra.mxu0 %v3849
        %3871 = vmatpush.msra.mxu0 %v3848
        %3872 = vmatpush.msra.mxu0 %v3847
        %3873 = vmatmul.f32.gmra.mxu0 %v3175
        %v3874 = vpop.f32.mrf.mxu0
        %v3875 = vadd.f32 0.0, %v3874
        %3876 = vmatmul.f32.gmra.mxu0 %v3178
        %v3877 = vpop.f32.mrf.mxu0
        %v3878 = vadd.f32 0.0, %v3877
        %3879 = vdwg.mxu0
        %s3880 = scalar_lea.vmem %s13, 112
        %v3881 = vld [vmem:[%s3880] sm:$0xf]
        %v3882 = vld [vmem:[%s3880 + $0x4] sm:$0xf]
        %v3883 = vld [vmem:[%s3880 + $0x8] sm:$0xf]
        %v3884 = vld [vmem:[%s3880 + $0xc] sm:$0xf]
        %v3885 = vpack.c.bf16 %v3878, %v3875
        %v3890 = vunpack.c.l.b16 %v3881
        %v3891 = vunpack.c.l.b16 %v3882
        %v3892 = vunpack.c.l.b16 %v3883
        %v3893 = vunpack.c.l.b16 %v3884
        %v3894 = vpack.c.b16 %v3891, %v3890
        %v3895 = vpack.c.b16 %v3893, %v3892
        %v3897 = vsel %vm3013, %v3894, 0
        %v3900 = vsel %vm3013, %v3895, 0
        %3902 = vmatpush.bf16.msra.mxu0 0
        %3903 = vmatpush.bf16.msra.mxu0 0
        %3904 = vmatpush.bf16.msra.mxu0 0
        %3905 = vmatpush.bf16.msra.mxu0 0
        %3906 = vmatpush.bf16.msra.mxu0 0
        %3907 = vmatpush.bf16.msra.mxu0 0
        %3908 = vmatpush.bf16.msra.mxu0 0
        %3909 = vmatpush.bf16.msra.mxu0 %v3885
        %3910 = vmatmul.bf16.gmra.mxu0 %v3897
        %v3911 = vpop.f32.mrf.mxu0
        %v3912 = vadd.f32 0.0, %v3911
        %v3913 = vpop.f32.mrf.mxu0
        %v3914 = vadd.f32 0.0, %v3913
        %3915 = vmatmul.bf16.gmra.mxu0 %v3900
        %v3916 = vpop.f32.mrf.mxu0
        %v3917 = vadd.f32 0.0, %v3916
        %v3918 = vpop.f32.mrf.mxu0
        %v3919 = vadd.f32 0.0, %v3918
        %3920 = vdwg.mxu0
        %v3921 = vadd.f32 %v3823, %v3912
        %v3922 = vadd.f32 %v3824, %v3914
        %v3923 = vadd.f32 %v3825, %v3917
        %v3924 = vadd.f32 %v3826, %v3919
        %v3925 = vld [vmem:[%s14] sm:$0xff]
        %v3926 = vld [vmem:[%s14 + $0x8] sm:$0xff]
        %v3927 = vld [vmem:[%s14 + $0x10] sm:$0xff]
        %v3928 = vld [vmem:[%s14 + $0x18] sm:$0xff]
        %3930 = vset.pattern.permute.xlu0 0
        %3931 = vperm.xlu0 %3930, %v3925
        %v3932 = vpop.permute.xlu0 %3931
        %3935 = vset.pattern.permute.xlu0 0
        %3936 = vperm.xlu0 %3935, %v3926
        %v3937 = vpop.permute.xlu0 %3936
        %3940 = vset.pattern.permute.xlu0 0
        %3941 = vperm.xlu0 %3940, %v3927
        %v3942 = vpop.permute.xlu0 %3941
        %3945 = vset.pattern.permute.xlu0 0
        %3946 = vperm.xlu0 %3945, %v3928
        %v3947 = vpop.permute.xlu0 %3946
        %v3949 = vadd.f32 %v3921, %v3932
        %v3950 = vadd.f32 %v3922, %v3937
        %v3951 = vadd.f32 %v3923, %v3942
        %v3952 = vadd.f32 %v3924, %v3947
        %vm3953 = vcmp.gt.f32.partialorder %v3949, 0.0
        %vm3954 = vcmp.gt.f32.partialorder %v3950, 0.0
        %vm3955 = vcmp.gt.f32.partialorder %v3951, 0.0
        %vm3956 = vcmp.gt.f32.partialorder %v3952, 0.0
        %v3957 = vmin.f32 %v3949, 0.0
        %v3958 = vmin.f32 %v3950, 0.0
        %v3959 = vmin.f32 %v3951, 0.0
        %v3960 = vmin.f32 %v3952, 0.0
        %v3961 = vmul.f32 %v3957, 1.442695
        %v3962 = vpow.pop %v3961
        %v3963 = vmul.f32 %v3958, 1.442695
        %v3964 = vpow.pop %v3963
        %v3965 = vmul.f32 %v3959, 1.442695
        %v3966 = vpow.pop %v3965
        %v3967 = vmul.f32 %v3960, 1.442695
        %v3968 = vpow.pop %v3967
        %v3969 = vsub.f32 %v3962, 1.0
        %v3970 = vsub.f32 %v3964, 1.0
        %v3971 = vsub.f32 %v3966, 1.0
        %v3972 = vsub.f32 %v3968, 1.0
        %v3973 = vsel %vm3953, %v3949, %v3969
        %v3974 = vsel %vm3954, %v3950, %v3970
        %v3975 = vsel %vm3955, %v3951, %v3971
        %v3976 = vsel %vm3956, %v3952, %v3972
        %vm3977 = vcmask 162816
        %v3979 = vsel %vm3977, %v3973, 0
        %v3982 = vsel %vm3977, %v3974, 0
        %v3985 = vsel %vm3977, %v3975, 0
        %v3988 = vsel %vm3977, %v3976, 0
        %v3991 = vsel %vm2197, %v1646, 0
        %3993 = vmatpush.msra.mxu0 0.0
        %3994 = vmatpush.msra.mxu0 0.0
        %3995 = vmatpush.msra.mxu0 0.0
        %3996 = vmatpush.msra.mxu0 0.0
        %3997 = vmatpush.msra.mxu0 0.0
        %3998 = vmatpush.msra.mxu0 0.0
        %3999 = vmatpush.msra.mxu0 0.0
        %4000 = vmatpush.msra.mxu0 0.0
        %4001 = vmatpush.msra.mxu0 0.0
        %4002 = vmatpush.msra.mxu0 0.0
        %4003 = vmatpush.msra.mxu0 0.0
        %4004 = vmatpush.msra.mxu0 0.0
        %4005 = vmatpush.msra.mxu0 0.0
        %4006 = vmatpush.msra.mxu0 %v3991
        %4007 = vmatpush.msra.mxu0 %v1644
        %4008 = vmatpush.msra.mxu0 %v1642
        %4009 = vmatmul.f32.gmra.mxu0 %v3979
        %v4010 = vpop.f32.mrf.mxu0
        %v4011 = vadd.f32 0.0, %v4010
        %4012 = vmatmul.f32.gmra.mxu0 %v3982
        %v4013 = vpop.f32.mrf.mxu0
        %v4014 = vadd.f32 0.0, %v4013
        %4015 = vmatmul.f32.gmra.mxu0 %v3985
        %v4016 = vpop.f32.mrf.mxu0
        %v4017 = vadd.f32 0.0, %v4016
        %4018 = vmatmul.f32.gmra.mxu0 %v3988
        %v4019 = vpop.f32.mrf.mxu0
        %v4020 = vadd.f32 0.0, %v4019
        %4021 = vdwg.mxu0
        %v4022 = vld [vmem:[%s15] sm:$0xf]
        %v4023 = vld [vmem:[%s15 + $0x4] sm:$0xf]
        %v4024 = vpack.c.bf16 %v4014, %v4011
        %v4025 = vpack.c.bf16 %v4020, %v4017
        %v4027 = vsel %vm2197, %v1860, 0
        %4029 = vmatpush.msra.mxu0 0.0
        %4030 = vmatpush.msra.mxu0 0.0
        %4031 = vmatpush.msra.mxu0 0.0
        %4032 = vmatpush.msra.mxu0 0.0
        %4033 = vmatpush.msra.mxu0 0.0
        %4034 = vmatpush.msra.mxu0 0.0
        %4035 = vmatpush.msra.mxu0 0.0
        %4036 = vmatpush.msra.mxu0 0.0
        %4037 = vmatpush.msra.mxu0 0.0
        %4038 = vmatpush.msra.mxu0 0.0
        %4039 = vmatpush.msra.mxu0 0.0
        %4040 = vmatpush.msra.mxu0 0.0
        %4041 = vmatpush.msra.mxu0 0.0
        %4042 = vmatpush.msra.mxu0 %v4027
        %4043 = vmatpush.msra.mxu0 %v1858
        %4044 = vmatpush.msra.mxu0 %v1856
        %4045 = vmatmul.f32.gmra.mxu0 %v3979
        %v4046 = vpop.f32.mrf.mxu0
        %v4047 = vadd.f32 0.0, %v4046
        %4048 = vmatmul.f32.gmra.mxu0 %v3982
        %v4049 = vpop.f32.mrf.mxu0
        %v4050 = vadd.f32 0.0, %v4049
        %4051 = vmatmul.f32.gmra.mxu0 %v3985
        %v4052 = vpop.f32.mrf.mxu0
        %v4053 = vadd.f32 0.0, %v4052
        %4054 = vmatmul.f32.gmra.mxu0 %v3988
        %v4055 = vpop.f32.mrf.mxu0
        %v4056 = vadd.f32 0.0, %v4055
        %4057 = vdwg.mxu0
        %s4058 = scalar_lea.vmem %s15, 8
        %v4059 = vld [vmem:[%s4058] sm:$0xf]
        %v4060 = vld [vmem:[%s4058 + $0x4] sm:$0xf]
        %v4061 = vpack.c.bf16 %v4050, %v4047
        %v4062 = vpack.c.bf16 %v4056, %v4053
        %v4065 = vunpack.c.l.b16 %v4059
        %v4066 = vunpack.c.l.b16 %v4060
        %v4067 = vpack.c.b16 %v4066, %v4065
        %v4069 = vsel %vm826, %v4067, 0
        %4071 = vmatpush.bf16.msra.mxu0 0
        %4072 = vmatpush.bf16.msra.mxu0 0
        %4073 = vmatpush.bf16.msra.mxu0 0
        %4074 = vmatpush.bf16.msra.mxu0 0
        %4075 = vmatpush.bf16.msra.mxu0 0
        %4076 = vmatpush.bf16.msra.mxu0 0
        %4077 = vmatpush.bf16.msra.mxu0 %v4062
        %4078 = vmatpush.bf16.msra.mxu0 %v4061
        %4079 = vmatmul.bf16.gmra.mxu0 %v4069
        %v4080 = vpop.f32.mrf.mxu0
        %v4081 = vadd.f32 0.0, %v4080
        %v4082 = vpop.f32.mrf.mxu0
        %v4083 = vadd.f32 0.0, %v4082
        %4084 = vdwg.mxu0
        %v4087 = vunpack.c.l.b16 %v4022
        %v4088 = vunpack.c.l.b16 %v4023
        %v4089 = vpack.c.b16 %v4088, %v4087
        %v4091 = vsel %vm826, %v4089, 0
        %4093 = vmatpush.bf16.msra.mxu0 0
        %4094 = vmatpush.bf16.msra.mxu0 0
        %4095 = vmatpush.bf16.msra.mxu0 0
        %4096 = vmatpush.bf16.msra.mxu0 0
        %4097 = vmatpush.bf16.msra.mxu0 0
        %4098 = vmatpush.bf16.msra.mxu0 0
        %4099 = vmatpush.bf16.msra.mxu0 %v4025
        %4100 = vmatpush.bf16.msra.mxu0 %v4024
        %4101 = vmatmul.bf16.gmra.mxu0 %v4091
        %v4102 = vpop.f32.mrf.mxu0
        %v4103 = vadd.f32 %v4081, %v4102
        %v4104 = vpop.f32.mrf.mxu0
        %v4105 = vadd.f32 %v4083, %v4104
        %4106 = vdwg.mxu0
        %s4107 = scalar_lea.vmem %s15, 16
        %v4108 = vld [vmem:[%s4107] sm:$0xf]
        %v4109 = vld [vmem:[%s4107 + $0x4] sm:$0xf]
        %v4110 = vpack.c.bf16 %v3974, %v3973
        %v4111 = vpack.c.bf16 %v3976, %v3975
        %v4114 = vunpack.c.l.b16 %v4108
        %v4115 = vunpack.c.l.b16 %v4109
        %v4116 = vpack.c.b16 %v4115, %v4114
        %v4118 = vsel %vm826, %v4116, 0
        %4120 = vmatpush.bf16.msra.mxu0 0
        %4121 = vmatpush.bf16.msra.mxu0 0
        %4122 = vmatpush.bf16.msra.mxu0 0
        %4123 = vmatpush.bf16.msra.mxu0 0
        %4124 = vmatpush.bf16.msra.mxu0 0
        %4125 = vmatpush.bf16.msra.mxu0 0
        %4126 = vmatpush.bf16.msra.mxu0 %v4111
        %4127 = vmatpush.bf16.msra.mxu0 %v4110
        %4128 = vmatmul.bf16.gmra.mxu0 %v4118
        %v4129 = vpop.f32.mrf.mxu0
        %v4130 = vadd.f32 0.0, %v4129
        %v4131 = vpop.f32.mrf.mxu0
        %v4132 = vadd.f32 0.0, %v4131
        %4133 = vdwg.mxu0
        %v4134 = vadd.f32 %v4103, %v4130
        %v4135 = vadd.f32 %v4105, %v4132
        %v4136 = vld [vmem:[%s16] sm:$0xff]
        %v4137 = vld [vmem:[%s16 + $0x8] sm:$0xff]
        %4139 = vset.pattern.permute.xlu0 0
        %4140 = vperm.xlu0 %4139, %v4136
        %v4141 = vpop.permute.xlu0 %4140
        %4144 = vset.pattern.permute.xlu0 0
        %4145 = vperm.xlu0 %4144, %v4137
        %v4146 = vpop.permute.xlu0 %4145
        %v4148 = vadd.f32 %v4134, %v4141
        %v4149 = vadd.f32 %v4135, %v4146
        %v4150 = vcvt.s32.f32 %v639
        %v4151 = vcvt.s32.f32 %v640
        %v4152 = vcvt.s32.f32 %v641
        %v4153 = vcvt.s32.f32 %v642
        %v4154 = vld [vmem:[%s17] sm:$0xff]
        %v4155 = vld [vmem:[%s17 + $0x8] sm:$0xff]
        %v4156 = vld [vmem:[%s17 + $0x10] sm:$0xff]
        %v4157 = vld [vmem:[%s17 + $0x18] sm:$0xff]
        %v4158 = vld [vmem:[%s18] sm:$0xff]
        %v4159 = vld [vmem:[%s18 + $0x8] sm:$0xff]
        %v4160 = vmul.f32 %v4154, %v4154
        %v4161 = vmul.f32 %v4155, %v4155
        %v4162 = vmul.f32 %v4156, %v4156
        %v4163 = vmul.f32 %v4157, %v4157
        %v4164 = vsel %vm3013, %v4160, 0.0
        %4165 = vadd.xlane.f32.xlu0 %v4164
        %v4166 = vpop.xlane.xlu0 %4165
        %v4167 = vsel %vm3013, %v4161, 0.0
        %4168 = vadd.xlane.f32.xlu0 %v4167
        %v4169 = vpop.xlane.xlu0 %4168
        %v4170 = vsel %vm3013, %v4162, 0.0
        %4171 = vadd.xlane.f32.xlu0 %v4170
        %v4172 = vpop.xlane.xlu0 %4171
        %v4173 = vsel %vm3013, %v4163, 0.0
        %4174 = vadd.xlane.f32.xlu0 %v4173
        %v4175 = vpop.xlane.xlu0 %4174
        %v4177 = vsel %vm3013, %v4154, 0
        %v4180 = vsel %vm3013, %v4155, 0
        %v4183 = vsel %vm3013, %v4156, 0
        %v4186 = vsel %vm3013, %v4157, 0
        %4188 = vmatpush.msra.mxu0 0.0
        %4189 = vmatpush.msra.mxu0 0.0
        %4190 = vmatpush.msra.mxu0 0.0
        %4191 = vmatpush.msra.mxu0 0.0
        %4192 = vmatpush.msra.mxu0 0.0
        %4193 = vmatpush.msra.mxu0 0.0
        %4194 = vmatpush.msra.mxu0 0.0
        %4195 = vmatpush.msra.mxu0 0.0
        %4196 = vmatpush.msra.mxu0 0.0
        %4197 = vmatpush.msra.mxu0 0.0
        %4198 = vmatpush.msra.mxu0 0.0
        %4199 = vmatpush.msra.mxu0 0.0
        %4200 = vmatpush.msra.mxu0 0.0
        %4201 = vmatpush.msra.mxu0 0.0
        %4202 = vmatpush.msra.mxu0 %v4149
        %4203 = vmatpush.msra.mxu0 %v4148
        %4204 = vmatmul.f32.gmra.mxu0 %v4177
        %v4205 = vpop.f32.mrf.mxu0
        %v4206 = vadd.f32 0.0, %v4205
        %4207 = vmatmul.f32.gmra.mxu0 %v4180
        %v4208 = vpop.f32.mrf.mxu0
        %v4209 = vadd.f32 0.0, %v4208
        %4210 = vmatmul.f32.gmra.mxu0 %v4183
        %v4211 = vpop.f32.mrf.mxu0
        %v4212 = vadd.f32 0.0, %v4211
        %4213 = vmatmul.f32.gmra.mxu0 %v4186
        %v4214 = vpop.f32.mrf.mxu0
        %v4215 = vadd.f32 0.0, %v4214
        %4216 = vdwg.mxu0
        %v4217 = vmul.f32 %v4206, 2.0
        %v4218 = vmul.f32 %v4209, 2.0
        %v4219 = vmul.f32 %v4212, 2.0
        %v4220 = vmul.f32 %v4215, 2.0
        %v4221 = vsub.f32 %v4166, %v4217
        %v4222 = vsub.f32 %v4169, %v4218
        %v4223 = vsub.f32 %v4172, %v4219
        %v4224 = vsub.f32 %v4175, %v4220
        %v4225 = vsel %vm3977, %v4221, inf
        %v4226 = vsel %vm3977, %v4222, inf
        %v4227 = vsel %vm3977, %v4223, inf
        %v4228 = vsel %vm3977, %v4224, inf
        %v4229 = vmin.f32 %v4225, %v4226
        %v4230 = vmin.f32 %v4227, %v4228
        %v4231 = vmin.f32 %v4229, %v4230
        %v4232 = vrot.slane %v4231, 4
        %v4233 = vmin.f32 %v4231, %v4232
        %v4234 = vrot.slane %v4233, 2
        %v4235 = vmin.f32 %v4233, %v4234
        %v4236 = vrot.slane %v4235, 1
        %v4237 = vmin.f32 %v4235, %v4236
        %vm4238 = vcmp.le.f32.partialorder %v4221, %v4237
        %vm4239 = vcmp.le.f32.partialorder %v4222, %v4237
        %vm4240 = vcmp.le.f32.partialorder %v4223, %v4237
        %vm4241 = vcmp.le.f32.partialorder %v4224, %v4237
        %v4242 = vsel %vm4238, %v4150, 32.0
        %v4243 = vsel %vm4239, %v4151, 32.0
        %v4244 = vsel %vm4240, %v4152, 32.0
        %v4245 = vsel %vm4241, %v4153, 32.0
        %v4246 = vsel %vm3977, %v4242, inf
        %v4247 = vsel %vm3977, %v4243, inf
        %v4248 = vsel %vm3977, %v4244, inf
        %v4249 = vsel %vm3977, %v4245, inf
        %v4250 = vmin.f32 %v4246, %v4247
        %v4251 = vmin.f32 %v4248, %v4249
        %v4252 = vmin.f32 %v4250, %v4251
        %v4253 = vrot.slane %v4252, 4
        %v4254 = vmin.f32 %v4252, %v4253
        %v4255 = vrot.slane %v4254, 2
        %v4256 = vmin.f32 %v4254, %v4255
        %v4257 = vrot.slane %v4256, 1
        %v4258 = vmin.f32 %v4256, %v4257
        %vm4259 = vcmp.eq.f32.partialorder %v4150, %v4258
        %vm4260 = vcmp.eq.f32.partialorder %v4151, %v4258
        %vm4261 = vcmp.eq.f32.partialorder %v4152, %v4258
        %vm4262 = vcmp.eq.f32.partialorder %v4153, %v4258
        %v4263 = vsel %vm4259, 1, 0
        %v4264 = vsel %vm4260, 1, 0
        %v4265 = vsel %vm4261, 1, 0
        %v4266 = vsel %vm4262, 1, 0
        %v4267 = vcvt.s32.f32 %v4263
        %v4268 = vcvt.s32.f32 %v4264
        %v4269 = vcvt.s32.f32 %v4265
        %v4270 = vcvt.s32.f32 %v4266
        %v4272 = vsel %vm826, %v4158, 0
        %v4275 = vsel %vm826, %v4159, 0
        %4277 = vmatpush.msra.mxu0 0.0
        %4278 = vmatpush.msra.mxu0 0.0
        %4279 = vmatpush.msra.mxu0 0.0
        %4280 = vmatpush.msra.mxu0 0.0
        %4281 = vmatpush.msra.mxu0 0.0
        %4282 = vmatpush.msra.mxu0 0.0
        %4283 = vmatpush.msra.mxu0 0.0
        %4284 = vmatpush.msra.mxu0 0.0
        %4285 = vmatpush.msra.mxu0 0.0
        %4286 = vmatpush.msra.mxu0 0.0
        %4287 = vmatpush.msra.mxu0 0.0
        %4288 = vmatpush.msra.mxu0 0.0
        %4289 = vmatpush.msra.mxu0 %v4270
        %4290 = vmatpush.msra.mxu0 %v4269
        %4291 = vmatpush.msra.mxu0 %v4268
        %4292 = vmatpush.msra.mxu0 %v4267
        %4293 = vmatmul.f32.gmra.mxu0 %v4272
        %v4294 = vpop.f32.mrf.mxu0
        %v4295 = vadd.f32 0.0, %v4294
        %4296 = vmatmul.f32.gmra.mxu0 %v4275
        %v4297 = vpop.f32.mrf.mxu0
        %v4298 = vadd.f32 0.0, %v4297
        %4299 = vdwg.mxu0
        %v4300 = vsub.f32 %v4148, %v4295
        %v4301 = vsub.f32 %v4149, %v4298
        %s4302 = scalar_lea.vmem %s17, 32
        %v4303 = vld [vmem:[%s4302] sm:$0xff]
        %v4304 = vld [vmem:[%s4302 + $0x8] sm:$0xff]
        %v4305 = vld [vmem:[%s4302 + $0x10] sm:$0xff]
        %v4306 = vld [vmem:[%s4302 + $0x18] sm:$0xff]
        %s4307 = scalar_lea.vmem %s18, 16
        %v4308 = vld [vmem:[%s4307] sm:$0xff]
        %v4309 = vld [vmem:[%s4307 + $0x8] sm:$0xff]
        %v4310 = vmul.f32 %v4303, %v4303
        %v4311 = vmul.f32 %v4304, %v4304
        %v4312 = vmul.f32 %v4305, %v4305
        %v4313 = vmul.f32 %v4306, %v4306
        %v4314 = vsel %vm3013, %v4310, 0.0
        %4315 = vadd.xlane.f32.xlu0 %v4314
        %v4316 = vpop.xlane.xlu0 %4315
        %v4317 = vsel %vm3013, %v4311, 0.0
        %4318 = vadd.xlane.f32.xlu0 %v4317
        %v4319 = vpop.xlane.xlu0 %4318
        %v4320 = vsel %vm3013, %v4312, 0.0
        %4321 = vadd.xlane.f32.xlu0 %v4320
        %v4322 = vpop.xlane.xlu0 %4321
        %v4323 = vsel %vm3013, %v4313, 0.0
        %4324 = vadd.xlane.f32.xlu0 %v4323
        %v4325 = vpop.xlane.xlu0 %4324
        %v4327 = vsel %vm3013, %v4303, 0
        %v4330 = vsel %vm3013, %v4304, 0
        %v4333 = vsel %vm3013, %v4305, 0
        %v4336 = vsel %vm3013, %v4306, 0
        %4338 = vmatpush.msra.mxu0 0.0
        %4339 = vmatpush.msra.mxu0 0.0
        %4340 = vmatpush.msra.mxu0 0.0
        %4341 = vmatpush.msra.mxu0 0.0
        %4342 = vmatpush.msra.mxu0 0.0
        %4343 = vmatpush.msra.mxu0 0.0
        %4344 = vmatpush.msra.mxu0 0.0
        %4345 = vmatpush.msra.mxu0 0.0
        %4346 = vmatpush.msra.mxu0 0.0
        %4347 = vmatpush.msra.mxu0 0.0
        %4348 = vmatpush.msra.mxu0 0.0
        %4349 = vmatpush.msra.mxu0 0.0
        %4350 = vmatpush.msra.mxu0 0.0
        %4351 = vmatpush.msra.mxu0 0.0
        %4352 = vmatpush.msra.mxu0 %v4301
        %4353 = vmatpush.msra.mxu0 %v4300
        %4354 = vmatmul.f32.gmra.mxu0 %v4327
        %v4355 = vpop.f32.mrf.mxu0
        %v4356 = vadd.f32 0.0, %v4355
        %4357 = vmatmul.f32.gmra.mxu0 %v4330
        %v4358 = vpop.f32.mrf.mxu0
        %v4359 = vadd.f32 0.0, %v4358
        %4360 = vmatmul.f32.gmra.mxu0 %v4333
        %v4361 = vpop.f32.mrf.mxu0
        %v4362 = vadd.f32 0.0, %v4361
        %4363 = vmatmul.f32.gmra.mxu0 %v4336
        %v4364 = vpop.f32.mrf.mxu0
        %v4365 = vadd.f32 0.0, %v4364
        %4366 = vdwg.mxu0
        %v4367 = vmul.f32 %v4356, 2.0
        %v4368 = vmul.f32 %v4359, 2.0
        %v4369 = vmul.f32 %v4362, 2.0
        %v4370 = vmul.f32 %v4365, 2.0
        %v4371 = vsub.f32 %v4316, %v4367
        %v4372 = vsub.f32 %v4319, %v4368
        %v4373 = vsub.f32 %v4322, %v4369
        %v4374 = vsub.f32 %v4325, %v4370
        %v4375 = vsel %vm3977, %v4371, inf
        %v4376 = vsel %vm3977, %v4372, inf
        %v4377 = vsel %vm3977, %v4373, inf
        %v4378 = vsel %vm3977, %v4374, inf
        %v4379 = vmin.f32 %v4375, %v4376
        %v4380 = vmin.f32 %v4377, %v4378
        %v4381 = vmin.f32 %v4379, %v4380
        %v4382 = vrot.slane %v4381, 4
        %v4383 = vmin.f32 %v4381, %v4382
        %v4384 = vrot.slane %v4383, 2
        %v4385 = vmin.f32 %v4383, %v4384
        %v4386 = vrot.slane %v4385, 1
        %v4387 = vmin.f32 %v4385, %v4386
        %vm4388 = vcmp.le.f32.partialorder %v4371, %v4387
        %vm4389 = vcmp.le.f32.partialorder %v4372, %v4387
        %vm4390 = vcmp.le.f32.partialorder %v4373, %v4387
        %vm4391 = vcmp.le.f32.partialorder %v4374, %v4387
        %v4392 = vsel %vm4388, %v4150, 32.0
        %v4393 = vsel %vm4389, %v4151, 32.0
        %v4394 = vsel %vm4390, %v4152, 32.0
        %v4395 = vsel %vm4391, %v4153, 32.0
        %v4396 = vsel %vm3977, %v4392, inf
        %v4397 = vsel %vm3977, %v4393, inf
        %v4398 = vsel %vm3977, %v4394, inf
        %v4399 = vsel %vm3977, %v4395, inf
        %v4400 = vmin.f32 %v4396, %v4397
        %v4401 = vmin.f32 %v4398, %v4399
        %v4402 = vmin.f32 %v4400, %v4401
        %v4403 = vrot.slane %v4402, 4
        %v4404 = vmin.f32 %v4402, %v4403
        %v4405 = vrot.slane %v4404, 2
        %v4406 = vmin.f32 %v4404, %v4405
        %v4407 = vrot.slane %v4406, 1
        %v4408 = vmin.f32 %v4406, %v4407
        %vm4409 = vcmp.eq.f32.partialorder %v4150, %v4408
        %vm4410 = vcmp.eq.f32.partialorder %v4151, %v4408
        %vm4411 = vcmp.eq.f32.partialorder %v4152, %v4408
        %vm4412 = vcmp.eq.f32.partialorder %v4153, %v4408
        %v4413 = vsel %vm4409, 1, 0
        %v4414 = vsel %vm4410, 1, 0
        %v4415 = vsel %vm4411, 1, 0
        %v4416 = vsel %vm4412, 1, 0
        %v4417 = vcvt.s32.f32 %v4413
        %v4418 = vcvt.s32.f32 %v4414
        %v4419 = vcvt.s32.f32 %v4415
        %v4420 = vcvt.s32.f32 %v4416
        %v4422 = vsel %vm826, %v4308, 0
        %v4425 = vsel %vm826, %v4309, 0
        %4427 = vmatpush.msra.mxu0 0.0
        %4428 = vmatpush.msra.mxu0 0.0
        %4429 = vmatpush.msra.mxu0 0.0
        %4430 = vmatpush.msra.mxu0 0.0
        %4431 = vmatpush.msra.mxu0 0.0
        %4432 = vmatpush.msra.mxu0 0.0
        %4433 = vmatpush.msra.mxu0 0.0
        %4434 = vmatpush.msra.mxu0 0.0
        %4435 = vmatpush.msra.mxu0 0.0
        %4436 = vmatpush.msra.mxu0 0.0
        %4437 = vmatpush.msra.mxu0 0.0
        %4438 = vmatpush.msra.mxu0 0.0
        %4439 = vmatpush.msra.mxu0 %v4420
        %4440 = vmatpush.msra.mxu0 %v4419
        %4441 = vmatpush.msra.mxu0 %v4418
        %4442 = vmatpush.msra.mxu0 %v4417
        %4443 = vmatmul.f32.gmra.mxu0 %v4422
        %v4444 = vpop.f32.mrf.mxu0
        %v4445 = vadd.f32 0.0, %v4444
        %4446 = vmatmul.f32.gmra.mxu0 %v4425
        %v4447 = vpop.f32.mrf.mxu0
        %v4448 = vadd.f32 0.0, %v4447
        %4449 = vdwg.mxu0
        %v4450 = vsub.f32 %v4300, %v4445
        %v4451 = vsub.f32 %v4301, %v4448
        %s4452 = scalar_lea.vmem %s17, 64
        %v4453 = vld [vmem:[%s4452] sm:$0xff]
        %v4454 = vld [vmem:[%s4452 + $0x8] sm:$0xff]
        %v4455 = vld [vmem:[%s4452 + $0x10] sm:$0xff]
        %v4456 = vld [vmem:[%s4452 + $0x18] sm:$0xff]
        %s4457 = scalar_lea.vmem %s18, 32
        %v4458 = vld [vmem:[%s4457] sm:$0xff]
        %v4459 = vld [vmem:[%s4457 + $0x8] sm:$0xff]
        %v4460 = vmul.f32 %v4453, %v4453
        %v4461 = vmul.f32 %v4454, %v4454
        %v4462 = vmul.f32 %v4455, %v4455
        %v4463 = vmul.f32 %v4456, %v4456
        %v4464 = vsel %vm3013, %v4460, 0.0
        %4465 = vadd.xlane.f32.xlu0 %v4464
        %v4466 = vpop.xlane.xlu0 %4465
        %v4467 = vsel %vm3013, %v4461, 0.0
        %4468 = vadd.xlane.f32.xlu0 %v4467
        %v4469 = vpop.xlane.xlu0 %4468
        %v4470 = vsel %vm3013, %v4462, 0.0
        %4471 = vadd.xlane.f32.xlu0 %v4470
        %v4472 = vpop.xlane.xlu0 %4471
        %v4473 = vsel %vm3013, %v4463, 0.0
        %4474 = vadd.xlane.f32.xlu0 %v4473
        %v4475 = vpop.xlane.xlu0 %4474
        %v4477 = vsel %vm3013, %v4453, 0
        %v4480 = vsel %vm3013, %v4454, 0
        %v4483 = vsel %vm3013, %v4455, 0
        %v4486 = vsel %vm3013, %v4456, 0
        %4488 = vmatpush.msra.mxu0 0.0
        %4489 = vmatpush.msra.mxu0 0.0
        %4490 = vmatpush.msra.mxu0 0.0
        %4491 = vmatpush.msra.mxu0 0.0
        %4492 = vmatpush.msra.mxu0 0.0
        %4493 = vmatpush.msra.mxu0 0.0
        %4494 = vmatpush.msra.mxu0 0.0
        %4495 = vmatpush.msra.mxu0 0.0
        %4496 = vmatpush.msra.mxu0 0.0
        %4497 = vmatpush.msra.mxu0 0.0
        %4498 = vmatpush.msra.mxu0 0.0
        %4499 = vmatpush.msra.mxu0 0.0
        %4500 = vmatpush.msra.mxu0 0.0
        %4501 = vmatpush.msra.mxu0 0.0
        %4502 = vmatpush.msra.mxu0 %v4451
        %4503 = vmatpush.msra.mxu0 %v4450
        %4504 = vmatmul.f32.gmra.mxu0 %v4477
        %v4505 = vpop.f32.mrf.mxu0
        %v4506 = vadd.f32 0.0, %v4505
        %4507 = vmatmul.f32.gmra.mxu0 %v4480
        %v4508 = vpop.f32.mrf.mxu0
        %v4509 = vadd.f32 0.0, %v4508
        %4510 = vmatmul.f32.gmra.mxu0 %v4483
        %v4511 = vpop.f32.mrf.mxu0
        %v4512 = vadd.f32 0.0, %v4511
        %4513 = vmatmul.f32.gmra.mxu0 %v4486
        %v4514 = vpop.f32.mrf.mxu0
        %v4515 = vadd.f32 0.0, %v4514
        %4516 = vdwg.mxu0
        %v4517 = vmul.f32 %v4506, 2.0
        %v4518 = vmul.f32 %v4509, 2.0
        %v4519 = vmul.f32 %v4512, 2.0
        %v4520 = vmul.f32 %v4515, 2.0
        %v4521 = vsub.f32 %v4466, %v4517
        %v4522 = vsub.f32 %v4469, %v4518
        %v4523 = vsub.f32 %v4472, %v4519
        %v4524 = vsub.f32 %v4475, %v4520
        %v4525 = vsel %vm3977, %v4521, inf
        %v4526 = vsel %vm3977, %v4522, inf
        %v4527 = vsel %vm3977, %v4523, inf
        %v4528 = vsel %vm3977, %v4524, inf
        %v4529 = vmin.f32 %v4525, %v4526
        %v4530 = vmin.f32 %v4527, %v4528
        %v4531 = vmin.f32 %v4529, %v4530
        %v4532 = vrot.slane %v4531, 4
        %v4533 = vmin.f32 %v4531, %v4532
        %v4534 = vrot.slane %v4533, 2
        %v4535 = vmin.f32 %v4533, %v4534
        %v4536 = vrot.slane %v4535, 1
        %v4537 = vmin.f32 %v4535, %v4536
        %vm4538 = vcmp.le.f32.partialorder %v4521, %v4537
        %vm4539 = vcmp.le.f32.partialorder %v4522, %v4537
        %vm4540 = vcmp.le.f32.partialorder %v4523, %v4537
        %vm4541 = vcmp.le.f32.partialorder %v4524, %v4537
        %v4542 = vsel %vm4538, %v4150, 32.0
        %v4543 = vsel %vm4539, %v4151, 32.0
        %v4544 = vsel %vm4540, %v4152, 32.0
        %v4545 = vsel %vm4541, %v4153, 32.0
        %v4546 = vsel %vm3977, %v4542, inf
        %v4547 = vsel %vm3977, %v4543, inf
        %v4548 = vsel %vm3977, %v4544, inf
        %v4549 = vsel %vm3977, %v4545, inf
        %v4550 = vmin.f32 %v4546, %v4547
        %v4551 = vmin.f32 %v4548, %v4549
        %v4552 = vmin.f32 %v4550, %v4551
        %v4553 = vrot.slane %v4552, 4
        %v4554 = vmin.f32 %v4552, %v4553
        %v4555 = vrot.slane %v4554, 2
        %v4556 = vmin.f32 %v4554, %v4555
        %v4557 = vrot.slane %v4556, 1
        %v4558 = vmin.f32 %v4556, %v4557
        %vm4559 = vcmp.eq.f32.partialorder %v4150, %v4558
        %vm4560 = vcmp.eq.f32.partialorder %v4151, %v4558
        %vm4561 = vcmp.eq.f32.partialorder %v4152, %v4558
        %vm4562 = vcmp.eq.f32.partialorder %v4153, %v4558
        %v4563 = vsel %vm4559, 1, 0
        %v4564 = vsel %vm4560, 1, 0
        %v4565 = vsel %vm4561, 1, 0
        %v4566 = vsel %vm4562, 1, 0
        %v4567 = vcvt.s32.f32 %v4563
        %v4568 = vcvt.s32.f32 %v4564
        %v4569 = vcvt.s32.f32 %v4565
        %v4570 = vcvt.s32.f32 %v4566
        %v4572 = vsel %vm826, %v4458, 0
        %v4575 = vsel %vm826, %v4459, 0
        %4577 = vmatpush.msra.mxu0 0.0
        %4578 = vmatpush.msra.mxu0 0.0
        %4579 = vmatpush.msra.mxu0 0.0
        %4580 = vmatpush.msra.mxu0 0.0
        %4581 = vmatpush.msra.mxu0 0.0
        %4582 = vmatpush.msra.mxu0 0.0
        %4583 = vmatpush.msra.mxu0 0.0
        %4584 = vmatpush.msra.mxu0 0.0
        %4585 = vmatpush.msra.mxu0 0.0
        %4586 = vmatpush.msra.mxu0 0.0
        %4587 = vmatpush.msra.mxu0 0.0
        %4588 = vmatpush.msra.mxu0 0.0
        %4589 = vmatpush.msra.mxu0 %v4570
        %4590 = vmatpush.msra.mxu0 %v4569
        %4591 = vmatpush.msra.mxu0 %v4568
        %4592 = vmatpush.msra.mxu0 %v4567
        %4593 = vmatmul.f32.gmra.mxu0 %v4572
        %v4594 = vpop.f32.mrf.mxu0
        %v4595 = vadd.f32 0.0, %v4594
        %4596 = vmatmul.f32.gmra.mxu0 %v4575
        %v4597 = vpop.f32.mrf.mxu0
        %v4598 = vadd.f32 0.0, %v4597
        %4599 = vdwg.mxu0
        %v4600 = vsub.f32 %v4450, %v4595
        %v4601 = vsub.f32 %v4451, %v4598
        %s4602 = scalar_lea.vmem %s17, 96
        %v4603 = vld [vmem:[%s4602] sm:$0xff]
        %v4604 = vld [vmem:[%s4602 + $0x8] sm:$0xff]
        %v4605 = vld [vmem:[%s4602 + $0x10] sm:$0xff]
        %v4606 = vld [vmem:[%s4602 + $0x18] sm:$0xff]
        %v4607 = vmul.f32 %v4603, %v4603
        %v4608 = vmul.f32 %v4604, %v4604
        %v4609 = vmul.f32 %v4605, %v4605
        %v4610 = vmul.f32 %v4606, %v4606
        %v4611 = vsel %vm3013, %v4607, 0.0
        %4612 = vadd.xlane.f32.xlu0 %v4611
        %v4613 = vpop.xlane.xlu0 %4612
        %v4614 = vsel %vm3013, %v4608, 0.0
        %4615 = vadd.xlane.f32.xlu0 %v4614
        %v4616 = vpop.xlane.xlu0 %4615
        %v4617 = vsel %vm3013, %v4609, 0.0
        %4618 = vadd.xlane.f32.xlu0 %v4617
        %v4619 = vpop.xlane.xlu0 %4618
        %v4620 = vsel %vm3013, %v4610, 0.0
        %4621 = vadd.xlane.f32.xlu0 %v4620
        %v4622 = vpop.xlane.xlu0 %4621
        %v4624 = vsel %vm3013, %v4603, 0
        %v4627 = vsel %vm3013, %v4604, 0
        %v4630 = vsel %vm3013, %v4605, 0
        %v4633 = vsel %vm3013, %v4606, 0
        %4635 = vmatpush.msra.mxu0 0.0
        %4636 = vmatpush.msra.mxu0 0.0
        %4637 = vmatpush.msra.mxu0 0.0
        %4638 = vmatpush.msra.mxu0 0.0
        %4639 = vmatpush.msra.mxu0 0.0
        %4640 = vmatpush.msra.mxu0 0.0
        %4641 = vmatpush.msra.mxu0 0.0
        %4642 = vmatpush.msra.mxu0 0.0
        %4643 = vmatpush.msra.mxu0 0.0
        %4644 = vmatpush.msra.mxu0 0.0
        %4645 = vmatpush.msra.mxu0 0.0
        %4646 = vmatpush.msra.mxu0 0.0
        %4647 = vmatpush.msra.mxu0 0.0
        %4648 = vmatpush.msra.mxu0 0.0
        %4649 = vmatpush.msra.mxu0 %v4601
        %4650 = vmatpush.msra.mxu0 %v4600
        %4651 = vmatmul.f32.gmra.mxu0 %v4624
        %v4652 = vpop.f32.mrf.mxu0
        %v4653 = vadd.f32 0.0, %v4652
        %4654 = vmatmul.f32.gmra.mxu0 %v4627
        %v4655 = vpop.f32.mrf.mxu0
        %v4656 = vadd.f32 0.0, %v4655
        %4657 = vmatmul.f32.gmra.mxu0 %v4630
        %v4658 = vpop.f32.mrf.mxu0
        %v4659 = vadd.f32 0.0, %v4658
        %4660 = vmatmul.f32.gmra.mxu0 %v4633
        %v4661 = vpop.f32.mrf.mxu0
        %v4662 = vadd.f32 0.0, %v4661
        %4663 = vdwg.mxu0
        %v4664 = vmul.f32 %v4653, 2.0
        %v4665 = vmul.f32 %v4656, 2.0
        %v4666 = vmul.f32 %v4659, 2.0
        %v4667 = vmul.f32 %v4662, 2.0
        %v4668 = vsub.f32 %v4613, %v4664
        %v4669 = vsub.f32 %v4616, %v4665
        %v4670 = vsub.f32 %v4619, %v4666
        %v4671 = vsub.f32 %v4622, %v4667
        %v4672 = vsel %vm3977, %v4668, inf
        %v4673 = vsel %vm3977, %v4669, inf
        %v4674 = vsel %vm3977, %v4670, inf
        %v4675 = vsel %vm3977, %v4671, inf
        %v4676 = vmin.f32 %v4672, %v4673
        %v4677 = vmin.f32 %v4674, %v4675
        %v4678 = vmin.f32 %v4676, %v4677
        %v4679 = vrot.slane %v4678, 4
        %v4680 = vmin.f32 %v4678, %v4679
        %v4681 = vrot.slane %v4680, 2
        %v4682 = vmin.f32 %v4680, %v4681
        %v4683 = vrot.slane %v4682, 1
        %v4684 = vmin.f32 %v4682, %v4683
        %vm4685 = vcmp.le.f32.partialorder %v4668, %v4684
        %vm4686 = vcmp.le.f32.partialorder %v4669, %v4684
        %vm4687 = vcmp.le.f32.partialorder %v4670, %v4684
        %vm4688 = vcmp.le.f32.partialorder %v4671, %v4684
        %v4689 = vsel %vm4685, %v4150, 32.0
        %v4690 = vsel %vm4686, %v4151, 32.0
        %v4691 = vsel %vm4687, %v4152, 32.0
        %v4692 = vsel %vm4688, %v4153, 32.0
        %v4693 = vsel %vm3977, %v4689, inf
        %v4694 = vsel %vm3977, %v4690, inf
        %v4695 = vsel %vm3977, %v4691, inf
        %v4696 = vsel %vm3977, %v4692, inf
        %v4697 = vmin.f32 %v4693, %v4694
        %v4698 = vmin.f32 %v4695, %v4696
        %v4699 = vmin.f32 %v4697, %v4698
        %v4700 = vrot.slane %v4699, 4
        %v4701 = vmin.f32 %v4699, %v4700
        %v4702 = vrot.slane %v4701, 2
        %v4703 = vmin.f32 %v4701, %v4702
        %v4704 = vrot.slane %v4703, 1
        %v4705 = vmin.f32 %v4703, %v4704
        %vm4706 = vcmask 1040384
        %v4707 = vsel %vm4706, %v4258, %v4408
        %v4708 = vsel %vm2339, %v4707, %v4558
        %vm4709 = vcmask 1042432
        %v4710 = vsel %vm4709, %v4708, %v4705
        %v4711 = vcvt.f32.s32.to.zero.pseudo %v4710
        %vm4712 = vcmask 158720
        %4713 = vst.msk [vmem:[%s624] sm:$0xf] %vm4712, %v4711
        %4714 = vst.msk [vmem:[%s631] sm:$0xf] %vm4712, 1
        %s4715 = sand.u32 %s450, 1
        %s4716 = scalar_lea.sflag [#allocation3], %s4715
        %s4717 = sand.u32 %s450, 1
        %s4718 = smul.addr %s4717, 4
        %s4719 = scalar_lea.vmem [#allocation2], %s4718
        %s4720 = sand.u32 %s476, 1
        %s4721 = scalar_lea.sflag [#allocation5], %s4720
        %s4722 = sand.u32 %s476, 1
        %s4723 = smul.addr %s4722, 4
        %s4724 = scalar_lea.vmem [#allocation4], %s4723
        // Predicated region
        $region97: #{encodec_wrapper_forward.1} parent=95 // pred_check
          %p4725 = pneg %p460
        $region98: #{encodec_wrapper_forward.1} parent=95 // pred_check_branch
          %4727 = sbr.rel (%p4725) target = $region100
        $region99: #{encodec_wrapper_forward.1} parent=95 // pred_region
          %4729 = vsyncadd %s4716, 0
          %s4730 = smul.addr %s38, 4
          %s4731 = scalar_lea.hbm %s19, %s4730
          %s4733 = sshll.u32 %s4719, 4
          %s4734 = int_to_ptr.vmem [resolvable:$true] %s4733
          %s4735 = sshll.u32 %s4731, 4
          %s4736 = int_to_ptr.hbm [resolvable:$true] %s4735
          %4738 = dma.vmem_to_hbm [thread:$0]  %s4734, 64, %s4736, %s4716
        $region100: #{encodec_wrapper_forward.1} parent=95 // pred_fallthru
          _
        // Predicated region
        $region101: #{encodec_wrapper_forward.1} parent=95 // pred_check
          %p4739 = pneg %p486
        $region102: #{encodec_wrapper_forward.1} parent=95 // pred_check_branch
          %4741 = sbr.rel (%p4739) target = $region104
        $region103: #{encodec_wrapper_forward.1} parent=95 // pred_region
          %4743 = vsyncadd %s4721, 0
          %s4744 = smul.addr %s38, 4
          %s4745 = scalar_lea.hbm %s20, %s4744
          %s4747 = sshll.u32 %s4724, 4
          %s4748 = int_to_ptr.vmem [resolvable:$true] %s4747
          %s4749 = sshll.u32 %s4745, 4
          %s4750 = int_to_ptr.hbm [resolvable:$true] %s4749
          %4752 = dma.vmem_to_hbm [thread:$0]  %s4748, 64, %s4750, %s4721
        $region104: #{encodec_wrapper_forward.1} parent=95 // pred_fallthru
          _
      $region96: #{encodec_wrapper_forward.1} parent=5 // pred_fallthru
        _
      %p4753 = scmp.le.s32.totalorder 2, %s33
      // Predicated region
      $region105: #{encodec_wrapper_forward.1} parent=5 // pred_check
        %p4754 = pneg %p4753
      $region106: #{encodec_wrapper_forward.1} parent=5 // pred_check_branch
        %4756 = sbr.rel (%p4754) target = $region108
      $region107: #{encodec_wrapper_forward.1} parent=5 // pred_region
        %s4757 = ssub.s32 %s33, 2
        // Predicated region
        $region109: #{encodec_wrapper_forward.1} parent=107 // pred_check
          %p4758 = pneg %p466
        $region110: #{encodec_wrapper_forward.1} parent=107 // pred_check_branch
          %4760 = sbr.rel (%p4758) target = $region112
        $region111: #{encodec_wrapper_forward.1} parent=107 // pred_region
          %s4761 = sand.u32 %s451, 1
          %s4762 = scalar_lea.sflag [#allocation3], %s4761
          %s4763 = sand.u32 %s451, 1
          %s4764 = smul.addr %s4763, 4
          %s4765 = scalar_lea.vmem [#allocation2], %s4764
          %4767 = dma.done %s4762, 64
        $region112: #{encodec_wrapper_forward.1} parent=107 // pred_fallthru
          _
        // Predicated region
        $region113: #{encodec_wrapper_forward.1} parent=107 // pred_check
          %p4768 = pneg %p492
        $region114: #{encodec_wrapper_forward.1} parent=107 // pred_check_branch
          %4770 = sbr.rel (%p4768) target = $region116
        $region115: #{encodec_wrapper_forward.1} parent=107 // pred_region
          %s4771 = sand.u32 %s477, 1
          %s4772 = scalar_lea.sflag [#allocation5], %s4771
          %s4773 = sand.u32 %s477, 1
          %s4774 = smul.addr %s4773, 4
          %s4775 = scalar_lea.vmem [#allocation4], %s4774
          %4777 = dma.done %s4772, 64
        $region116: #{encodec_wrapper_forward.1} parent=107 // pred_fallthru
          _
      $region108: #{encodec_wrapper_forward.1} parent=5 // pred_fallthru
        _
    $region6: #{encodec_wrapper_forward.1} parent=1 // loop_footer
      %s37 = sadd.s32 1, %s33
    $region7: #{encodec_wrapper_forward.1} parent=1 // loop_footer_branch
      %32 = sbr.rel target = $region3
    $region8: #{encodec_wrapper_forward.1} parent=1 // loop_exit
      _
    %4778 = vsyncpa [#allocation3], 1
    %s4779 = scalar_lea.sflag [#allocation3], 1
    %4780 = vsyncpa %s4779, 1
    %4781 = vsyncpa [#allocation5], 1
    %s4782 = scalar_lea.sflag [#allocation5], 1
    %4783 = vsyncpa %s4782, 1

</llo_original>
